<compile_context>
chip_gen: v7x
topology: tpu7x:2x2x1
jax: 0.10.0
libtpu: 0.0.40
codegen_flags: <defaults>
</compile_context>

<pallas_src>
import functools
import math

import numpy as np
import jax
import jax.numpy as jnp
from jax.experimental import pallas as pl
from jax.experimental.pallas import tpu as pltpu


# ----------------------------- in-kernel math helpers -----------------------------

def _erf(x):
    # Abramowitz & Stegun 7.1.26 rational approximation (max abs err ~1.5e-7); built only from
    # ops with guaranteed Mosaic lowerings.  The divide goes to the EUP via approx reciprocal.
    a1, a2, a3, a4, a5 = 0.254829592, -0.284496736, 1.421413741, -1.453152027, 1.061405429
    p = 0.3275911
    sign = jnp.where(x >= 0.0, 1.0, -1.0)
    ax = jnp.abs(x)
    t = pl.reciprocal(1.0 + p * ax, approx=True)
    poly = ((((a5 * t + a4) * t + a3) * t + a2) * t + a1) * t
    return sign * (1.0 - poly * jnp.exp(-ax * ax))


def _gelu_exact(x):
    # PyTorch F.gelu(approximate='none'): 0.5 * x * (1 + erf(x / sqrt(2)))
    return 0.5 * x * (1.0 + _erf(x * (1.0 / math.sqrt(2.0))))


def _layer_norm(x, g, b, eps=1e-5):
    mu = jnp.mean(x, axis=-1, keepdims=True)
    var = jnp.mean(jnp.square(x - mu), axis=-1, keepdims=True)
    return (x - mu) * jax.lax.rsqrt(var + eps) * g + b


# ----------------------------- Pallas kernel -----------------------------

def _encoder_kernel(x_ref, pe_ref, wp_ref, bp_ref,
                    wqkv_ref, wo_ref, w1_ref, w2_ref, vec_ref,
                    gf_ref, bfin_ref,
                    o_ref, h_ref, attn_ref,
                    *, num_layers, nhead, d_model, dff, bb, seq, seq_real):
    rows = bb * seq
    hd = d_model // nhead
    scale = 1.0 / math.sqrt(hd)
    l = pl.program_id(1)          # layer index (innermost, "arbitrary" grid axis)

    # --- l == 0: input projection + positional encoding into the residual-stream scratch ---
    @pl.when(l == 0)
    def _init():
        proj = jnp.dot(x_ref[...], wp_ref[...],
                       preferred_element_type=jnp.float32) + bp_ref[...]
        # bug-faithful PE: row index == batch index, broadcast over the sequence (pre-expanded
        # to one row per (batch, seq) position in the wrapper); dropout = identity (eval mode).
        h_ref[...] = proj + pe_ref[...]

    x = h_ref[...]                                                        # (rows, D) f32

    # per-layer small vectors, packed as rows of one (8, W) block
    vec = vec_ref[0]
    bqkv = vec[0:1, :3 * d_model]
    bo   = vec[1:2, :d_model]
    g1   = vec[2:3, :d_model]
    be1  = vec[3:4, :d_model]
    bff1 = vec[4:5, :dff]
    bff2 = vec[5:6, :d_model]
    g2   = vec[6:7, :d_model]
    be2  = vec[7:8, :d_model]

    # --- self-attention block ---
    xb = x.astype(jnp.bfloat16)
    qkv = jnp.dot(xb, wqkv_ref[0], preferred_element_type=jnp.float32) + bqkv   # (rows, 3D)
    # slice / reshape while f32 (sublane tile-aligned: seq is a multiple of 8), then one cast
    q = qkv[:, 0 * d_model:1 * d_model].reshape(bb, seq, d_model).astype(jnp.bfloat16)
    k = qkv[:, 1 * d_model:2 * d_model].reshape(bb, seq, d_model).astype(jnp.bfloat16)
    v = qkv[:, 2 * d_model:3 * d_model].reshape(bb, seq, d_model).astype(jnp.bfloat16)

    for h in range(nhead):                                                # static, small
        sl = slice(h * hd, (h + 1) * hd)
        qh = q[:, :, sl]
        kh = k[:, :, sl]
        vh = v[:, :, sl]
        s = jnp.einsum('bqd,bkd->bqk', qh, kh,
                       preferred_element_type=jnp.float32) * scale        # (bb, S, S) f32
        if seq != seq_real:
            kidx = jax.lax.broadcasted_iota(jnp.int32, (bb, seq, seq), 2)
            s = jnp.where(kidx < seq_real, s, -1e30)                      # mask padded keys
        s = s - jnp.max(s, axis=-1, keepdims=True)
        p = jnp.exp(s)
        p = p * pl.reciprocal(jnp.sum(p, axis=-1, keepdims=True), approx=True)
        oh = jnp.einsum('bqk,bkd->bqd', p.astype(jnp.bfloat16), vh,
                        preferred_element_type=jnp.float32)               # (bb, S, hd)
        # head-concat into the scratch (lane slice store) -> one full-depth matmul below
        attn_ref[:, sl] = oh.reshape(rows, hd)

    attn = jnp.dot(attn_ref[...].astype(jnp.bfloat16), wo_ref[0],
                   preferred_element_type=jnp.float32) + bo               # (rows, D)

    x = _layer_norm(x + attn, g1, be1)

    # --- feed-forward block ---
    # NOTE: for very large d_model/dff on v7x (64 MiB VMEM) w1/w2 should be chunked over dff
    # with an extra grid axis; unnecessary at these sizes.
    h1 = jnp.dot(x.astype(jnp.bfloat16), w1_ref[0],
                 preferred_element_type=jnp.float32) + bff1                # (rows, DFF)
    h1 = _gelu_exact(h1)
    ff = jnp.dot(h1.astype(jnp.bfloat16), w2_ref[0],
                 preferred_element_type=jnp.float32) + bff2                # (rows, D)

    x = _layer_norm(x + ff, g2, be2)
    h_ref[...] = x                                                        # carry to next layer

    # --- l == last: final LayerNorm of the module, write the output block ---
    @pl.when(l == num_layers - 1)
    def _fin():
        o_ref[...] = _layer_norm(x, gf_ref[...], bfin_ref[...]).astype(o_ref.dtype)


# ----------------------------- wrapper / glue -----------------------------

def _positional_rows(n_rows, d_model):
    """pe rows for positions 0..n_rows-1 (what pe[:batch, 0, :] evaluates to)."""
    pos = np.arange(n_rows, dtype=np.float32)[:, None]
    div_term = np.exp(np.arange(0, d_model, 2, dtype=np.float32) * (-np.log(10000.0) / d_model))
    sin = np.sin(pos * div_term)
    cos = np.cos(pos * div_term)
    pe = np.stack([sin, cos], axis=-1).reshape(n_rows, d_model)   # [:,0::2]=sin, [:,1::2]=cos
    return jnp.asarray(pe, dtype=jnp.float32)


def _tpu_generation_info():
    """(generation, two_tensorcores, vmem_budget_bytes, rows_per_block_target)."""
    kind = ""
    try:
        kind = jax.devices()[0].device_kind.lower()
    except Exception:
        pass
    gen = 6
    for g in (7, 6, 5, 4):
        if "v%d" % g in kind:
            gen = g
            break
    two_cores = (gen >= 7) or ("v4" in kind) or ("v5p" in kind)
    if gen >= 7:
        vmem_budget = 48 * 1024 * 1024        # v7x: 64 MiB physical, leave headroom
        rows_target = 512
    elif gen == 6:
        vmem_budget = 100 * 1024 * 1024       # v6e: 128 MiB physical
        rows_target = 1024                    # weight-streaming roofline (~700 FLOP/byte)
    else:
        vmem_budget = 100 * 1024 * 1024       # v5e: 128 MiB physical
        rows_target = 512
    return gen, two_cores, vmem_budget, rows_target


def _vmem_block_estimate(rows, in_pad, d_model, dff, vec_w):
    """Rough per-row-block VMEM footprint (bytes) incl. double-buffered layer weight stream."""
    layer_w = 2 * (3 * d_model * d_model + d_model * d_model + 2 * d_model * dff)   # bf16
    fixed = 2 * layer_w                                   # double-buffered weight stream
    fixed += in_pad * d_model * 2 + 3 * d_model * 4       # wp + bp/gf/bf (fetched once)
    fixed += 2 * 8 * vec_w * 4                            # packed per-layer vectors (2 bufs)
    per_row = (in_pad * 2 + d_model * 4) * 2              # x(bf16) + pe(f32), double-buffered
    per_row += d_model * 4 * 2                            # output block, double-buffered
    per_row += d_model * 4 + d_model * 4                  # h_ref + attn_ref scratch
    per_row += 3 * d_model * 4 + dff * 4 + 4 * d_model * 4  # live intermediates (qkv, h1, temps)
    return fixed + rows * per_row


def init_params(key, input_dim, d_model, nhead, num_layers, dff):
    ks = jax.random.split(key, 10)
    w = lambda k, shape, s=0.05: jax.random.normal(k, shape, dtype=jnp.float32) * s
    return dict(
        wp=w(ks[0], (input_dim, d_model)),
        bp=w(ks[1], (1, d_model), 0.01),
        wqkv=w(ks[2], (num_layers, d_model, 3 * d_model)),
        bqkv=w(ks[3], (num_layers, 1, 3 * d_model), 0.01),
        wo=w(ks[4], (num_layers, d_model, d_model)),
        bo=w(ks[5], (num_layers, 1, d_model), 0.01),
        g1=jnp.ones((num_layers, 1, d_model), jnp.float32),
        be1=jnp.zeros((num_layers, 1, d_model), jnp.float32),
        w1=w(ks[6], (num_layers, d_model, dff)),
        bff1=w(ks[7], (num_layers, 1, dff), 0.01),
        w2=w(ks[8], (num_layers, dff, d_model)),
        bff2=w(ks[9], (num_layers, 1, d_model), 0.01),
        g2=jnp.ones((num_layers, 1, d_model), jnp.float32),
        be2=jnp.zeros((num_layers, 1, d_model), jnp.float32),
        gf=jnp.ones((1, d_model), jnp.float32),
        bf=jnp.zeros((1, d_model), jnp.float32),
    )


def transformer_encoder(x, params, *, d_model, nhead, num_layers, rows_per_block=None):
    assert d_model % nhead == 0
    B, S, IN = x.shape
    dff = params["w1"].shape[-1]
    L = num_layers

    gen, two_cores, vmem_budget, rows_target = _tpu_generation_info()
    if rows_per_block is None:
        rows_per_block = rows_target

    # --- pad seq to a sublane multiple so (rows,*)->(bb,S,*) reshapes stay tile-aligned ---
    S_pad = -(-S // 8) * 8
    # --- lane-align the input feature dim ---
    IN_pad = max(128, -(-IN // 128) * 128)

    # --- row blocking: pack bb batch elements (bb*S_pad rows) per grid step; on 2-TC parts
    #     cap bb at ceil(B/2) so the "parallel" row axis can shard across both cores ---
    batch_cap = -(-B // 2) if two_cores else B
    bb = max(1, min(batch_cap, max(1, rows_per_block // S_pad)))
    vec_w = -(-max(3 * d_model, dff, d_model) // 128) * 128
    while bb > 1 and _vmem_block_estimate(bb * S_pad, IN_pad, d_model, dff, vec_w) > int(0.8 * vmem_budget):
        bb = max(1, bb // 2)
    rows = bb * S_pad
    R = -(-B // bb)                           # ceil
    B_pad = R * bb

    # --- inputs: x rows in bf16 (halves the largest per-block DMA), pe rows f32 ---
    x_p = jnp.pad(x.astype(jnp.float32),
                  ((0, B_pad - B), (0, S_pad - S), (0, IN_pad - IN)))
    x_rows = x_p.reshape(B_pad * S_pad, IN_pad).astype(jnp.bfloat16)

    # positional-encoding rows (bug-faithful: row index == batch index), expanded per (b, s)
    pe_rows = jnp.repeat(_positional_rows(B_pad, d_model), S_pad, axis=0)   # (B_pad*S_pad, D)

    # matmul weights in bf16 (f32 accumulation inside the kernel); biases / LN params stay f32
    wp = jnp.pad(params["wp"], ((0, IN_pad - IN), (0, 0))).astype(jnp.bfloat16)

    # pack the eight small per-layer vectors into one (L, 8, W) block (fewer per-step DMAs)
    vecs = jnp.zeros((L, 8, vec_w), jnp.float32)
    vecs = vecs.at[:, 0, :3 * d_model].set(params["bqkv"][:, 0, :])
    vecs = vecs.at[:, 1, :d_model].set(params["bo"][:, 0, :])
    vecs = vecs.at[:, 2, :d_model].set(params["g1"][:, 0, :])
    vecs = vecs.at[:, 3, :d_model].set(params["be1"][:, 0, :])
    vecs = vecs.at[:, 4, :dff].set(params["bff1"][:, 0, :])
    vecs = vecs.at[:, 5, :d_model].set(params["bff2"][:, 0, :])
    vecs = vecs.at[:, 6, :d_model].set(params["g2"][:, 0, :])
    vecs = vecs.at[:, 7, :d_model].set(params["be2"][:, 0, :])

    operands = [
        x_rows, pe_rows, wp, params["bp"],
        params["wqkv"].astype(jnp.bfloat16),
        params["wo"].astype(jnp.bfloat16),
        params["w1"].astype(jnp.bfloat16),
        params["w2"].astype(jnp.bfloat16),
        vecs,
        params["gf"], params["bf"],
    ]

    def rows_spec(width):
        return pl.BlockSpec((rows, width), lambda r, l: (r, 0))

    def const_spec(shape):
        return pl.BlockSpec(shape, lambda r, l: (0,) * len(shape))

    def layer_spec(shape_tail):
        return pl.BlockSpec((1,) + shape_tail, lambda r, l: (l,) + (0,) * len(shape_tail))

    in_specs = [
        rows_spec(IN_pad),                       # x rows (only read at l == 0)
        rows_spec(d_model),                      # pe rows
        const_spec((IN_pad, d_model)),           # wp
        const_spec((1, d_model)),                # bp
        layer_spec((d_model, 3 * d_model)),      # wqkv  (streamed per layer)
        layer_spec((d_model, d_model)),          # wo
        layer_spec((d_model, dff)),              # w1
        layer_spec((dff, d_model)),              # w2
        layer_spec((8, vec_w)),                  # packed per-layer vectors
        const_spec((1, d_model)),                # gf
        const_spec((1, d_model)),                # bf
    ]

    kernel = functools.partial(_encoder_kernel, num_layers=L, nhead=nhead,
                               d_model=d_model, dff=dff, bb=bb, seq=S_pad, seq_real=S)

    out = pl.pallas_call(
        kernel,
        out_shape=jax.ShapeDtypeStruct((B_pad * S_pad, d_model), jnp.float32),
        grid=(R, L),                             # layer axis innermost (residual carried in VMEM)
        in_specs=in_specs,
        out_specs=pl.BlockSpec((rows, d_model), lambda r, l: (r, 0)),
        scratch_shapes=[pltpu.VMEM((rows, d_model), jnp.float32),    # residual stream
                        pltpu.VMEM((rows, d_model), jnp.float32)],   # head-concat attention out
        compiler_params=pltpu.CompilerParams(
            dimension_semantics=("parallel", "arbitrary"),
            vmem_limit_bytes=int(vmem_budget),
        ),
    )(*operands)

    return out.reshape(B_pad, S_pad, d_model)[:B, :S]


# ----------------------------- pure-JAX reference -----------------------------

def _reference(x, params, *, d_model, nhead, num_layers):
    B, S, _ = x.shape
    hd = d_model // nhead
    pe = _positional_rows(B, d_model)
    y = x @ params["wp"] + params["bp"]
    y = y + pe[:, None, :]                               # (B,1,D) broadcast over seq (bug-faithful)
    for l in range(num_layers):
        qkv = y @ params["wqkv"][l] + params["bqkv"][l]
        q, k, v = jnp.split(qkv, 3, axis=-1)
        q = q.reshape(B, S, nhead, hd).transpose(0, 2, 1, 3)
        k = k.reshape(B, S, nhead, hd).transpose(0, 2, 1, 3)
        v = v.reshape(B, S, nhead, hd).transpose(0, 2, 1, 3)
        s = jnp.einsum("bhqd,bhkd->bhqk", q, k) / math.sqrt(hd)
        p = jax.nn.softmax(s, axis=-1)
        a = jnp.einsum("bhqk,bhkd->bhqd", p, v).transpose(0, 2, 1, 3).reshape(B, S, d_model)
        a = a @ params["wo"][l] + params["bo"][l]
        y = _layer_norm(y + a, params["g1"][l], params["be1"][l])
        f = jax.nn.gelu(y @ params["w1"][l] + params["bff1"][l], approximate=False)
        f = f @ params["w2"][l] + params["bff2"][l]
        y = _layer_norm(y + f, params["g2"][l], params["be2"][l])
    return _layer_norm(y, params["gf"], params["bf"])


def _with_bf16_matmul_weights(params):
    """Round the matmul weights to bf16 (the storage/compute precision the kernel uses)."""
    out = dict(params)
    for k in ("wp", "wqkv", "wo", "w1", "w2"):
        out[k] = params[k].astype(jnp.bfloat16).astype(jnp.float32)
    return out


# ----------------------------- main -----------------------------

if __name__ == "__main__":
    # small shapes consistent with the module (d_model/nhead/num_layers are constructor args)
    B, S, INPUT_DIM = 2, 8, 16
    D_MODEL, NHEAD, NUM_LAYERS = 128, 4, 2
    DFF = D_MODEL * 4   # TRANSFORMER_FEEDFORWARD_MULTIPLIER

    key = jax.random.PRNGKey(0)
    kx, kp = jax.random.split(key)
    x = jax.random.normal(kx, (B, S, INPUT_DIM), dtype=jnp.float32)
    params = init_params(kp, INPUT_DIM, D_MODEL, NHEAD, NUM_LAYERS, DFF)

    out = transformer_encoder(x, params, d_model=D_MODEL, nhead=NHEAD, num_layers=NUM_LAYERS)
    out = jax.block_until_ready(out)
    assert out.shape == (B, S, D_MODEL), out.shape

    # reference: same math in plain JAX (f32), using the exact bf16-rounded weight values the
    # kernel consumes; tolerance covers bf16 activation rounding + approx reciprocal + erf poly.
    ref = _reference(x, _with_bf16_matmul_weights(params),
                     d_model=D_MODEL, nhead=NHEAD, num_layers=NUM_LAYERS)
    ref = jax.block_until_ready(ref)
    np.testing.assert_allclose(np.asarray(out), np.asarray(ref), rtol=2e-2, atol=2e-2)

    print("KERNEL_OK")
</pallas_src>

<mosaic_0001>
module attributes {stable_mosaic.version = 11 : i64} {
  func.func @_encoder_kernel(%arg0: i32, %arg1: i32, %arg2: memref<16x128xbf16, #tpu.memory_space<vmem>>, %arg3: memref<16x128xf32, #tpu.memory_space<vmem>>, %arg4: memref<128x128xbf16, #tpu.memory_space<vmem>>, %arg5: memref<1x128xf32, #tpu.memory_space<vmem>>, %arg6: memref<1x128x384xbf16, #tpu.memory_space<vmem>>, %arg7: memref<1x128x128xbf16, #tpu.memory_space<vmem>>, %arg8: memref<1x128x512xbf16, #tpu.memory_space<vmem>>, %arg9: memref<1x512x128xbf16, #tpu.memory_space<vmem>>, %arg10: memref<1x8x512xf32, #tpu.memory_space<vmem>>, %arg11: memref<1x128xf32, #tpu.memory_space<vmem>>, %arg12: memref<1x128xf32, #tpu.memory_space<vmem>>, %arg13: memref<16x128xf32, #tpu.memory_space<vmem>>, %arg14: memref<16x128xf32, #tpu.memory_space<vmem>>, %arg15: memref<16x128xf32, #tpu.memory_space<vmem>>) attributes {dimension_semantics = [#tpu.dimension_semantics<parallel>, #tpu.dimension_semantics<arbitrary>], iteration_bounds = array<i64: 1, 2>, scalar_prefetch = 0 : i64, scratch_operands = 2 : i64, tpu.core_type = #tpu.core_type<tc>, window_params = [{transform_indices = @transform_0, window_bounds = array<i64: 16, 128>}, {transform_indices = @transform_1, window_bounds = array<i64: 16, 128>}, {pipeline_mode = #tpu.pipeline_mode<synchronous>, transform_indices = @transform_2, window_bounds = array<i64: 128, 128>}, {pipeline_mode = #tpu.pipeline_mode<synchronous>, transform_indices = @transform_3, window_bounds = array<i64: 1, 128>}, {transform_indices = @transform_4, window_bounds = array<i64: 1, 128, 384>}, {transform_indices = @transform_5, window_bounds = array<i64: 1, 128, 128>}, {transform_indices = @transform_6, window_bounds = array<i64: 1, 128, 512>}, {transform_indices = @transform_7, window_bounds = array<i64: 1, 512, 128>}, {transform_indices = @transform_8, window_bounds = array<i64: 1, 8, 512>}, {pipeline_mode = #tpu.pipeline_mode<synchronous>, transform_indices = @transform_9, window_bounds = array<i64: 1, 128>}, {pipeline_mode = #tpu.pipeline_mode<synchronous>, transform_indices = @transform_10, window_bounds = array<i64: 1, 128>}, {transform_indices = @transform_11, window_bounds = array<i64: 16, 128>}]} {
    %c0_i32 = arith.constant 0 : i32
    %0 = arith.cmpi eq, %arg1, %c0_i32 : i32
    %1 = arith.extui %0 : i1 to i32
    %c0_i32_0 = arith.constant 0 : i32
    %2 = arith.cmpi ne, %1, %c0_i32_0 : i32
    scf.if %2 {
      %c0_75 = arith.constant 0 : index
      %c0_76 = arith.constant 0 : index
      %218 = vector.load %arg2[%c0_75, %c0_76] : memref<16x128xbf16, #tpu.memory_space<vmem>>, vector<16x128xbf16>
      %c0_77 = arith.constant 0 : index
      %c0_78 = arith.constant 0 : index
      %219 = vector.load %arg4[%c0_77, %c0_78] : memref<128x128xbf16, #tpu.memory_space<vmem>>, vector<128x128xbf16>
      %cst_79 = arith.constant dense<0.000000e+00> : vector<16x128xf32>
      %220 = tpu.matmul %218, %219, %cst_79 {dimension_numbers = #tpu.dot_dimension_numbers<[1], [0], [0], [1], [0, 0, 1, 1], [], []>} : vector<16x128xbf16>, vector<128x128xbf16>, vector<16x128xf32> -> vector<16x128xf32>
      %c0_80 = arith.constant 0 : index
      %c0_81 = arith.constant 0 : index
      %221 = vector.load %arg5[%c0_80, %c0_81] : memref<1x128xf32, #tpu.memory_space<vmem>>, vector<1x128xf32>
      %222 = vector.broadcast %221 : vector<1x128xf32> to vector<16x128xf32>
      %223 = arith.addf %220, %222 : vector<16x128xf32>
      %c0_82 = arith.constant 0 : index
      %c0_83 = arith.constant 0 : index
      %224 = vector.load %arg3[%c0_82, %c0_83] : memref<16x128xf32, #tpu.memory_space<vmem>>, vector<16x128xf32>
      %225 = arith.addf %223, %224 : vector<16x128xf32>
      %c0_84 = arith.constant 0 : index
      %c0_85 = arith.constant 0 : index
      %226 = vector.load %arg14[%c0_84, %c0_85] : memref<16x128xf32, #tpu.memory_space<vmem>>, vector<16x128xf32>
      tpu.vector_store %arg14[%c0_84, %c0_85], %225 {strides = array<i32>} : memref<16x128xf32, #tpu.memory_space<vmem>>, vector<16x128xf32>,
    } else {
    }
    %c0 = arith.constant 0 : index
    %c0_1 = arith.constant 0 : index
    %3 = vector.load %arg14[%c0, %c0_1] : memref<16x128xf32, #tpu.memory_space<vmem>>, vector<16x128xf32>
    %c0_2 = arith.constant 0 : index
    %c0_3 = arith.constant 0 : index
    %c0_4 = arith.constant 0 : index
    %4 = vector.load %arg10[%c0_2, %c0_3, %c0_4] : memref<1x8x512xf32, #tpu.memory_space<vmem>>, vector<1x8x512xf32>
    %5 = vector.shape_cast %4 : vector<1x8x512xf32> to vector<8x512xf32>
    %6 = vector.extract_strided_slice %5 {offsets = [0, 0], sizes = [1, 384], strides = [1, 1]} : vector<8x512xf32> to vector<1x384xf32>
    %7 = vector.extract_strided_slice %5 {offsets = [1, 0], sizes = [1, 128], strides = [1, 1]} : vector<8x512xf32> to vector<1x128xf32>
    %8 = vector.extract_strided_slice %5 {offsets = [2, 0], sizes = [1, 128], strides = [1, 1]} : vector<8x512xf32> to vector<1x128xf32>
    %9 = vector.extract_strided_slice %5 {offsets = [3, 0], sizes = [1, 128], strides = [1, 1]} : vector<8x512xf32> to vector<1x128xf32>
    %10 = vector.extract_strided_slice %5 {offsets = [4, 0], sizes = [1, 512], strides = [1, 1]} : vector<8x512xf32> to vector<1x512xf32>
    %11 = vector.extract_strided_slice %5 {offsets = [5, 0], sizes = [1, 128], strides = [1, 1]} : vector<8x512xf32> to vector<1x128xf32>
    %12 = vector.extract_strided_slice %5 {offsets = [6, 0], sizes = [1, 128], strides = [1, 1]} : vector<8x512xf32> to vector<1x128xf32>
    %13 = vector.extract_strided_slice %5 {offsets = [7, 0], sizes = [1, 128], strides = [1, 1]} : vector<8x512xf32> to vector<1x128xf32>
    %14 = arith.truncf %3 : vector<16x128xf32> to vector<16x128xbf16>
    %c0_5 = arith.constant 0 : index
    %c0_6 = arith.constant 0 : index
    %c0_7 = arith.constant 0 : index
    %15 = vector.load %arg6[%c0_5, %c0_6, %c0_7] : memref<1x128x384xbf16, #tpu.memory_space<vmem>>, vector<1x128x384xbf16>
    %16 = vector.shape_cast %15 : vector<1x128x384xbf16> to vector<128x384xbf16>
    %cst = arith.constant dense<0.000000e+00> : vector<16x384xf32>
    %17 = tpu.matmul %14, %16, %cst {dimension_numbers = #tpu.dot_dimension_numbers<[1], [0], [0], [1], [0, 0, 1, 1], [], []>} : vector<16x128xbf16>, vector<128x384xbf16>, vector<16x384xf32> -> vector<16x384xf32>
    %18 = vector.broadcast %6 : vector<1x384xf32> to vector<16x384xf32>
    %19 = arith.addf %17, %18 : vector<16x384xf32>
    %20 = vector.extract_strided_slice %19 {offsets = [0, 0], sizes = [16, 128], strides = [1, 1]} : vector<16x384xf32> to vector<16x128xf32>
    %21 = vector.shape_cast %20 : vector<16x128xf32> to vector<2x8x128xf32>
    %22 = arith.truncf %21 : vector<2x8x128xf32> to vector<2x8x128xbf16>
    %23 = vector.extract_strided_slice %19 {offsets = [0, 128], sizes = [16, 128], strides = [1, 1]} : vector<16x384xf32> to vector<16x128xf32>
    %24 = vector.shape_cast %23 : vector<16x128xf32> to vector<2x8x128xf32>
    %25 = arith.truncf %24 : vector<2x8x128xf32> to vector<2x8x128xbf16>
    %26 = vector.extract_strided_slice %19 {offsets = [0, 256], sizes = [16, 128], strides = [1, 1]} : vector<16x384xf32> to vector<16x128xf32>
    %27 = vector.shape_cast %26 : vector<16x128xf32> to vector<2x8x128xf32>
    %28 = arith.truncf %27 : vector<2x8x128xf32> to vector<2x8x128xbf16>
    %29 = vector.extract_strided_slice %22 {offsets = [0, 0, 0], sizes = [2, 8, 32], strides = [1, 1, 1]} : vector<2x8x128xbf16> to vector<2x8x32xbf16>
    %30 = vector.extract_strided_slice %25 {offsets = [0, 0, 0], sizes = [2, 8, 32], strides = [1, 1, 1]} : vector<2x8x128xbf16> to vector<2x8x32xbf16>
    %31 = vector.extract_strided_slice %28 {offsets = [0, 0, 0], sizes = [2, 8, 32], strides = [1, 1, 1]} : vector<2x8x128xbf16> to vector<2x8x32xbf16>
    "tpu.trace_start"() <{level = 10 : i32, message = "bqd,bkd->bqk"}> : () -> ()
    %cst_8 = arith.constant dense<0.000000e+00> : vector<2x8x8xf32>
    %32 = tpu.matmul %29, %30, %cst_8 {dimension_numbers = #tpu.dot_dimension_numbers<[2], [2], [1], [1], [0, 0, 0, 1, 1, 1], [0], [0]>} : vector<2x8x32xbf16>, vector<2x8x32xbf16>, vector<2x8x8xf32> -> vector<2x8x8xf32>
    "tpu.trace_stop"() : () -> ()
    %cst_9 = arith.constant 0.176776692 : f32
    %33 = vector.broadcast %cst_9 : f32 to vector<2x8x8xf32>
    %34 = arith.mulf %32, %33 : vector<2x8x8xf32>
    %cst_10 = arith.constant dense<0xFF800000> : vector<2x8xf32>
    %35 = vector.multi_reduction <maximumf>, %34, %cst_10 [2] : vector<2x8x8xf32> to vector<2x8xf32>
    %36 = vector.shape_cast %35 : vector<2x8xf32> to vector<2x8x1xf32>
    %37 = vector.broadcast %36 : vector<2x8x1xf32> to vector<2x8x8xf32>
    %38 = arith.subf %34, %37 : vector<2x8x8xf32>
    %39 = math.exp %38 : vector<2x8x8xf32>
    %cst_11 = arith.constant dense<0.000000e+00> : vector<2x8xf32>
    %40 = vector.multi_reduction <add>, %39, %cst_11 [2] : vector<2x8x8xf32> to vector<2x8xf32>
    %41 = vector.shape_cast %40 : vector<2x8xf32> to vector<2x8x1xf32>
    %42 = tpu.reciprocal %41 {approx = true} : vector<2x8x1xf32> -> vector<2x8x1xf32>
    %43 = vector.broadcast %42 : vector<2x8x1xf32> to vector<2x8x8xf32>
    %44 = arith.mulf %39, %43 : vector<2x8x8xf32>
    %45 = arith.truncf %44 : vector<2x8x8xf32> to vector<2x8x8xbf16>
    "tpu.trace_start"() <{level = 10 : i32, message = "bqk,bkd->bqd"}> : () -> ()
    %cst_12 = arith.constant dense<0.000000e+00> : vector<2x8x32xf32>
    %46 = tpu.matmul %45, %31, %cst_12 {dimension_numbers = #tpu.dot_dimension_numbers<[2], [1], [1], [2], [0, 0, 0, 1, 1, 2], [0], [0]>} : vector<2x8x8xbf16>, vector<2x8x32xbf16>, vector<2x8x32xf32> -> vector<2x8x32xf32>
    "tpu.trace_stop"() : () -> ()
    %47 = vector.shape_cast %46 : vector<2x8x32xf32> to vector<16x32xf32>
    %c0_13 = arith.constant 0 : index
    %c0_14 = arith.constant 0 : index
    %48 = vector.load %arg15[%c0_13, %c0_14] : memref<16x128xf32, #tpu.memory_space<vmem>>, vector<16x32xf32>
    tpu.vector_store %arg15[%c0_13, %c0_14], %47 {strides = array<i32>} : memref<16x128xf32, #tpu.memory_space<vmem>>, vector<16x32xf32>,
    %49 = vector.extract_strided_slice %22 {offsets = [0, 0, 32], sizes = [2, 8, 32], strides = [1, 1, 1]} : vector<2x8x128xbf16> to vector<2x8x32xbf16>
    %50 = vector.extract_strided_slice %25 {offsets = [0, 0, 32], sizes = [2, 8, 32], strides = [1, 1, 1]} : vector<2x8x128xbf16> to vector<2x8x32xbf16>
    %51 = vector.extract_strided_slice %28 {offsets = [0, 0, 32], sizes = [2, 8, 32], strides = [1, 1, 1]} : vector<2x8x128xbf16> to vector<2x8x32xbf16>
    "tpu.trace_start"() <{level = 10 : i32, message = "bqd,bkd->bqk"}> : () -> ()
    %cst_15 = arith.constant dense<0.000000e+00> : vector<2x8x8xf32>
    %52 = tpu.matmul %49, %50, %cst_15 {dimension_numbers = #tpu.dot_dimension_numbers<[2], [2], [1], [1], [0, 0, 0, 1, 1, 1], [0], [0]>} : vector<2x8x32xbf16>, vector<2x8x32xbf16>, vector<2x8x8xf32> -> vector<2x8x8xf32>
    "tpu.trace_stop"() : () -> ()
    %cst_16 = arith.constant 0.176776692 : f32
    %53 = vector.broadcast %cst_16 : f32 to vector<2x8x8xf32>
    %54 = arith.mulf %52, %53 : vector<2x8x8xf32>
    %cst_17 = arith.constant dense<0xFF800000> : vector<2x8xf32>
    %55 = vector.multi_reduction <maximumf>, %54, %cst_17 [2] : vector<2x8x8xf32> to vector<2x8xf32>
    %56 = vector.shape_cast %55 : vector<2x8xf32> to vector<2x8x1xf32>
    %57 = vector.broadcast %56 : vector<2x8x1xf32> to vector<2x8x8xf32>
    %58 = arith.subf %54, %57 : vector<2x8x8xf32>
    %59 = math.exp %58 : vector<2x8x8xf32>
    %cst_18 = arith.constant dense<0.000000e+00> : vector<2x8xf32>
    %60 = vector.multi_reduction <add>, %59, %cst_18 [2] : vector<2x8x8xf32> to vector<2x8xf32>
    %61 = vector.shape_cast %60 : vector<2x8xf32> to vector<2x8x1xf32>
    %62 = tpu.reciprocal %61 {approx = true} : vector<2x8x1xf32> -> vector<2x8x1xf32>
    %63 = vector.broadcast %62 : vector<2x8x1xf32> to vector<2x8x8xf32>
    %64 = arith.mulf %59, %63 : vector<2x8x8xf32>
    %65 = arith.truncf %64 : vector<2x8x8xf32> to vector<2x8x8xbf16>
    "tpu.trace_start"() <{level = 10 : i32, message = "bqk,bkd->bqd"}> : () -> ()
    %cst_19 = arith.constant dense<0.000000e+00> : vector<2x8x32xf32>
    %66 = tpu.matmul %65, %51, %cst_19 {dimension_numbers = #tpu.dot_dimension_numbers<[2], [1], [1], [2], [0, 0, 0, 1, 1, 2], [0], [0]>} : vector<2x8x8xbf16>, vector<2x8x32xbf16>, vector<2x8x32xf32> -> vector<2x8x32xf32>
    "tpu.trace_stop"() : () -> ()
    %67 = vector.shape_cast %66 : vector<2x8x32xf32> to vector<16x32xf32>
    %c0_20 = arith.constant 0 : index
    %c32 = arith.constant 32 : index
    %68 = vector.load %arg15[%c0_20, %c32] : memref<16x128xf32, #tpu.memory_space<vmem>>, vector<16x32xf32>
    tpu.vector_store %arg15[%c0_20, %c32], %67 {strides = array<i32>} : memref<16x128xf32, #tpu.memory_space<vmem>>, vector<16x32xf32>,
    %69 = vector.extract_strided_slice %22 {offsets = [0, 0, 64], sizes = [2, 8, 32], strides = [1, 1, 1]} : vector<2x8x128xbf16> to vector<2x8x32xbf16>
    %70 = vector.extract_strided_slice %25 {offsets = [0, 0, 64], sizes = [2, 8, 32], strides = [1, 1, 1]} : vector<2x8x128xbf16> to vector<2x8x32xbf16>
    %71 = vector.extract_strided_slice %28 {offsets = [0, 0, 64], sizes = [2, 8, 32], strides = [1, 1, 1]} : vector<2x8x128xbf16> to vector<2x8x32xbf16>
    "tpu.trace_start"() <{level = 10 : i32, message = "bqd,bkd->bqk"}> : () -> ()
    %cst_21 = arith.constant dense<0.000000e+00> : vector<2x8x8xf32>
    %72 = tpu.matmul %69, %70, %cst_21 {dimension_numbers = #tpu.dot_dimension_numbers<[2], [2], [1], [1], [0, 0, 0, 1, 1, 1], [0], [0]>} : vector<2x8x32xbf16>, vector<2x8x32xbf16>, vector<2x8x8xf32> -> vector<2x8x8xf32>
    "tpu.trace_stop"() : () -> ()
    %cst_22 = arith.constant 0.176776692 : f32
    %73 = vector.broadcast %cst_22 : f32 to vector<2x8x8xf32>
    %74 = arith.mulf %72, %73 : vector<2x8x8xf32>
    %cst_23 = arith.constant dense<0xFF800000> : vector<2x8xf32>
    %75 = vector.multi_reduction <maximumf>, %74, %cst_23 [2] : vector<2x8x8xf32> to vector<2x8xf32>
    %76 = vector.shape_cast %75 : vector<2x8xf32> to vector<2x8x1xf32>
    %77 = vector.broadcast %76 : vector<2x8x1xf32> to vector<2x8x8xf32>
    %78 = arith.subf %74, %77 : vector<2x8x8xf32>
    %79 = math.exp %78 : vector<2x8x8xf32>
    %cst_24 = arith.constant dense<0.000000e+00> : vector<2x8xf32>
    %80 = vector.multi_reduction <add>, %79, %cst_24 [2] : vector<2x8x8xf32> to vector<2x8xf32>
    %81 = vector.shape_cast %80 : vector<2x8xf32> to vector<2x8x1xf32>
    %82 = tpu.reciprocal %81 {approx = true} : vector<2x8x1xf32> -> vector<2x8x1xf32>
    %83 = vector.broadcast %82 : vector<2x8x1xf32> to vector<2x8x8xf32>
    %84 = arith.mulf %79, %83 : vector<2x8x8xf32>
    %85 = arith.truncf %84 : vector<2x8x8xf32> to vector<2x8x8xbf16>
    "tpu.trace_start"() <{level = 10 : i32, message = "bqk,bkd->bqd"}> : () -> ()
    %cst_25 = arith.constant dense<0.000000e+00> : vector<2x8x32xf32>
    %86 = tpu.matmul %85, %71, %cst_25 {dimension_numbers = #tpu.dot_dimension_numbers<[2], [1], [1], [2], [0, 0, 0, 1, 1, 2], [0], [0]>} : vector<2x8x8xbf16>, vector<2x8x32xbf16>, vector<2x8x32xf32> -> vector<2x8x32xf32>
    "tpu.trace_stop"() : () -> ()
    %87 = vector.shape_cast %86 : vector<2x8x32xf32> to vector<16x32xf32>
    %c0_26 = arith.constant 0 : index
    %c64 = arith.constant 64 : index
    %88 = vector.load %arg15[%c0_26, %c64] : memref<16x128xf32, #tpu.memory_space<vmem>>, vector<16x32xf32>
    tpu.vector_store %arg15[%c0_26, %c64], %87 {strides = array<i32>} : memref<16x128xf32, #tpu.memory_space<vmem>>, vector<16x32xf32>,
    %89 = vector.extract_strided_slice %22 {offsets = [0, 0, 96], sizes = [2, 8, 32], strides = [1, 1, 1]} : vector<2x8x128xbf16> to vector<2x8x32xbf16>
    %90 = vector.extract_strided_slice %25 {offsets = [0, 0, 96], sizes = [2, 8, 32], strides = [1, 1, 1]} : vector<2x8x128xbf16> to vector<2x8x32xbf16>
    %91 = vector.extract_strided_slice %28 {offsets = [0, 0, 96], sizes = [2, 8, 32], strides = [1, 1, 1]} : vector<2x8x128xbf16> to vector<2x8x32xbf16>
    "tpu.trace_start"() <{level = 10 : i32, message = "bqd,bkd->bqk"}> : () -> ()
    %cst_27 = arith.constant dense<0.000000e+00> : vector<2x8x8xf32>
    %92 = tpu.matmul %89, %90, %cst_27 {dimension_numbers = #tpu.dot_dimension_numbers<[2], [2], [1], [1], [0, 0, 0, 1, 1, 1], [0], [0]>} : vector<2x8x32xbf16>, vector<2x8x32xbf16>, vector<2x8x8xf32> -> vector<2x8x8xf32>
    "tpu.trace_stop"() : () -> ()
    %cst_28 = arith.constant 0.176776692 : f32
    %93 = vector.broadcast %cst_28 : f32 to vector<2x8x8xf32>
    %94 = arith.mulf %92, %93 : vector<2x8x8xf32>
    %cst_29 = arith.constant dense<0xFF800000> : vector<2x8xf32>
    %95 = vector.multi_reduction <maximumf>, %94, %cst_29 [2] : vector<2x8x8xf32> to vector<2x8xf32>
    %96 = vector.shape_cast %95 : vector<2x8xf32> to vector<2x8x1xf32>
    %97 = vector.broadcast %96 : vector<2x8x1xf32> to vector<2x8x8xf32>
    %98 = arith.subf %94, %97 : vector<2x8x8xf32>
    %99 = math.exp %98 : vector<2x8x8xf32>
    %cst_30 = arith.constant dense<0.000000e+00> : vector<2x8xf32>
    %100 = vector.multi_reduction <add>, %99, %cst_30 [2] : vector<2x8x8xf32> to vector<2x8xf32>
    %101 = vector.shape_cast %100 : vector<2x8xf32> to vector<2x8x1xf32>
    %102 = tpu.reciprocal %101 {approx = true} : vector<2x8x1xf32> -> vector<2x8x1xf32>
    %103 = vector.broadcast %102 : vector<2x8x1xf32> to vector<2x8x8xf32>
    %104 = arith.mulf %99, %103 : vector<2x8x8xf32>
    %105 = arith.truncf %104 : vector<2x8x8xf32> to vector<2x8x8xbf16>
    "tpu.trace_start"() <{level = 10 : i32, message = "bqk,bkd->bqd"}> : () -> ()
    %cst_31 = arith.constant dense<0.000000e+00> : vector<2x8x32xf32>
    %106 = tpu.matmul %105, %91, %cst_31 {dimension_numbers = #tpu.dot_dimension_numbers<[2], [1], [1], [2], [0, 0, 0, 1, 1, 2], [0], [0]>} : vector<2x8x8xbf16>, vector<2x8x32xbf16>, vector<2x8x32xf32> -> vector<2x8x32xf32>
    "tpu.trace_stop"() : () -> ()
    %107 = vector.shape_cast %106 : vector<2x8x32xf32> to vector<16x32xf32>
    %c0_32 = arith.constant 0 : index
    %c96 = arith.constant 96 : index
    %108 = vector.load %arg15[%c0_32, %c96] : memref<16x128xf32, #tpu.memory_space<vmem>>, vector<16x32xf32>
    tpu.vector_store %arg15[%c0_32, %c96], %107 {strides = array<i32>} : memref<16x128xf32, #tpu.memory_space<vmem>>, vector<16x32xf32>,
    %c0_33 = arith.constant 0 : index
    %c0_34 = arith.constant 0 : index
    %109 = vector.load %arg15[%c0_33, %c0_34] : memref<16x128xf32, #tpu.memory_space<vmem>>, vector<16x128xf32>
    %110 = arith.truncf %109 : vector<16x128xf32> to vector<16x128xbf16>
    %c0_35 = arith.constant 0 : index
    %c0_36 = arith.constant 0 : index
    %c0_37 = arith.constant 0 : index
    %111 = vector.load %arg7[%c0_35, %c0_36, %c0_37] : memref<1x128x128xbf16, #tpu.memory_space<vmem>>, vector<1x128x128xbf16>
    %112 = vector.shape_cast %111 : vector<1x128x128xbf16> to vector<128x128xbf16>
    %cst_38 = arith.constant dense<0.000000e+00> : vector<16x128xf32>
    %113 = tpu.matmul %110, %112, %cst_38 {dimension_numbers = #tpu.dot_dimension_numbers<[1], [0], [0], [1], [0, 0, 1, 1], [], []>} : vector<16x128xbf16>, vector<128x128xbf16>, vector<16x128xf32> -> vector<16x128xf32>
    %114 = vector.broadcast %7 : vector<1x128xf32> to vector<16x128xf32>
    %115 = arith.addf %113, %114 : vector<16x128xf32>
    %116 = arith.addf %3, %115 : vector<16x128xf32>
    %cst_39 = arith.constant dense<0.000000e+00> : vector<16xf32>
    %117 = vector.multi_reduction <add>, %116, %cst_39 [1] : vector<16x128xf32> to vector<16xf32>
    %118 = vector.shape_cast %117 : vector<16xf32> to vector<16x1xf32>
    %cst_40 = arith.constant 1.280000e+02 : f32
    %119 = vector.broadcast %cst_40 : f32 to vector<16x1xf32>
    %120 = arith.divf %118, %119 : vector<16x1xf32>
    %121 = vector.broadcast %120 : vector<16x1xf32> to vector<16x128xf32>
    %122 = arith.subf %116, %121 : vector<16x128xf32>
    %123 = arith.mulf %122, %122 : vector<16x128xf32>
    %cst_41 = arith.constant dense<0.000000e+00> : vector<16xf32>
    %124 = vector.multi_reduction <add>, %123, %cst_41 [1] : vector<16x128xf32> to vector<16xf32>
    %125 = vector.shape_cast %124 : vector<16xf32> to vector<16x1xf32>
    %cst_42 = arith.constant 1.280000e+02 : f32
    %126 = vector.broadcast %cst_42 : f32 to vector<16x1xf32>
    %127 = arith.divf %125, %126 : vector<16x1xf32>
    %128 = vector.broadcast %120 : vector<16x1xf32> to vector<16x128xf32>
    %129 = arith.subf %116, %128 : vector<16x128xf32>
    %cst_43 = arith.constant 9.99999974E-6 : f32
    %130 = vector.broadcast %cst_43 : f32 to vector<16x1xf32>
    %131 = arith.addf %127, %130 : vector<16x1xf32>
    %132 = math.rsqrt %131 : vector<16x1xf32>
    %133 = vector.broadcast %132 : vector<16x1xf32> to vector<16x128xf32>
    %134 = arith.mulf %129, %133 : vector<16x128xf32>
    %135 = vector.broadcast %8 : vector<1x128xf32> to vector<16x128xf32>
    %136 = arith.mulf %134, %135 : vector<16x128xf32>
    %137 = vector.broadcast %9 : vector<1x128xf32> to vector<16x128xf32>
    %138 = arith.addf %136, %137 : vector<16x128xf32>
    %139 = arith.truncf %138 : vector<16x128xf32> to vector<16x128xbf16>
    %c0_44 = arith.constant 0 : index
    %c0_45 = arith.constant 0 : index
    %c0_46 = arith.constant 0 : index
    %140 = vector.load %arg8[%c0_44, %c0_45, %c0_46] : memref<1x128x512xbf16, #tpu.memory_space<vmem>>, vector<1x128x512xbf16>
    %141 = vector.shape_cast %140 : vector<1x128x512xbf16> to vector<128x512xbf16>
    %cst_47 = arith.constant dense<0.000000e+00> : vector<16x512xf32>
    %142 = tpu.matmul %139, %141, %cst_47 {dimension_numbers = #tpu.dot_dimension_numbers<[1], [0], [0], [1], [0, 0, 1, 1], [], []>} : vector<16x128xbf16>, vector<128x512xbf16>, vector<16x512xf32> -> vector<16x512xf32>
    %143 = vector.broadcast %10 : vector<1x512xf32> to vector<16x512xf32>
    %144 = arith.addf %142, %143 : vector<16x512xf32>
    %cst_48 = arith.constant 5.000000e-01 : f32
    %145 = vector.broadcast %cst_48 : f32 to vector<16x512xf32>
    %146 = arith.mulf %145, %144 : vector<16x512xf32>
    %cst_49 = arith.constant 0.707106769 : f32
    %147 = vector.broadcast %cst_49 : f32 to vector<16x512xf32>
    %148 = arith.mulf %144, %147 : vector<16x512xf32>
    %cst_50 = arith.constant 0.000000e+00 : f32
    %149 = vector.broadcast %cst_50 : f32 to vector<16x512xf32>
    %150 = arith.cmpf oge, %148, %149 : vector<16x512xf32>
    %cst_51 = arith.constant 1.000000e+00 : f32
    %cst_52 = arith.constant -1.000000e+00 : f32
    %151 = vector.broadcast %cst_51 : f32 to vector<16x512xf32>
    %152 = vector.broadcast %cst_52 : f32 to vector<16x512xf32>
    %153 = arith.select %150, %151, %152 : vector<16x512xi1>, vector<16x512xf32>
    %154 = math.absf %148 : vector<16x512xf32>
    %cst_53 = arith.constant 0.327591091 : f32
    %155 = vector.broadcast %cst_53 : f32 to vector<16x512xf32>
    %156 = arith.mulf %155, %154 : vector<16x512xf32>
    %cst_54 = arith.constant 1.000000e+00 : f32
    %157 = vector.broadcast %cst_54 : f32 to vector<16x512xf32>
    %158 = arith.addf %157, %156 : vector<16x512xf32>
    %159 = tpu.reciprocal %158 {approx = true} : vector<16x512xf32> -> vector<16x512xf32>
    %cst_55 = arith.constant 1.06140542 : f32
    %160 = vector.broadcast %cst_55 : f32 to vector<16x512xf32>
    %161 = arith.mulf %160, %159 : vector<16x512xf32>
    %cst_56 = arith.constant -1.45315206 : f32
    %162 = vector.broadcast %cst_56 : f32 to vector<16x512xf32>
    %163 = arith.addf %161, %162 : vector<16x512xf32>
    %164 = arith.mulf %163, %159 : vector<16x512xf32>
    %cst_57 = arith.constant 1.42141378 : f32
    %165 = vector.broadcast %cst_57 : f32 to vector<16x512xf32>
    %166 = arith.addf %164, %165 : vector<16x512xf32>
    %167 = arith.mulf %166, %159 : vector<16x512xf32>
    %cst_58 = arith.constant -0.284496725 : f32
    %168 = vector.broadcast %cst_58 : f32 to vector<16x512xf32>
    %169 = arith.addf %167, %168 : vector<16x512xf32>
    %170 = arith.mulf %169, %159 : vector<16x512xf32>
    %cst_59 = arith.constant 0.254829586 : f32
    %171 = vector.broadcast %cst_59 : f32 to vector<16x512xf32>
    %172 = arith.addf %170, %171 : vector<16x512xf32>
    %173 = arith.mulf %172, %159 : vector<16x512xf32>
    %cst_60 = arith.constant 0.000000e+00 : f32
    %174 = vector.broadcast %cst_60 : f32 to vector<16x512xf32>
    %175 = arith.subf %174, %154 : vector<16x512xf32>
    %176 = arith.mulf %175, %154 : vector<16x512xf32>
    %177 = math.exp %176 : vector<16x512xf32>
    %178 = arith.mulf %173, %177 : vector<16x512xf32>
    %cst_61 = arith.constant 1.000000e+00 : f32
    %179 = vector.broadcast %cst_61 : f32 to vector<16x512xf32>
    %180 = arith.subf %179, %178 : vector<16x512xf32>
    %181 = arith.mulf %153, %180 : vector<16x512xf32>
    %cst_62 = arith.constant 1.000000e+00 : f32
    %182 = vector.broadcast %cst_62 : f32 to vector<16x512xf32>
    %183 = arith.addf %182, %181 : vector<16x512xf32>
    %184 = arith.mulf %146, %183 : vector<16x512xf32>
    %185 = arith.truncf %184 : vector<16x512xf32> to vector<16x512xbf16>
    %c0_63 = arith.constant 0 : index
    %c0_64 = arith.constant 0 : index
    %c0_65 = arith.constant 0 : index
    %186 = vector.load %arg9[%c0_63, %c0_64, %c0_65] : memref<1x512x128xbf16, #tpu.memory_space<vmem>>, vector<1x512x128xbf16>
    %187 = vector.shape_cast %186 : vector<1x512x128xbf16> to vector<512x128xbf16>
    %cst_66 = arith.constant dense<0.000000e+00> : vector<16x128xf32>
    %188 = tpu.matmul %185, %187, %cst_66 {dimension_numbers = #tpu.dot_dimension_numbers<[1], [0], [0], [1], [0, 0, 1, 1], [], []>} : vector<16x512xbf16>, vector<512x128xbf16>, vector<16x128xf32> -> vector<16x128xf32>
    %189 = vector.broadcast %11 : vector<1x128xf32> to vector<16x128xf32>
    %190 = arith.addf %188, %189 : vector<16x128xf32>
    %191 = arith.addf %138, %190 : vector<16x128xf32>
    %cst_67 = arith.constant dense<0.000000e+00> : vector<16xf32>
    %192 = vector.multi_reduction <add>, %191, %cst_67 [1] : vector<16x128xf32> to vector<16xf32>
    %193 = vector.shape_cast %192 : vector<16xf32> to vector<16x1xf32>
    %cst_68 = arith.constant 1.280000e+02 : f32
    %194 = vector.broadcast %cst_68 : f32 to vector<16x1xf32>
    %195 = arith.divf %193, %194 : vector<16x1xf32>
    %196 = vector.broadcast %195 : vector<16x1xf32> to vector<16x128xf32>
    %197 = arith.subf %191, %196 : vector<16x128xf32>
    %198 = arith.mulf %197, %197 : vector<16x128xf32>
    %cst_69 = arith.constant dense<0.000000e+00> : vector<16xf32>
    %199 = vector.multi_reduction <add>, %198, %cst_69 [1] : vector<16x128xf32> to vector<16xf32>
    %200 = vector.shape_cast %199 : vector<16xf32> to vector<16x1xf32>
    %cst_70 = arith.constant 1.280000e+02 : f32
    %201 = vector.broadcast %cst_70 : f32 to vector<16x1xf32>
    %202 = arith.divf %200, %201 : vector<16x1xf32>
    %203 = vector.broadcast %195 : vector<16x1xf32> to vector<16x128xf32>
    %204 = arith.subf %191, %203 : vector<16x128xf32>
    %cst_71 = arith.constant 9.99999974E-6 : f32
    %205 = vector.broadcast %cst_71 : f32 to vector<16x1xf32>
    %206 = arith.addf %202, %205 : vector<16x1xf32>
    %207 = math.rsqrt %206 : vector<16x1xf32>
    %208 = vector.broadcast %207 : vector<16x1xf32> to vector<16x128xf32>
    %209 = arith.mulf %204, %208 : vector<16x128xf32>
    %210 = vector.broadcast %12 : vector<1x128xf32> to vector<16x128xf32>
    %211 = arith.mulf %209, %210 : vector<16x128xf32>
    %212 = vector.broadcast %13 : vector<1x128xf32> to vector<16x128xf32>
    %213 = arith.addf %211, %212 : vector<16x128xf32>
    %c0_72 = arith.constant 0 : index
    %c0_73 = arith.constant 0 : index
    %214 = vector.load %arg14[%c0_72, %c0_73] : memref<16x128xf32, #tpu.memory_space<vmem>>, vector<16x128xf32>
    tpu.vector_store %arg14[%c0_72, %c0_73], %213 {strides = array<i32>} : memref<16x128xf32, #tpu.memory_space<vmem>>, vector<16x128xf32>,
    %c1_i32 = arith.constant 1 : i32
    %215 = arith.cmpi eq, %arg1, %c1_i32 : i32
    %216 = arith.extui %215 : i1 to i32
    %c0_i32_74 = arith.constant 0 : i32
    %217 = arith.cmpi ne, %216, %c0_i32_74 : i32
    scf.if %217 {
      %c0_75 = arith.constant 0 : index
      %c0_76 = arith.constant 0 : index
      %218 = vector.load %arg11[%c0_75, %c0_76] : memref<1x128xf32, #tpu.memory_space<vmem>>, vector<1x128xf32>
      %c0_77 = arith.constant 0 : index
      %c0_78 = arith.constant 0 : index
      %219 = vector.load %arg12[%c0_77, %c0_78] : memref<1x128xf32, #tpu.memory_space<vmem>>, vector<1x128xf32>
      %cst_79 = arith.constant dense<0.000000e+00> : vector<16xf32>
      %220 = vector.multi_reduction <add>, %213, %cst_79 [1] : vector<16x128xf32> to vector<16xf32>
      %221 = vector.shape_cast %220 : vector<16xf32> to vector<16x1xf32>
      %cst_80 = arith.constant 1.280000e+02 : f32
      %222 = vector.broadcast %cst_80 : f32 to vector<16x1xf32>
      %223 = arith.divf %221, %222 : vector<16x1xf32>
      %224 = vector.broadcast %223 : vector<16x1xf32> to vector<16x128xf32>
      %225 = arith.subf %213, %224 : vector<16x128xf32>
      %226 = arith.mulf %225, %225 : vector<16x128xf32>
      %cst_81 = arith.constant dense<0.000000e+00> : vector<16xf32>
      %227 = vector.multi_reduction <add>, %226, %cst_81 [1] : vector<16x128xf32> to vector<16xf32>
      %228 = vector.shape_cast %227 : vector<16xf32> to vector<16x1xf32>
      %cst_82 = arith.constant 1.280000e+02 : f32
      %229 = vector.broadcast %cst_82 : f32 to vector<16x1xf32>
      %230 = arith.divf %228, %229 : vector<16x1xf32>
      %231 = vector.broadcast %223 : vector<16x1xf32> to vector<16x128xf32>
      %232 = arith.subf %213, %231 : vector<16x128xf32>
      %cst_83 = arith.constant 9.99999974E-6 : f32
      %233 = vector.broadcast %cst_83 : f32 to vector<16x1xf32>
      %234 = arith.addf %230, %233 : vector<16x1xf32>
      %235 = math.rsqrt %234 : vector<16x1xf32>
      %236 = vector.broadcast %235 : vector<16x1xf32> to vector<16x128xf32>
      %237 = arith.mulf %232, %236 : vector<16x128xf32>
      %238 = vector.broadcast %218 : vector<1x128xf32> to vector<16x128xf32>
      %239 = arith.mulf %237, %238 : vector<16x128xf32>
      %240 = vector.broadcast %219 : vector<1x128xf32> to vector<16x128xf32>
      %241 = arith.addf %239, %240 : vector<16x128xf32>
      %c0_84 = arith.constant 0 : index
      %c0_85 = arith.constant 0 : index
      %242 = vector.load %arg13[%c0_84, %c0_85] : memref<16x128xf32, #tpu.memory_space<vmem>>, vector<16x128xf32>
      tpu.vector_store %arg13[%c0_84, %c0_85], %241 {strides = array<i32>} : memref<16x128xf32, #tpu.memory_space<vmem>>, vector<16x128xf32>,
    } else {
    }
    return
  }
  func.func @transform_0(%arg0: i32, %arg1: i32) -> (i32, i32) {
    %c0_i32 = arith.constant 0 : i32
    %c0_i32_0 = arith.constant 0 : i32
    return %arg0, %c0_i32 : i32, i32
  }
  func.func @transform_1(%arg0: i32, %arg1: i32) -> (i32, i32) {
    %c0_i32 = arith.constant 0 : i32
    %c0_i32_0 = arith.constant 0 : i32
    return %arg0, %c0_i32 : i32, i32
  }
  func.func @transform_2(%arg0: i32, %arg1: i32) -> (i32, i32) {
    %c0_i32 = arith.constant 0 : i32
    %c0_i32_0 = arith.constant 0 : i32
    %c0_i32_1 = arith.constant 0 : i32
    return %c0_i32, %c0_i32_0 : i32, i32
  }
  func.func @transform_3(%arg0: i32, %arg1: i32) -> (i32, i32) {
    %c0_i32 = arith.constant 0 : i32
    %c0_i32_0 = arith.constant 0 : i32
    %c0_i32_1 = arith.constant 0 : i32
    return %c0_i32, %c0_i32_0 : i32, i32
  }
  func.func @transform_4(%arg0: i32, %arg1: i32) -> (i32, i32, i32) {
    %c0_i32 = arith.constant 0 : i32
    %c0_i32_0 = arith.constant 0 : i32
    %c0_i32_1 = arith.constant 0 : i32
    return %arg1, %c0_i32, %c0_i32_0 : i32, i32, i32
  }
  func.func @transform_5(%arg0: i32, %arg1: i32) -> (i32, i32, i32) {
    %c0_i32 = arith.constant 0 : i32
    %c0_i32_0 = arith.constant 0 : i32
    %c0_i32_1 = arith.constant 0 : i32
    return %arg1, %c0_i32, %c0_i32_0 : i32, i32, i32
  }
  func.func @transform_6(%arg0: i32, %arg1: i32) -> (i32, i32, i32) {
    %c0_i32 = arith.constant 0 : i32
    %c0_i32_0 = arith.constant 0 : i32
    %c0_i32_1 = arith.constant 0 : i32
    return %arg1, %c0_i32, %c0_i32_0 : i32, i32, i32
  }
  func.func @transform_7(%arg0: i32, %arg1: i32) -> (i32, i32, i32) {
    %c0_i32 = arith.constant 0 : i32
    %c0_i32_0 = arith.constant 0 : i32
    %c0_i32_1 = arith.constant 0 : i32
    return %arg1, %c0_i32, %c0_i32_0 : i32, i32, i32
  }
  func.func @transform_8(%arg0: i32, %arg1: i32) -> (i32, i32, i32) {
    %c0_i32 = arith.constant 0 : i32
    %c0_i32_0 = arith.constant 0 : i32
    %c0_i32_1 = arith.constant 0 : i32
    return %arg1, %c0_i32, %c0_i32_0 : i32, i32, i32
  }
  func.func @transform_9(%arg0: i32, %arg1: i32) -> (i32, i32) {
    %c0_i32 = arith.constant 0 : i32
    %c0_i32_0 = arith.constant 0 : i32
    %c0_i32_1 = arith.constant 0 : i32
    return %c0_i32, %c0_i32_0 : i32, i32
  }
  func.func @transform_10(%arg0: i32, %arg1: i32) -> (i32, i32) {
    %c0_i32 = arith.constant 0 : i32
    %c0_i32_0 = arith.constant 0 : i32
    %c0_i32_1 = arith.constant 0 : i32
    return %c0_i32, %c0_i32_0 : i32, i32
  }
  func.func @transform_11(%arg0: i32, %arg1: i32) -> (i32, i32) {
    %c0_i32 = arith.constant 0 : i32
    %c0_i32_0 = arith.constant 0 : i32
    return %arg0, %c0_i32 : i32, i32
  }
}

</mosaic_0001>

<llo_original>
// kernel: tpu_custom_call.1
$region0: #{tpu_custom_call.1}
  #allocation0 [shape = 'u32[]', space=smem, size = 0x4, offset = 0x4, fixed_abs, tag = 'smem constant byte address 0x4 - core index']
  #allocation1 [shape = 'u32[144,128]{1,0:T(1,128)}', space=vmem, size = 0x12000, scoped, tag = 'internal scratch']
  #allocation2 [shape = 'f32[16,128]{1,0:T(8,128)}', space=vmem, size = 0x2000, scoped, tag = 'scratch operand']
  #allocation3 [shape = 'f32[16,128]{1,0:T(8,128)}', space=vmem, size = 0x2000, scoped, tag = 'scratch operand']
  %s0 = inlined_call_operand.hbm [shape: bf16[16,128], index: 0, kind: input, shape index: {}]
  %s1 = inlined_call_operand.hbm [shape: f32[16,128], index: 1, kind: input, shape index: {}]
  %s2 = inlined_call_operand.hbm [shape: bf16[128,128], index: 2, kind: input, shape index: {}]
  %s3 = inlined_call_operand.hbm [shape: f32[1,128], index: 3, kind: input, shape index: {}]
  %s4 = inlined_call_operand.hbm [shape: bf16[2,128,384], index: 4, kind: input, shape index: {}]
  %s5 = inlined_call_operand.hbm [shape: bf16[2,128,128], index: 5, kind: input, shape index: {}]
  %s6 = inlined_call_operand.hbm [shape: bf16[2,128,512], index: 6, kind: input, shape index: {}]
  %s7 = inlined_call_operand.hbm [shape: bf16[2,512,128], index: 7, kind: input, shape index: {}]
  %s8 = inlined_call_operand.hbm [shape: f32[2,8,512], index: 8, kind: input, shape index: {}]
  %s9 = inlined_call_operand.hbm [shape: f32[1,128], index: 9, kind: input, shape index: {}]
  %s10 = inlined_call_operand.hbm [shape: f32[1,128], index: 10, kind: input, shape index: {}]
  %s11 = inlined_call_operand.hbm [shape: f32[16,128], index: 11, kind: output, shape index: {}]
  %s12 = sld [smem:[#allocation0]]
  $region129: #{tpu_custom_call.1} parent=0
    _
  %s14 = ssub.s32 1, %s12
  %s15 = scalar_select 0, %s14, %s12
  $region1: #{tpu_custom_call.1} parent=0
    #allocation4 [shape = 'u8[4096]{0}', space=vmem, size = 0x1000, scoped, tag = 'input window, operand 0, single buffered']
    #allocation5 [shape = 's32[2]{0}', space=sflag, size = 0x8, scoped, tag = 'scoped memory for tpu_custom_call.1']
    #allocation6 [shape = 's32[2]{0}', space=sflag, size = 0x8, scoped, tag = 'scoped memory for tpu_custom_call.1']
    #allocation7 [shape = 'u8[8192]{0}', space=vmem, size = 0x2000, scoped, tag = 'input window, operand 1, single buffered']
    #allocation8 [shape = 's32[1]{0}', space=sflag, size = 0x4, scoped, tag = 'scoped memory for tpu_custom_call.1']
    #allocation9 [shape = 'u8[32768]{0}', space=vmem, size = 0x8000, scoped, tag = 'input window, operand 2, single buffered']
    #allocation10 [shape = 'u8[512]{0}', space=vmem, size = 0x400, scoped, tag = 'input window, operand 3, single buffered']
    #allocation11 [shape = 's32[1]{0}', space=sflag, size = 0x4, scoped, tag = 'scoped memory for tpu_custom_call.1']
    #allocation12 [shape = 'u8[196608]{0}', space=vmem, size = 0x30000, scoped, tag = 'input window, operand 4']
    #allocation13 [shape = 'u8[65536]{0}', space=vmem, size = 0x10000, scoped, tag = 'input window, operand 5']
    #allocation14 [shape = 'u8[262144]{0}', space=vmem, size = 0x40000, scoped, tag = 'input window, operand 6']
    #allocation15 [shape = 'u8[262144]{0}', space=vmem, size = 0x40000, scoped, tag = 'input window, operand 7']
    #allocation16 [shape = 'u8[32768]{0}', space=vmem, size = 0x8000, scoped, tag = 'input window, operand 8']
    #allocation17 [shape = 'u8[512]{0}', space=vmem, size = 0x400, scoped, tag = 'input window, operand 9, single buffered']
    #allocation18 [shape = 'u8[512]{0}', space=vmem, size = 0x400, scoped, tag = 'input window, operand 10, single buffered']
    #allocation19 [shape = 'u8[8192]{0}', space=vmem, size = 0x2000, scoped, tag = 'output window, operand 0, single buffered']
    %16 = vsyncpa [#allocation5], 0
    %17 = vsyncpa [#allocation8], 0
    %18 = vsyncpa [#allocation11], 0
    %19 = vsyncpa [#allocation6], 0
    loop: start=0, step=1, limit=4
    $region2: #{tpu_custom_call.1} parent=1 // loop_pre_header
      _
    $region3: #{tpu_custom_call.1} parent=1 // loop_header
      %s21 = sphi 0, %s25
      %p22 = scmp.ge.s32.totalorder %s21, 4
      %s28 = sphi 0, %s40
      %s29 = sphi 0, %s36
      %s30 = sphi 0, %s28
      %s31 = sphi 0, %s29
      %s32 = sphi 0, %s30
      %s33 = sphi 0, %s31
      %s43 = sphi 0, %s45
      %s46 = sphi 0, %s43
      %s47 = sphi 0, %s46
      %s63 = sphi 0, %s47
      %s69 = sphi 0, %s71
      %s72 = sphi 0, %s69
      %s73 = sphi 0, %s72
      %s89 = sphi 0, %s73
      %s93 = sphi 0, %s93
      %s95 = sphi 0, %s93
      %s96 = sphi 0, %s95
      %s110 = sphi 0, %s96
      %s114 = sphi 0, %s114
      %s116 = sphi 0, %s114
      %s117 = sphi 0, %s116
      %s131 = sphi 0, %s117
      %s137 = sphi 0, %s139
      %s140 = sphi 0, %s137
      %s141 = sphi 0, %s140
      %s157 = sphi 0, %s141
      %s163 = sphi 0, %s165
      %s166 = sphi 0, %s163
      %s167 = sphi 0, %s166
      %s183 = sphi 0, %s167
      %s189 = sphi 0, %s191
      %s192 = sphi 0, %s189
      %s193 = sphi 0, %s192
      %s209 = sphi 0, %s193
      %s215 = sphi 0, %s217
      %s218 = sphi 0, %s215
      %s219 = sphi 0, %s218
      %s235 = sphi 0, %s219
      %s241 = sphi 0, %s243
      %s244 = sphi 0, %s241
      %s245 = sphi 0, %s244
      %s261 = sphi 0, %s245
      %s265 = sphi 0, %s265
      %s267 = sphi 0, %s265
      %s268 = sphi 0, %s267
      %s282 = sphi 0, %s268
      %s286 = sphi 0, %s286
      %s288 = sphi 0, %s286
      %s289 = sphi 0, %s288
      %s303 = sphi 0, %s289
      %s309 = sphi 0, %s311
      %s312 = sphi 0, %s309
      %s313 = sphi 0, %s312
      %s329 = sphi 0, %s313
    $region4: #{tpu_custom_call.1} parent=1 // loop_header_branch
      %24 = sbr.rel (%p22) target = $region8
    $region5: #{tpu_custom_call.1} parent=1 // loop_body
      %s26 = ssub.s32 %s21, 1
      %s27 = ssub.s32 %s21, 2
      %s34 = sadd.s32 1, %s29
      %p35 = scmp.ge.s32.totalorder %s34, 2
      %s36 = scalar_select %p35, 0, %s34
      %s37 = sadd.s32 1, %s28
      %s38 = scalar_select %p35, %s37, %s28
      %p39 = scmp.ge.s32.totalorder %s38, 1
      %s40 = scalar_select %p39, 0, %s38
      %s41 = ssub.s32 %s28, %s40
      %p42 = scmp.eq.s32.totalorder %s41, 0
      %s44 = sadd.s32 %s43, 1
      %s45 = scalar_select %p42, %s43, %s44
      %p48 = pneg %p42
      %p49 = scmp.eq.s32.totalorder %s21, 1
      %p50 = por %p48, %p49
      %p51 = scmp.ne.s32.totalorder %s43, %s46
      %p52 = scmp.eq.s32.totalorder %s21, 0
      %p53 = por %p51, %p52
      %p54 = scmp.ne.s32.totalorder %s43, %s46
      %p55 = scmp.eq.s32.totalorder %s26, 1
      %p56 = por %p54, %p55
      %p57 = scmp.ne.s32.totalorder %s46, %s47
      %p58 = scmp.eq.s32.totalorder %s26, 0
      %p59 = por %p57, %p58
      %p60 = scmp.ne.s32.totalorder %s46, %s47
      %p61 = scmp.eq.s32.totalorder %s27, 1
      %p62 = por %p60, %p61
      %p64 = scmp.ne.s32.totalorder %s47, %s63
      %p65 = scmp.eq.s32.totalorder %s27, 0
      %p66 = por %p64, %p65
      %s67 = ssub.s32 %s28, %s40
      %p68 = scmp.eq.s32.totalorder %s67, 0
      %s70 = sadd.s32 %s69, 1
      %s71 = scalar_select %p68, %s69, %s70
      %p74 = pneg %p68
      %p75 = scmp.eq.s32.totalorder %s21, 1
      %p76 = por %p74, %p75
      %p77 = scmp.ne.s32.totalorder %s69, %s72
      %p78 = scmp.eq.s32.totalorder %s21, 0
      %p79 = por %p77, %p78
      %p80 = scmp.ne.s32.totalorder %s69, %s72
      %p81 = scmp.eq.s32.totalorder %s26, 1
      %p82 = por %p80, %p81
      %p83 = scmp.ne.s32.totalorder %s72, %s73
      %p84 = scmp.eq.s32.totalorder %s26, 0
      %p85 = por %p83, %p84
      %p86 = scmp.ne.s32.totalorder %s72, %s73
      %p87 = scmp.eq.s32.totalorder %s27, 1
      %p88 = por %p86, %p87
      %p90 = scmp.ne.s32.totalorder %s73, %s89
      %p91 = scmp.eq.s32.totalorder %s27, 0
      %p92 = por %p90, %p91
      %s94 = sadd.s32 %s93, 1
      %p97 = scmp.eq.s32.totalorder %s21, 1
      %p98 = scmp.ne.s32.totalorder %s93, %s95
      %p99 = scmp.eq.s32.totalorder %s21, 0
      %p100 = por %p98, %p99
      %p101 = scmp.ne.s32.totalorder %s93, %s95
      %p102 = scmp.eq.s32.totalorder %s26, 1
      %p103 = por %p101, %p102
      %p104 = scmp.ne.s32.totalorder %s95, %s96
      %p105 = scmp.eq.s32.totalorder %s26, 0
      %p106 = por %p104, %p105
      %p107 = scmp.ne.s32.totalorder %s95, %s96
      %p108 = scmp.eq.s32.totalorder %s27, 1
      %p109 = por %p107, %p108
      %p111 = scmp.ne.s32.totalorder %s96, %s110
      %p112 = scmp.eq.s32.totalorder %s27, 0
      %p113 = por %p111, %p112
      %s115 = sadd.s32 %s114, 1
      %p118 = scmp.eq.s32.totalorder %s21, 1
      %p119 = scmp.ne.s32.totalorder %s114, %s116
      %p120 = scmp.eq.s32.totalorder %s21, 0
      %p121 = por %p119, %p120
      %p122 = scmp.ne.s32.totalorder %s114, %s116
      %p123 = scmp.eq.s32.totalorder %s26, 1
      %p124 = por %p122, %p123
      %p125 = scmp.ne.s32.totalorder %s116, %s117
      %p126 = scmp.eq.s32.totalorder %s26, 0
      %p127 = por %p125, %p126
      %p128 = scmp.ne.s32.totalorder %s116, %s117
      %p129 = scmp.eq.s32.totalorder %s27, 1
      %p130 = por %p128, %p129
      %p132 = scmp.ne.s32.totalorder %s117, %s131
      %p133 = scmp.eq.s32.totalorder %s27, 0
      %p134 = por %p132, %p133
      %s135 = ssub.s32 %s29, %s36
      %p136 = scmp.eq.s32.totalorder %s135, 0
      %s138 = sadd.s32 %s137, 1
      %s139 = scalar_select %p136, %s137, %s138
      %p142 = pneg %p136
      %p143 = scmp.eq.s32.totalorder %s21, 1
      %p144 = por %p142, %p143
      %p145 = scmp.ne.s32.totalorder %s137, %s140
      %p146 = scmp.eq.s32.totalorder %s21, 0
      %p147 = por %p145, %p146
      %p148 = scmp.ne.s32.totalorder %s137, %s140
      %p149 = scmp.eq.s32.totalorder %s26, 1
      %p150 = por %p148, %p149
      %p151 = scmp.ne.s32.totalorder %s140, %s141
      %p152 = scmp.eq.s32.totalorder %s26, 0
      %p153 = por %p151, %p152
      %p154 = scmp.ne.s32.totalorder %s140, %s141
      %p155 = scmp.eq.s32.totalorder %s27, 1
      %p156 = por %p154, %p155
      %p158 = scmp.ne.s32.totalorder %s141, %s157
      %p159 = scmp.eq.s32.totalorder %s27, 0
      %p160 = por %p158, %p159
      %s161 = ssub.s32 %s29, %s36
      %p162 = scmp.eq.s32.totalorder %s161, 0
      %s164 = sadd.s32 %s163, 1
      %s165 = scalar_select %p162, %s163, %s164
      %p168 = pneg %p162
      %p169 = scmp.eq.s32.totalorder %s21, 1
      %p170 = por %p168, %p169
      %p171 = scmp.ne.s32.totalorder %s163, %s166
      %p172 = scmp.eq.s32.totalorder %s21, 0
      %p173 = por %p171, %p172
      %p174 = scmp.ne.s32.totalorder %s163, %s166
      %p175 = scmp.eq.s32.totalorder %s26, 1
      %p176 = por %p174, %p175
      %p177 = scmp.ne.s32.totalorder %s166, %s167
      %p178 = scmp.eq.s32.totalorder %s26, 0
      %p179 = por %p177, %p178
      %p180 = scmp.ne.s32.totalorder %s166, %s167
      %p181 = scmp.eq.s32.totalorder %s27, 1
      %p182 = por %p180, %p181
      %p184 = scmp.ne.s32.totalorder %s167, %s183
      %p185 = scmp.eq.s32.totalorder %s27, 0
      %p186 = por %p184, %p185
      %s187 = ssub.s32 %s29, %s36
      %p188 = scmp.eq.s32.totalorder %s187, 0
      %s190 = sadd.s32 %s189, 1
      %s191 = scalar_select %p188, %s189, %s190
      %p194 = pneg %p188
      %p195 = scmp.eq.s32.totalorder %s21, 1
      %p196 = por %p194, %p195
      %p197 = scmp.ne.s32.totalorder %s189, %s192
      %p198 = scmp.eq.s32.totalorder %s21, 0
      %p199 = por %p197, %p198
      %p200 = scmp.ne.s32.totalorder %s189, %s192
      %p201 = scmp.eq.s32.totalorder %s26, 1
      %p202 = por %p200, %p201
      %p203 = scmp.ne.s32.totalorder %s192, %s193
      %p204 = scmp.eq.s32.totalorder %s26, 0
      %p205 = por %p203, %p204
      %p206 = scmp.ne.s32.totalorder %s192, %s193
      %p207 = scmp.eq.s32.totalorder %s27, 1
      %p208 = por %p206, %p207
      %p210 = scmp.ne.s32.totalorder %s193, %s209
      %p211 = scmp.eq.s32.totalorder %s27, 0
      %p212 = por %p210, %p211
      %s213 = ssub.s32 %s29, %s36
      %p214 = scmp.eq.s32.totalorder %s213, 0
      %s216 = sadd.s32 %s215, 1
      %s217 = scalar_select %p214, %s215, %s216
      %p220 = pneg %p214
      %p221 = scmp.eq.s32.totalorder %s21, 1
      %p222 = por %p220, %p221
      %p223 = scmp.ne.s32.totalorder %s215, %s218
      %p224 = scmp.eq.s32.totalorder %s21, 0
      %p225 = por %p223, %p224
      %p226 = scmp.ne.s32.totalorder %s215, %s218
      %p227 = scmp.eq.s32.totalorder %s26, 1
      %p228 = por %p226, %p227
      %p229 = scmp.ne.s32.totalorder %s218, %s219
      %p230 = scmp.eq.s32.totalorder %s26, 0
      %p231 = por %p229, %p230
      %p232 = scmp.ne.s32.totalorder %s218, %s219
      %p233 = scmp.eq.s32.totalorder %s27, 1
      %p234 = por %p232, %p233
      %p236 = scmp.ne.s32.totalorder %s219, %s235
      %p237 = scmp.eq.s32.totalorder %s27, 0
      %p238 = por %p236, %p237
      %s239 = ssub.s32 %s29, %s36
      %p240 = scmp.eq.s32.totalorder %s239, 0
      %s242 = sadd.s32 %s241, 1
      %s243 = scalar_select %p240, %s241, %s242
      %p246 = pneg %p240
      %p247 = scmp.eq.s32.totalorder %s21, 1
      %p248 = por %p246, %p247
      %p249 = scmp.ne.s32.totalorder %s241, %s244
      %p250 = scmp.eq.s32.totalorder %s21, 0
      %p251 = por %p249, %p250
      %p252 = scmp.ne.s32.totalorder %s241, %s244
      %p253 = scmp.eq.s32.totalorder %s26, 1
      %p254 = por %p252, %p253
      %p255 = scmp.ne.s32.totalorder %s244, %s245
      %p256 = scmp.eq.s32.totalorder %s26, 0
      %p257 = por %p255, %p256
      %p258 = scmp.ne.s32.totalorder %s244, %s245
      %p259 = scmp.eq.s32.totalorder %s27, 1
      %p260 = por %p258, %p259
      %p262 = scmp.ne.s32.totalorder %s245, %s261
      %p263 = scmp.eq.s32.totalorder %s27, 0
      %p264 = por %p262, %p263
      %s266 = sadd.s32 %s265, 1
      %p269 = scmp.eq.s32.totalorder %s21, 1
      %p270 = scmp.ne.s32.totalorder %s265, %s267
      %p271 = scmp.eq.s32.totalorder %s21, 0
      %p272 = por %p270, %p271
      %p273 = scmp.ne.s32.totalorder %s265, %s267
      %p274 = scmp.eq.s32.totalorder %s26, 1
      %p275 = por %p273, %p274
      %p276 = scmp.ne.s32.totalorder %s267, %s268
      %p277 = scmp.eq.s32.totalorder %s26, 0
      %p278 = por %p276, %p277
      %p279 = scmp.ne.s32.totalorder %s267, %s268
      %p280 = scmp.eq.s32.totalorder %s27, 1
      %p281 = por %p279, %p280
      %p283 = scmp.ne.s32.totalorder %s268, %s282
      %p284 = scmp.eq.s32.totalorder %s27, 0
      %p285 = por %p283, %p284
      %s287 = sadd.s32 %s286, 1
      %p290 = scmp.eq.s32.totalorder %s21, 1
      %p291 = scmp.ne.s32.totalorder %s286, %s288
      %p292 = scmp.eq.s32.totalorder %s21, 0
      %p293 = por %p291, %p292
      %p294 = scmp.ne.s32.totalorder %s286, %s288
      %p295 = scmp.eq.s32.totalorder %s26, 1
      %p296 = por %p294, %p295
      %p297 = scmp.ne.s32.totalorder %s288, %s289
      %p298 = scmp.eq.s32.totalorder %s26, 0
      %p299 = por %p297, %p298
      %p300 = scmp.ne.s32.totalorder %s288, %s289
      %p301 = scmp.eq.s32.totalorder %s27, 1
      %p302 = por %p300, %p301
      %p304 = scmp.ne.s32.totalorder %s289, %s303
      %p305 = scmp.eq.s32.totalorder %s27, 0
      %p306 = por %p304, %p305
      %s307 = ssub.s32 %s28, %s40
      %p308 = scmp.eq.s32.totalorder %s307, 0
      %s310 = sadd.s32 %s309, 1
      %s311 = scalar_select %p308, %s309, %s310
      %p314 = pneg %p308
      %p315 = scmp.eq.s32.totalorder %s21, 1
      %p316 = por %p314, %p315
      %p317 = scmp.ne.s32.totalorder %s309, %s312
      %p318 = scmp.eq.s32.totalorder %s21, 0
      %p319 = por %p317, %p318
      %p320 = scmp.ne.s32.totalorder %s309, %s312
      %p321 = scmp.eq.s32.totalorder %s26, 1
      %p322 = por %p320, %p321
      %p323 = scmp.ne.s32.totalorder %s312, %s313
      %p324 = scmp.eq.s32.totalorder %s26, 0
      %p325 = por %p323, %p324
      %p326 = scmp.ne.s32.totalorder %s312, %s313
      %p327 = scmp.eq.s32.totalorder %s27, 1
      %p328 = por %p326, %p327
      %p330 = scmp.ne.s32.totalorder %s313, %s329
      %p331 = scmp.eq.s32.totalorder %s27, 0
      %p332 = por %p330, %p331
      %p333 = scmp.le.s32.totalorder 1, %s21
      %p334 = scmp.lt.s32.totalorder %s21, 3
      %p335 = pnand %p333, %p334
      %p336 = pneg %p335
      // Predicated region
      $region9: #{tpu_custom_call.1} parent=5 // pred_check
        _
      $region10: #{tpu_custom_call.1} parent=5 // pred_check_branch
        %338 = sbr.rel (%p335) target = $region12
      $region11: #{tpu_custom_call.1} parent=5 // pred_region
        %s339 = ssub.s32 %s21, 1
        // Predicated region
        $region13: #{tpu_custom_call.1} parent=11 // pred_check
          %p340 = pneg %p59
        $region14: #{tpu_custom_call.1} parent=11 // pred_check_branch
          %342 = sbr.rel (%p340) target = $region16
        $region15: #{tpu_custom_call.1} parent=11 // pred_region
          %s343 = smul.u32 2, %s30
          %s345 = ssub.s32 128, 128
          %346 = vsyncadd [#allocation5], %s345
          %s347 = smul.addr %s343, 64
          %s348 = scalar_lea.hbm %s0, %s347
          %s349 = sshll.u32 [#allocation4], 4
          %s350 = int_to_ptr.vmem [resolvable:$true] %s349
          %355 = dma.hbm_to_vmem [thread:$0]  %s348, 128, %s350, [#allocation5], 64, 64, 4
        $region16: #{tpu_custom_call.1} parent=11 // pred_fallthru
          _
        // Predicated region
        $region17: #{tpu_custom_call.1} parent=11 // pred_check
          %p356 = pneg %p85
        $region18: #{tpu_custom_call.1} parent=11 // pred_check_branch
          %358 = sbr.rel (%p356) target = $region20
        $region19: #{tpu_custom_call.1} parent=11 // pred_region
          %s359 = smul.u32 2, %s30
          %s361 = ssub.s32 256, 256
          %362 = vsyncadd [#allocation8], %s361
          %s363 = smul.addr %s359, 128
          %s364 = scalar_lea.hbm %s1, %s363
          %s365 = sshll.u32 [#allocation7], 4
          %s366 = int_to_ptr.vmem [resolvable:$true] %s365
          %371 = dma.hbm_to_vmem [thread:$0]  %s364, 256, %s366, [#allocation8], 128, 128, 8
        $region20: #{tpu_custom_call.1} parent=11 // pred_fallthru
          _
        // Predicated region
        $region21: #{tpu_custom_call.1} parent=11 // pred_check
          %p372 = pneg %p106
        $region22: #{tpu_custom_call.1} parent=11 // pred_check_branch
          %374 = sbr.rel (%p372) target = $region24
        $region23: #{tpu_custom_call.1} parent=11 // pred_region
          %s376 = ssub.s32 1024, 1024
          %377 = vsyncadd [#allocation8], %s376
          %s378 = sshll.u32 [#allocation9], 4
          %s379 = int_to_ptr.vmem [resolvable:$true] %s378
          %384 = dma.hbm_to_vmem [thread:$0]  %s2, 1024, %s379, [#allocation8], 64, 64, 4
        $region24: #{tpu_custom_call.1} parent=11 // pred_fallthru
          _
        // Predicated region
        $region25: #{tpu_custom_call.1} parent=11 // pred_check
          %p385 = pneg %p127
        $region26: #{tpu_custom_call.1} parent=11 // pred_check_branch
          %387 = sbr.rel (%p385) target = $region28
        $region27: #{tpu_custom_call.1} parent=11 // pred_region
          %s389 = ssub.s32 16, 16
          %390 = vsyncadd [#allocation11], %s389
          %s392 = sshll.u32 [#allocation10], 4
          %s393 = int_to_ptr.vmem [resolvable:$true] %s392
          %395 = dma.hbm_to_vmem [thread:$0]  %s3, 16, %s393, [#allocation11]
        $region28: #{tpu_custom_call.1} parent=11 // pred_fallthru
          _
        // Predicated region
        $region29: #{tpu_custom_call.1} parent=11 // pred_check
          %p396 = pneg %p278
        $region30: #{tpu_custom_call.1} parent=11 // pred_check_branch
          %398 = sbr.rel (%p396) target = $region32
        $region31: #{tpu_custom_call.1} parent=11 // pred_region
          %s400 = ssub.s32 16, 16
          %401 = vsyncadd [#allocation8], %s400
          %s403 = sshll.u32 [#allocation17], 4
          %s404 = int_to_ptr.vmem [resolvable:$true] %s403
          %406 = dma.hbm_to_vmem [thread:$0]  %s9, 16, %s404, [#allocation8]
        $region32: #{tpu_custom_call.1} parent=11 // pred_fallthru
          _
        // Predicated region
        $region33: #{tpu_custom_call.1} parent=11 // pred_check
          %p407 = pneg %p299
        $region34: #{tpu_custom_call.1} parent=11 // pred_check_branch
          %409 = sbr.rel (%p407) target = $region36
        $region35: #{tpu_custom_call.1} parent=11 // pred_region
          %s411 = ssub.s32 16, 16
          %412 = vsyncadd [#allocation11], %s411
          %s414 = sshll.u32 [#allocation18], 4
          %s415 = int_to_ptr.vmem [resolvable:$true] %s414
          %417 = dma.hbm_to_vmem [thread:$0]  %s10, 16, %s415, [#allocation11]
        $region36: #{tpu_custom_call.1} parent=11 // pred_fallthru
          _
      $region12: #{tpu_custom_call.1} parent=5 // pred_fallthru
        _
      %p418 = scmp.lt.s32.totalorder %s21, 2
      // Predicated region
      $region37: #{tpu_custom_call.1} parent=5 // pred_check
        %p419 = pneg %p418
      $region38: #{tpu_custom_call.1} parent=5 // pred_check_branch
        %421 = sbr.rel (%p419) target = $region40
      $region39: #{tpu_custom_call.1} parent=5 // pred_region
        // Predicated region
        $region41: #{tpu_custom_call.1} parent=39 // pred_check
          %p422 = pneg %p147
        $region42: #{tpu_custom_call.1} parent=39 // pred_check_branch
          %424 = sbr.rel (%p422) target = $region44
        $region43: #{tpu_custom_call.1} parent=39 // pred_region
          %s425 = sand.u32 %s21, 1
          %s426 = scalar_lea.sflag [#allocation5], %s425
          %s427 = sand.u32 %s137, 1
          %s428 = smul.addr %s427, 192
          %s429 = scalar_lea.vmem [#allocation12], %s428
          %s431 = ssub.s32 3072, 3072
          %432 = vsyncadd %s426, %s431
          %s433 = smul.addr %s29, 48
          %s434 = smul.addr %s433, 64
          %s435 = scalar_lea.hbm %s4, %s434
          %s436 = sshll.u32 %s429, 4
          %s437 = int_to_ptr.vmem [resolvable:$true] %s436
          %442 = dma.hbm_to_vmem [thread:$0]  %s435, 3072, %s437, %s426, 192, 192, 12
        $region44: #{tpu_custom_call.1} parent=39 // pred_fallthru
          _
        // Predicated region
        $region45: #{tpu_custom_call.1} parent=39 // pred_check
          %p443 = pneg %p173
        $region46: #{tpu_custom_call.1} parent=39 // pred_check_branch
          %445 = sbr.rel (%p443) target = $region48
        $region47: #{tpu_custom_call.1} parent=39 // pred_region
          %s446 = sand.u32 %s21, 1
          %s447 = scalar_lea.sflag [#allocation5], %s446
          %s448 = sand.u32 %s163, 1
          %s449 = smul.addr %s448, 64
          %s450 = scalar_lea.vmem [#allocation13], %s449
          %s452 = ssub.s32 1024, 1024
          %453 = vsyncadd %s447, %s452
          %s454 = smul.addr %s29, 16
          %s455 = smul.addr %s454, 64
          %s456 = scalar_lea.hbm %s5, %s455
          %s457 = sshll.u32 %s450, 4
          %s458 = int_to_ptr.vmem [resolvable:$true] %s457
          %463 = dma.hbm_to_vmem [thread:$0]  %s456, 1024, %s458, %s447, 64, 64, 4
        $region48: #{tpu_custom_call.1} parent=39 // pred_fallthru
          _
        // Predicated region
        $region49: #{tpu_custom_call.1} parent=39 // pred_check
          %p464 = pneg %p199
        $region50: #{tpu_custom_call.1} parent=39 // pred_check_branch
          %466 = sbr.rel (%p464) target = $region52
        $region51: #{tpu_custom_call.1} parent=39 // pred_region
          %s467 = sand.u32 %s21, 1
          %s468 = scalar_lea.sflag [#allocation5], %s467
          %s469 = sand.u32 %s189, 1
          %s470 = smul.addr %s469, 256
          %s471 = scalar_lea.vmem [#allocation14], %s470
          %s473 = ssub.s32 4096, 4096
          %474 = vsyncadd %s468, %s473
          %s475 = smul.addr %s29, 64
          %s476 = smul.addr %s475, 64
          %s477 = scalar_lea.hbm %s6, %s476
          %s478 = sshll.u32 %s471, 4
          %s479 = int_to_ptr.vmem [resolvable:$true] %s478
          %484 = dma.hbm_to_vmem [thread:$0]  %s477, 4096, %s479, %s468, 256, 256, 16
        $region52: #{tpu_custom_call.1} parent=39 // pred_fallthru
          _
        // Predicated region
        $region53: #{tpu_custom_call.1} parent=39 // pred_check
          %p485 = pneg %p225
        $region54: #{tpu_custom_call.1} parent=39 // pred_check_branch
          %487 = sbr.rel (%p485) target = $region56
        $region55: #{tpu_custom_call.1} parent=39 // pred_region
          %s488 = sand.u32 %s21, 1
          %s489 = scalar_lea.sflag [#allocation5], %s488
          %s490 = sand.u32 %s215, 1
          %s491 = smul.addr %s490, 256
          %s492 = scalar_lea.vmem [#allocation15], %s491
          %s494 = ssub.s32 4096, 4096
          %495 = vsyncadd %s489, %s494
          %s496 = smul.addr %s29, 64
          %s497 = smul.addr %s496, 64
          %s498 = scalar_lea.hbm %s7, %s497
          %s499 = sshll.u32 %s492, 4
          %s500 = int_to_ptr.vmem [resolvable:$true] %s499
          %505 = dma.hbm_to_vmem [thread:$0]  %s498, 4096, %s500, %s489, 64, 64, 4
        $region56: #{tpu_custom_call.1} parent=39 // pred_fallthru
          _
        // Predicated region
        $region57: #{tpu_custom_call.1} parent=39 // pred_check
          %p506 = pneg %p251
        $region58: #{tpu_custom_call.1} parent=39 // pred_check_branch
          %508 = sbr.rel (%p506) target = $region60
        $region59: #{tpu_custom_call.1} parent=39 // pred_region
          %s509 = sand.u32 %s21, 1
          %s510 = scalar_lea.sflag [#allocation5], %s509
          %s511 = sand.u32 %s241, 1
          %s512 = smul.addr %s511, 32
          %s513 = scalar_lea.vmem [#allocation16], %s512
          %s515 = ssub.s32 512, 512
          %516 = vsyncadd %s510, %s515
          %s517 = smul.addr %s29, 4
          %s518 = smul.addr %s517, 128
          %s519 = scalar_lea.hbm %s8, %s518
          %s521 = sshll.u32 %s513, 4
          %s522 = int_to_ptr.vmem [resolvable:$true] %s521
          %524 = dma.hbm_to_vmem [thread:$0]  %s519, 512, %s522, %s510
        $region60: #{tpu_custom_call.1} parent=39 // pred_fallthru
          _
      $region40: #{tpu_custom_call.1} parent=5 // pred_fallthru
        _
      %p525 = scmp.le.s32.totalorder 1, %s21
      %p526 = scmp.lt.s32.totalorder %s21, 3
      %p527 = pnand %p525, %p526
      %p528 = pneg %p527
      // Predicated region
      $region61: #{tpu_custom_call.1} parent=5 // pred_check
        _
      $region62: #{tpu_custom_call.1} parent=5 // pred_check_branch
        %530 = sbr.rel (%p527) target = $region64
      $region63: #{tpu_custom_call.1} parent=5 // pred_region
        %s531 = ssub.s32 %s21, 1
        // Predicated region
        $region65: #{tpu_custom_call.1} parent=63 // pred_check
          %p532 = pneg %p59
        $region66: #{tpu_custom_call.1} parent=63 // pred_check_branch
          %534 = sbr.rel (%p532) target = $region68
        $region67: #{tpu_custom_call.1} parent=63 // pred_region
          %535 = dma.done [#allocation5], 128
        $region68: #{tpu_custom_call.1} parent=63 // pred_fallthru
          _
        // Predicated region
        $region69: #{tpu_custom_call.1} parent=63 // pred_check
          %p536 = pneg %p85
        $region70: #{tpu_custom_call.1} parent=63 // pred_check_branch
          %538 = sbr.rel (%p536) target = $region72
        $region71: #{tpu_custom_call.1} parent=63 // pred_region
          %539 = dma.done [#allocation8], 256
        $region72: #{tpu_custom_call.1} parent=63 // pred_fallthru
          _
        // Predicated region
        $region73: #{tpu_custom_call.1} parent=63 // pred_check
          %p540 = pneg %p106
        $region74: #{tpu_custom_call.1} parent=63 // pred_check_branch
          %542 = sbr.rel (%p540) target = $region76
        $region75: #{tpu_custom_call.1} parent=63 // pred_region
          %543 = dma.done [#allocation8], 1024
        $region76: #{tpu_custom_call.1} parent=63 // pred_fallthru
          _
        // Predicated region
        $region77: #{tpu_custom_call.1} parent=63 // pred_check
          %p544 = pneg %p127
        $region78: #{tpu_custom_call.1} parent=63 // pred_check_branch
          %546 = sbr.rel (%p544) target = $region80
        $region79: #{tpu_custom_call.1} parent=63 // pred_region
          %547 = dma.done [#allocation11], 16
        $region80: #{tpu_custom_call.1} parent=63 // pred_fallthru
          _
        %s548 = sand.u32 %s26, 1
        %s549 = scalar_lea.sflag [#allocation5], %s548
        %s550 = sand.u32 %s140, 1
        %s551 = smul.addr %s550, 192
        %s552 = scalar_lea.vmem [#allocation12], %s551
        // Predicated region
        $region81: #{tpu_custom_call.1} parent=63 // pred_check
          %p553 = pneg %p153
        $region82: #{tpu_custom_call.1} parent=63 // pred_check_branch
          %555 = sbr.rel (%p553) target = $region84
        $region83: #{tpu_custom_call.1} parent=63 // pred_region
          %556 = dma.done %s549, 3072
        $region84: #{tpu_custom_call.1} parent=63 // pred_fallthru
          _
        %s557 = sand.u32 %s26, 1
        %s558 = scalar_lea.sflag [#allocation5], %s557
        %s559 = sand.u32 %s166, 1
        %s560 = smul.addr %s559, 64
        %s561 = scalar_lea.vmem [#allocation13], %s560
        // Predicated region
        $region85: #{tpu_custom_call.1} parent=63 // pred_check
          %p562 = pneg %p179
        $region86: #{tpu_custom_call.1} parent=63 // pred_check_branch
          %564 = sbr.rel (%p562) target = $region88
        $region87: #{tpu_custom_call.1} parent=63 // pred_region
          %565 = dma.done %s558, 1024
        $region88: #{tpu_custom_call.1} parent=63 // pred_fallthru
          _
        %s566 = sand.u32 %s26, 1
        %s567 = scalar_lea.sflag [#allocation5], %s566
        %s568 = sand.u32 %s192, 1
        %s569 = smul.addr %s568, 256
        %s570 = scalar_lea.vmem [#allocation14], %s569
        // Predicated region
        $region89: #{tpu_custom_call.1} parent=63 // pred_check
          %p571 = pneg %p205
        $region90: #{tpu_custom_call.1} parent=63 // pred_check_branch
          %573 = sbr.rel (%p571) target = $region92
        $region91: #{tpu_custom_call.1} parent=63 // pred_region
          %574 = dma.done %s567, 4096
        $region92: #{tpu_custom_call.1} parent=63 // pred_fallthru
          _
        %s575 = sand.u32 %s26, 1
        %s576 = scalar_lea.sflag [#allocation5], %s575
        %s577 = sand.u32 %s218, 1
        %s578 = smul.addr %s577, 256
        %s579 = scalar_lea.vmem [#allocation15], %s578
        // Predicated region
        $region93: #{tpu_custom_call.1} parent=63 // pred_check
          %p580 = pneg %p231
        $region94: #{tpu_custom_call.1} parent=63 // pred_check_branch
          %582 = sbr.rel (%p580) target = $region96
        $region95: #{tpu_custom_call.1} parent=63 // pred_region
          %583 = dma.done %s576, 4096
        $region96: #{tpu_custom_call.1} parent=63 // pred_fallthru
          _
        %s584 = sand.u32 %s26, 1
        %s585 = scalar_lea.sflag [#allocation5], %s584
        %s586 = sand.u32 %s244, 1
        %s587 = smul.addr %s586, 32
        %s588 = scalar_lea.vmem [#allocation16], %s587
        // Predicated region
        $region97: #{tpu_custom_call.1} parent=63 // pred_check
          %p589 = pneg %p257
        $region98: #{tpu_custom_call.1} parent=63 // pred_check_branch
          %591 = sbr.rel (%p589) target = $region100
        $region99: #{tpu_custom_call.1} parent=63 // pred_region
          %592 = dma.done %s585, 512
        $region100: #{tpu_custom_call.1} parent=63 // pred_fallthru
          _
        // Predicated region
        $region101: #{tpu_custom_call.1} parent=63 // pred_check
          %p593 = pneg %p278
        $region102: #{tpu_custom_call.1} parent=63 // pred_check_branch
          %595 = sbr.rel (%p593) target = $region104
        $region103: #{tpu_custom_call.1} parent=63 // pred_region
          %596 = dma.done [#allocation8], 16
        $region104: #{tpu_custom_call.1} parent=63 // pred_fallthru
          _
        // Predicated region
        $region105: #{tpu_custom_call.1} parent=63 // pred_check
          %p597 = pneg %p299
        $region106: #{tpu_custom_call.1} parent=63 // pred_check_branch
          %599 = sbr.rel (%p597) target = $region108
        $region107: #{tpu_custom_call.1} parent=63 // pred_region
          %600 = dma.done [#allocation11], 16
        $region108: #{tpu_custom_call.1} parent=63 // pred_fallthru
          _
        %p601 = pneg %p59
        %p602 = pneg %p56
        %p603 = pneg %p85
        %p604 = pneg %p82
        %p605 = pneg %p106
        %p606 = pneg %p103
        %p607 = pneg %p127
        %p608 = pneg %p124
        %s609 = sand.u32 %s26, 1
        %s610 = scalar_lea.sflag [#allocation5], %s609
        %s611 = sand.u32 %s140, 1
        %s612 = smul.addr %s611, 192
        %s613 = scalar_lea.vmem [#allocation12], %s612
        %p614 = pneg %p153
        %p615 = pneg %p150
        %s616 = sand.u32 %s26, 1
        %s617 = scalar_lea.sflag [#allocation5], %s616
        %s618 = sand.u32 %s166, 1
        %s619 = smul.addr %s618, 64
        %s620 = scalar_lea.vmem [#allocation13], %s619
        %p621 = pneg %p179
        %p622 = pneg %p176
        %s623 = sand.u32 %s26, 1
        %s624 = scalar_lea.sflag [#allocation5], %s623
        %s625 = sand.u32 %s192, 1
        %s626 = smul.addr %s625, 256
        %s627 = scalar_lea.vmem [#allocation14], %s626
        %p628 = pneg %p205
        %p629 = pneg %p202
        %s630 = sand.u32 %s26, 1
        %s631 = scalar_lea.sflag [#allocation5], %s630
        %s632 = sand.u32 %s218, 1
        %s633 = smul.addr %s632, 256
        %s634 = scalar_lea.vmem [#allocation15], %s633
        %p635 = pneg %p231
        %p636 = pneg %p228
        %s637 = sand.u32 %s26, 1
        %s638 = scalar_lea.sflag [#allocation5], %s637
        %s639 = sand.u32 %s244, 1
        %s640 = smul.addr %s639, 32
        %s641 = scalar_lea.vmem [#allocation16], %s640
        %p642 = pneg %p257
        %p643 = pneg %p254
        %p644 = pneg %p278
        %p645 = pneg %p275
        %p646 = pneg %p299
        %p647 = pneg %p296
        %p648 = pneg %p325
        %p649 = pneg %p322
        %s650 = smul.u32 2, %s30
        %s651 = smul.u32 2, %s30
        %s652 = smul.u32 2, %s30
        %p654 = scmp.eq.s32.totalorder %s31, 0
        // Predicated region
        $region109: #{tpu_custom_call.1} parent=63 // pred_check
          %p655 = pneg %p654
        $region110: #{tpu_custom_call.1} parent=63 // pred_check_branch
          %657 = sbr.rel (%p655) target = $region112
        $region111: #{tpu_custom_call.1} parent=63 // pred_region
          %v658 = vld [vmem:[#allocation4] sm:$0xf]
          %v659 = vld [vmem:[#allocation4 + $0x4] sm:$0xf]
          %v660 = vld [vmem:[#allocation9] sm:$0xf]
          %v661 = vld [vmem:[#allocation9 + $0x4] sm:$0xf]
          %v662 = vld [vmem:[#allocation9 + $0x8] sm:$0xf]
          %v663 = vld [vmem:[#allocation9 + $0xc] sm:$0xf]
          %v664 = vld [vmem:[#allocation9 + $0x10] sm:$0xf]
          %v665 = vld [vmem:[#allocation9 + $0x14] sm:$0xf]
          %v666 = vld [vmem:[#allocation9 + $0x18] sm:$0xf]
          %v667 = vld [vmem:[#allocation9 + $0x1c] sm:$0xf]
          %v668 = vld [vmem:[#allocation9 + $0x20] sm:$0xf]
          %v669 = vld [vmem:[#allocation9 + $0x24] sm:$0xf]
          %v670 = vld [vmem:[#allocation9 + $0x28] sm:$0xf]
          %v671 = vld [vmem:[#allocation9 + $0x2c] sm:$0xf]
          %v672 = vld [vmem:[#allocation9 + $0x30] sm:$0xf]
          %v673 = vld [vmem:[#allocation9 + $0x34] sm:$0xf]
          %v674 = vld [vmem:[#allocation9 + $0x38] sm:$0xf]
          %v675 = vld [vmem:[#allocation9 + $0x3c] sm:$0xf]
          %v676 = vld [vmem:[#allocation10] sm:$0x1]
          %v678 = vlaneseq
          %v679 = vshrl.u32 %v678, 7
          %v680 = vsub.s32 0, %v679
          %v681 = vrot.slane %v676, %v680
          %v685 = vunpack.c.l.b16 %v658
          %v686 = vunpack.c.l.b16 %v659
          %v687 = vpack.c.b16 %v686, %v685
          %v705 = vunpack.c.l.b16 %v660
          %v706 = vunpack.c.l.b16 %v661
          %v707 = vunpack.c.l.b16 %v662
          %v708 = vunpack.c.l.b16 %v663
          %v709 = vunpack.c.l.b16 %v664
          %v710 = vunpack.c.l.b16 %v665
          %v711 = vunpack.c.l.b16 %v666
          %v712 = vunpack.c.l.b16 %v667
          %v713 = vunpack.c.l.b16 %v668
          %v714 = vunpack.c.l.b16 %v669
          %v715 = vunpack.c.l.b16 %v670
          %v716 = vunpack.c.l.b16 %v671
          %v717 = vunpack.c.l.b16 %v672
          %v718 = vunpack.c.l.b16 %v673
          %v719 = vunpack.c.l.b16 %v674
          %v720 = vunpack.c.l.b16 %v675
          %v721 = vpack.c.b16 %v706, %v705
          %v722 = vpack.c.b16 %v708, %v707
          %v723 = vpack.c.b16 %v710, %v709
          %v724 = vpack.c.b16 %v712, %v711
          %v725 = vpack.c.b16 %v714, %v713
          %v726 = vpack.c.b16 %v716, %v715
          %v727 = vpack.c.b16 %v718, %v717
          %v728 = vpack.c.b16 %v720, %v719
          %737 = vmatprep.subr.bf16.mxu0 0
          %738 = vmatpush1.bf16.msra.mxu0 %v721
          %739 = vmatprep.subr.bf16.mxu0 0
          %740 = vmatpush1.bf16.msra.mxu0 %v722
          %741 = vmatprep.subr.bf16.mxu0 0
          %742 = vmatpush1.bf16.msra.mxu0 %v723
          %743 = vmatprep.subr.bf16.mxu0 0
          %744 = vmatpush1.bf16.msra.mxu0 %v724
          %745 = vmatprep.subr.bf16.mxu0 0
          %746 = vmatpush1.bf16.msra.mxu0 %v725
          %747 = vmatprep.subr.bf16.mxu0 0
          %748 = vmatpush1.bf16.msra.mxu0 %v726
          %749 = vmatprep.subr.bf16.mxu0 0
          %750 = vmatpush1.bf16.msra.mxu0 %v727
          %751 = vmatprep.subr.bf16.mxu0 0
          %752 = vmatpush1.bf16.msra.mxu0 %v728
          %753 = vmatprep.subr.bf16.mxu0 0
          %754 = vmatpush1.bf16.msra.mxu0 0
          %755 = vmatprep.subr.bf16.mxu0 0
          %756 = vmatpush1.bf16.msra.mxu0 0
          %757 = vmatprep.subr.bf16.mxu0 0
          %758 = vmatpush1.bf16.msra.mxu0 0
          %759 = vmatprep.subr.bf16.mxu0 0
          %760 = vmatpush1.bf16.msra.mxu0 0
          %761 = vmatprep.subr.bf16.mxu0 0
          %762 = vmatpush1.bf16.msra.mxu0 0
          %763 = vmatprep.subr.bf16.mxu0 0
          %764 = vmatpush1.bf16.msra.mxu0 0
          %765 = vmatprep.subr.bf16.mxu0 0
          %766 = vmatpush1.bf16.msra.mxu0 0
          %767 = vmatprep.subr.bf16.mxu0 0
          %768 = vmatpush1.bf16.msra.mxu0 0
          %769 = vmatprep.mubr.bf16.mxu0 0
          %770 = vmatmul.mubr.bf16.gmra.mrb[0].mxu0 %v687
          %v771 = vpop.f32.mrb[0].mxu0
          %v772 = vadd.f32 %v681, %v771
          %v773 = vpop.f32.mrb[0].mxu0
          %v774 = vpop.f32.mrb[0].mxu0
          %v775 = vadd.f32 %v681, %v774
          %v776 = vpop.f32.mrb[0].mxu0
          %777 = vdwg.mxu0
          %v778 = vld [vmem:[#allocation7] sm:$0xff]
          %v779 = vld [vmem:[#allocation7 + $0x8] sm:$0xff]
          %v780 = vadd.f32 %v772, %v778
          %v781 = vadd.f32 %v775, %v779
          %782 = vst [vmem:[#allocation2] sm:$0xff] %v780
          %783 = vst [vmem:[#allocation2 + $0x8] sm:$0xff] %v781
        $region112: #{tpu_custom_call.1} parent=63 // pred_fallthru
          _
        %v784 = vld [vmem:[#allocation2] sm:$0xff]
        %v785 = vld [vmem:[#allocation2 + $0x8] sm:$0xff]
        %v786 = vld [vmem:[%s588] sm:$0xff]
        %v787 = vld [vmem:[%s588 + $0x8] sm:$0xff]
        %v788 = vld [vmem:[%s588 + $0x10] sm:$0xff]
        %v789 = vld [vmem:[%s588 + $0x18] sm:$0xff]
        %v790 = vpack.c.bf16 %v785, %v784
        %v791 = vld [vmem:[%s552] sm:$0xff]
        %v792 = vld [vmem:[%s552 + $0x8] sm:$0xf]
        %v793 = vld [vmem:[%s552 + $0xc] sm:$0xff]
        %v794 = vld [vmem:[%s552 + $0x14] sm:$0xf]
        %v795 = vld [vmem:[%s552 + $0x18] sm:$0xff]
        %v796 = vld [vmem:[%s552 + $0x20] sm:$0xf]
        %v797 = vld [vmem:[%s552 + $0x24] sm:$0xff]
        %v798 = vld [vmem:[%s552 + $0x2c] sm:$0xf]
        %v799 = vld [vmem:[%s552 + $0x30] sm:$0xff]
        %v800 = vld [vmem:[%s552 + $0x38] sm:$0xf]
        %v801 = vld [vmem:[%s552 + $0x3c] sm:$0xff]
        %v802 = vld [vmem:[%s552 + $0x44] sm:$0xf]
        %v803 = vld [vmem:[%s552 + $0x48] sm:$0xff]
        %v804 = vld [vmem:[%s552 + $0x50] sm:$0xf]
        %v805 = vld [vmem:[%s552 + $0x54] sm:$0xff]
        %v806 = vld [vmem:[%s552 + $0x5c] sm:$0xf]
        %v807 = vld [vmem:[%s552 + $0x60] sm:$0xff]
        %v808 = vld [vmem:[%s552 + $0x68] sm:$0xf]
        %v809 = vld [vmem:[%s552 + $0x6c] sm:$0xff]
        %v810 = vld [vmem:[%s552 + $0x74] sm:$0xf]
        %v811 = vld [vmem:[%s552 + $0x78] sm:$0xff]
        %v812 = vld [vmem:[%s552 + $0x80] sm:$0xf]
        %v813 = vld [vmem:[%s552 + $0x84] sm:$0xff]
        %v814 = vld [vmem:[%s552 + $0x8c] sm:$0xf]
        %v815 = vld [vmem:[%s552 + $0x90] sm:$0xff]
        %v816 = vld [vmem:[%s552 + $0x98] sm:$0xf]
        %v817 = vld [vmem:[%s552 + $0x9c] sm:$0xff]
        %v818 = vld [vmem:[%s552 + $0xa4] sm:$0xf]
        %v819 = vld [vmem:[%s552 + $0xa8] sm:$0xff]
        %v820 = vld [vmem:[%s552 + $0xb0] sm:$0xf]
        %v821 = vld [vmem:[%s552 + $0xb4] sm:$0xff]
        %v822 = vld [vmem:[%s552 + $0xbc] sm:$0xf]
        %v823 = vlaneseq
        %v824 = vshrl.u32 %v823, 7
        %v825 = vsub.s32 0, %v824
        %v826 = vrot.slane %v786, %v825
        %v827 = vlaneseq
        %v828 = vshrl.u32 %v827, 7
        %v829 = vsub.s32 0, %v828
        %v830 = vrot.slane %v787, %v829
        %v831 = vlaneseq
        %v832 = vshrl.u32 %v831, 7
        %v833 = vsub.s32 0, %v832
        %v834 = vrot.slane %v788, %v833
        %v867 = vunpack.c.l.b16 %v791
        %v868 = vunpack.c.h.b16 %v791
        %v869 = vunpack.c.l.b16 %v792
        %v870 = vunpack.c.l.b16 %v793
        %v871 = vunpack.c.h.b16 %v793
        %v872 = vunpack.c.l.b16 %v794
        %v873 = vunpack.c.l.b16 %v795
        %v874 = vunpack.c.h.b16 %v795
        %v875 = vunpack.c.l.b16 %v796
        %v876 = vunpack.c.l.b16 %v797
        %v877 = vunpack.c.h.b16 %v797
        %v878 = vunpack.c.l.b16 %v798
        %v879 = vunpack.c.l.b16 %v799
        %v880 = vunpack.c.h.b16 %v799
        %v881 = vunpack.c.l.b16 %v800
        %v882 = vunpack.c.l.b16 %v801
        %v883 = vunpack.c.h.b16 %v801
        %v884 = vunpack.c.l.b16 %v802
        %v885 = vunpack.c.l.b16 %v803
        %v886 = vunpack.c.h.b16 %v803
        %v887 = vunpack.c.l.b16 %v804
        %v888 = vunpack.c.l.b16 %v805
        %v889 = vunpack.c.h.b16 %v805
        %v890 = vunpack.c.l.b16 %v806
        %v891 = vunpack.c.l.b16 %v807
        %v892 = vunpack.c.h.b16 %v807
        %v893 = vunpack.c.l.b16 %v808
        %v894 = vunpack.c.l.b16 %v809
        %v895 = vunpack.c.h.b16 %v809
        %v896 = vunpack.c.l.b16 %v810
        %v897 = vunpack.c.l.b16 %v811
        %v898 = vunpack.c.h.b16 %v811
        %v899 = vunpack.c.l.b16 %v812
        %v900 = vunpack.c.l.b16 %v813
        %v901 = vunpack.c.h.b16 %v813
        %v902 = vunpack.c.l.b16 %v814
        %v903 = vunpack.c.l.b16 %v815
        %v904 = vunpack.c.h.b16 %v815
        %v905 = vunpack.c.l.b16 %v816
        %v906 = vunpack.c.l.b16 %v817
        %v907 = vunpack.c.h.b16 %v817
        %v908 = vunpack.c.l.b16 %v818
        %v909 = vunpack.c.l.b16 %v819
        %v910 = vunpack.c.h.b16 %v819
        %v911 = vunpack.c.l.b16 %v820
        %v912 = vunpack.c.l.b16 %v821
        %v913 = vunpack.c.h.b16 %v821
        %v914 = vunpack.c.l.b16 %v822
        %v915 = vpack.c.b16 %v870, %v867
        %v916 = vpack.c.b16 %v871, %v868
        %v917 = vpack.c.b16 %v872, %v869
        %v918 = vpack.c.b16 %v876, %v873
        %v919 = vpack.c.b16 %v877, %v874
        %v920 = vpack.c.b16 %v878, %v875
        %v921 = vpack.c.b16 %v882, %v879
        %v922 = vpack.c.b16 %v883, %v880
        %v923 = vpack.c.b16 %v884, %v881
        %v924 = vpack.c.b16 %v888, %v885
        %v925 = vpack.c.b16 %v889, %v886
        %v926 = vpack.c.b16 %v890, %v887
        %v927 = vpack.c.b16 %v894, %v891
        %v928 = vpack.c.b16 %v895, %v892
        %v929 = vpack.c.b16 %v896, %v893
        %v930 = vpack.c.b16 %v900, %v897
        %v931 = vpack.c.b16 %v901, %v898
        %v932 = vpack.c.b16 %v902, %v899
        %v933 = vpack.c.b16 %v906, %v903
        %v934 = vpack.c.b16 %v907, %v904
        %v935 = vpack.c.b16 %v908, %v905
        %v936 = vpack.c.b16 %v912, %v909
        %v937 = vpack.c.b16 %v913, %v910
        %v938 = vpack.c.b16 %v914, %v911
        %963 = vmatprep.subr.bf16.mxu0 %v916
        %964 = vmatpush1.bf16.msra.mxu0 %v915
        %965 = vmatprep.subr.bf16.mxu0 %v919
        %966 = vmatpush1.bf16.msra.mxu0 %v918
        %967 = vmatprep.subr.bf16.mxu0 %v922
        %968 = vmatpush1.bf16.msra.mxu0 %v921
        %969 = vmatprep.subr.bf16.mxu0 %v925
        %970 = vmatpush1.bf16.msra.mxu0 %v924
        %971 = vmatprep.subr.bf16.mxu0 %v928
        %972 = vmatpush1.bf16.msra.mxu0 %v927
        %973 = vmatprep.subr.bf16.mxu0 %v931
        %974 = vmatpush1.bf16.msra.mxu0 %v930
        %975 = vmatprep.subr.bf16.mxu0 %v934
        %976 = vmatpush1.bf16.msra.mxu0 %v933
        %977 = vmatprep.subr.bf16.mxu0 %v937
        %978 = vmatpush1.bf16.msra.mxu0 %v936
        %979 = vmatprep.subr.bf16.mxu0 0
        %980 = vmatpush1.bf16.msra.mxu0 0
        %981 = vmatprep.subr.bf16.mxu0 0
        %982 = vmatpush1.bf16.msra.mxu0 0
        %983 = vmatprep.subr.bf16.mxu0 0
        %984 = vmatpush1.bf16.msra.mxu0 0
        %985 = vmatprep.subr.bf16.mxu0 0
        %986 = vmatpush1.bf16.msra.mxu0 0
        %987 = vmatprep.subr.bf16.mxu0 0
        %988 = vmatpush1.bf16.msra.mxu0 0
        %989 = vmatprep.subr.bf16.mxu0 0
        %990 = vmatpush1.bf16.msra.mxu0 0
        %991 = vmatprep.subr.bf16.mxu0 0
        %992 = vmatpush1.bf16.msra.mxu0 0
        %993 = vmatprep.subr.bf16.mxu0 0
        %994 = vmatpush1.bf16.msra.mxu0 0
        %995 = vmatprep.mubr.bf16.mxu0 0
        %996 = vmatmul.mubr.bf16.gmra.mrb[0].mxu0 %v790
        %v997 = vpop.f32.mrb[0].mxu0
        %v998 = vadd.f32 %v826, %v997
        %v999 = vpop.f32.mrb[0].mxu0
        %v1000 = vadd.f32 %v830, %v999
        %v1001 = vpop.f32.mrb[0].mxu0
        %v1002 = vadd.f32 %v826, %v1001
        %v1003 = vpop.f32.mrb[0].mxu0
        %v1004 = vadd.f32 %v830, %v1003
        %1005 = vdwg.mxu0
        %1006 = vmatprep.subr.bf16.mxu0 0
        %1007 = vmatpush1.bf16.msra.mxu0 %v917
        %1008 = vmatprep.subr.bf16.mxu0 0
        %1009 = vmatpush1.bf16.msra.mxu0 %v920
        %1010 = vmatprep.subr.bf16.mxu0 0
        %1011 = vmatpush1.bf16.msra.mxu0 %v923
        %1012 = vmatprep.subr.bf16.mxu0 0
        %1013 = vmatpush1.bf16.msra.mxu0 %v926
        %1014 = vmatprep.subr.bf16.mxu0 0
        %1015 = vmatpush1.bf16.msra.mxu0 %v929
        %1016 = vmatprep.subr.bf16.mxu0 0
        %1017 = vmatpush1.bf16.msra.mxu0 %v932
        %1018 = vmatprep.subr.bf16.mxu0 0
        %1019 = vmatpush1.bf16.msra.mxu0 %v935
        %1020 = vmatprep.subr.bf16.mxu0 0
        %1021 = vmatpush1.bf16.msra.mxu0 %v938
        %1022 = vmatprep.subr.bf16.mxu0 0
        %1023 = vmatpush1.bf16.msra.mxu0 0
        %1024 = vmatprep.subr.bf16.mxu0 0
        %1025 = vmatpush1.bf16.msra.mxu0 0
        %1026 = vmatprep.subr.bf16.mxu0 0
        %1027 = vmatpush1.bf16.msra.mxu0 0
        %1028 = vmatprep.subr.bf16.mxu0 0
        %1029 = vmatpush1.bf16.msra.mxu0 0
        %1030 = vmatprep.subr.bf16.mxu0 0
        %1031 = vmatpush1.bf16.msra.mxu0 0
        %1032 = vmatprep.subr.bf16.mxu0 0
        %1033 = vmatpush1.bf16.msra.mxu0 0
        %1034 = vmatprep.subr.bf16.mxu0 0
        %1035 = vmatpush1.bf16.msra.mxu0 0
        %1036 = vmatprep.subr.bf16.mxu0 0
        %1037 = vmatpush1.bf16.msra.mxu0 0
        %1038 = vmatprep.mubr.bf16.mxu0 0
        %1039 = vmatmul.mubr.bf16.gmra.mrb[0].mxu0 %v790
        %v1040 = vpop.f32.mrb[0].mxu0
        %v1041 = vadd.f32 %v834, %v1040
        %v1042 = vpop.f32.mrb[0].mxu0
        %v1043 = vpop.f32.mrb[0].mxu0
        %v1044 = vadd.f32 %v834, %v1043
        %v1045 = vpop.f32.mrb[0].mxu0
        %1046 = vdwg.mxu0
        %v1047 = vpack.c.bf16 %v998, %v998
        %v1048 = vpack.c.bf16 %v1002, %v1002
        %v1049 = vpack.c.bf16 %v1000, %v1000
        %v1050 = vpack.c.bf16 %v1004, %v1004
        %v1051 = vpack.c.bf16 %v1041, %v1041
        %v1052 = vpack.c.bf16 %v1044, %v1044
        %vm1053 = vcmask 261120
        %v1055 = vsel %vm1053, %v1047, 0
        %v1058 = vsel %vm1053, %v1049, 0
        %1060 = vmatprep.subr.bf16.mxu0 0
        %1061 = vmatpush1.bf16.xpose.msra.mxu0 %v1058
        %1062 = vmatprep.subr.bf16.mxu0 0
        %1063 = vmatpush1.bf16.xpose.msra.mxu0 0
        %1064 = vmatprep.subr.bf16.mxu0 0
        %1065 = vmatpush1.bf16.xpose.msra.mxu0 0
        %1066 = vmatprep.subr.bf16.mxu0 0
        %1067 = vmatpush1.bf16.xpose.msra.mxu0 0
        %1068 = vmatprep.subr.bf16.mxu0 0
        %1069 = vmatpush1.bf16.xpose.msra.mxu0 0
        %1070 = vmatprep.subr.bf16.mxu0 0
        %1071 = vmatpush1.bf16.xpose.msra.mxu0 0
        %1072 = vmatprep.subr.bf16.mxu0 0
        %1073 = vmatpush1.bf16.xpose.msra.mxu0 0
        %1074 = vmatprep.subr.bf16.mxu0 0
        %1075 = vmatpush1.bf16.xpose.msra.mxu0 0
        %1076 = vmatprep.subr.bf16.mxu0 0
        %1077 = vmatpush1.bf16.xpose.msra.mxu0 0
        %1078 = vmatprep.subr.bf16.mxu0 0
        %1079 = vmatpush1.bf16.xpose.msra.mxu0 0
        %1080 = vmatprep.subr.bf16.mxu0 0
        %1081 = vmatpush1.bf16.xpose.msra.mxu0 0
        %1082 = vmatprep.subr.bf16.mxu0 0
        %1083 = vmatpush1.bf16.xpose.msra.mxu0 0
        %1084 = vmatprep.subr.bf16.mxu0 0
        %1085 = vmatpush1.bf16.xpose.msra.mxu0 0
        %1086 = vmatprep.subr.bf16.mxu0 0
        %1087 = vmatpush1.bf16.xpose.msra.mxu0 0
        %1088 = vmatprep.subr.bf16.mxu0 0
        %1089 = vmatpush1.bf16.xpose.msra.mxu0 0
        %1090 = vmatprep.subr.bf16.mxu0 0
        %1091 = vmatpush1.bf16.xpose.msra.mxu0 0
        %1092 = vmatprep.mubr.bf16.mxu0 0
        %1093 = vmatmul.mubr.bf16.gmra.mrb[0].mxu0 %v1055
        %v1094 = vpop.f32.mrb[0].mxu0
        %v1095 = vadd.f32 0.0, %v1094
        %v1096 = vpop.f32.mrb[0].mxu0
        %v1097 = vpop.f32.mrb[0].mxu0
        %v1098 = vpop.f32.mrb[0].mxu0
        %1099 = vdwg.mxu0
        %v1101 = vsel %vm1053, %v1048, 0
        %v1104 = vsel %vm1053, %v1050, 0
        %1106 = vmatprep.subr.bf16.mxu0 0
        %1107 = vmatpush1.bf16.xpose.msra.mxu0 %v1104
        %1108 = vmatprep.subr.bf16.mxu0 0
        %1109 = vmatpush1.bf16.xpose.msra.mxu0 0
        %1110 = vmatprep.subr.bf16.mxu0 0
        %1111 = vmatpush1.bf16.xpose.msra.mxu0 0
        %1112 = vmatprep.subr.bf16.mxu0 0
        %1113 = vmatpush1.bf16.xpose.msra.mxu0 0
        %1114 = vmatprep.subr.bf16.mxu0 0
        %1115 = vmatpush1.bf16.xpose.msra.mxu0 0
        %1116 = vmatprep.subr.bf16.mxu0 0
        %1117 = vmatpush1.bf16.xpose.msra.mxu0 0
        %1118 = vmatprep.subr.bf16.mxu0 0
        %1119 = vmatpush1.bf16.xpose.msra.mxu0 0
        %1120 = vmatprep.subr.bf16.mxu0 0
        %1121 = vmatpush1.bf16.xpose.msra.mxu0 0
        %1122 = vmatprep.subr.bf16.mxu0 0
        %1123 = vmatpush1.bf16.xpose.msra.mxu0 0
        %1124 = vmatprep.subr.bf16.mxu0 0
        %1125 = vmatpush1.bf16.xpose.msra.mxu0 0
        %1126 = vmatprep.subr.bf16.mxu0 0
        %1127 = vmatpush1.bf16.xpose.msra.mxu0 0
        %1128 = vmatprep.subr.bf16.mxu0 0
        %1129 = vmatpush1.bf16.xpose.msra.mxu0 0
        %1130 = vmatprep.subr.bf16.mxu0 0
        %1131 = vmatpush1.bf16.xpose.msra.mxu0 0
        %1132 = vmatprep.subr.bf16.mxu0 0
        %1133 = vmatpush1.bf16.xpose.msra.mxu0 0
        %1134 = vmatprep.subr.bf16.mxu0 0
        %1135 = vmatpush1.bf16.xpose.msra.mxu0 0
        %1136 = vmatprep.subr.bf16.mxu0 0
        %1137 = vmatpush1.bf16.xpose.msra.mxu0 0
        %1138 = vmatprep.mubr.bf16.mxu0 0
        %1139 = vmatmul.mubr.bf16.gmra.mrb[0].mxu0 %v1101
        %v1140 = vpop.f32.mrb[0].mxu0
        %v1141 = vadd.f32 0.0, %v1140
        %v1142 = vpop.f32.mrb[0].mxu0
        %v1143 = vpop.f32.mrb[0].mxu0
        %v1144 = vpop.f32.mrb[0].mxu0
        %1145 = vdwg.mxu0
        %v1146 = vmul.f32 %v1095, 0.17677669
        %v1147 = vmul.f32 %v1141, 0.17677669
        %vm1148 = vcmask 64512
        %v1149 = vsel %vm1148, %v1146, -inf
        %1150 = vmax.xlane.f32.xlu0 %v1149
        %v1151 = vpop.xlane.xlu0 %1150
        %v1152 = vsel %vm1148, %v1147, -inf
        %1153 = vmax.xlane.f32.xlu0 %v1152
        %v1154 = vpop.xlane.xlu0 %1153
        %v1155 = vsub.f32 %v1146, %v1151
        %v1156 = vsub.f32 %v1147, %v1154
        %v1157 = vmul.f32 %v1155, 1.442695
        %v1158 = vpow.pop %v1157
        %v1159 = vmul.f32 %v1156, 1.442695
        %v1160 = vpow.pop %v1159
        %v1161 = vsel %vm1148, %v1158, 0.0
        %1162 = vadd.xlane.f32.xlu0 %v1161
        %v1163 = vpop.xlane.xlu0 %1162
        %v1164 = vsel %vm1148, %v1160, 0.0
        %1165 = vadd.xlane.f32.xlu0 %v1164
        %v1166 = vpop.xlane.xlu0 %1165
        %v1167 = vrcp.pop %v1163
        %v1168 = vrcp.pop %v1166
        %v1169 = vmul.f32 %v1158, %v1167
        %v1170 = vmul.f32 %v1160, %v1168
        %v1171 = vpack.c.bf16 %v1169, %v1169
        %v1172 = vpack.c.bf16 %v1170, %v1170
        %v1174 = vsel %vm1148, %v1171, 0
        %vm1176 = vcmask 1043456
        %v1178 = vsel %vm1176, %v1051, 0
        %1180 = vmatprep.subr.bf16.mxu0 0
        %1181 = vmatpush1.bf16.msra.mxu0 %v1178
        %1182 = vmatprep.subr.bf16.mxu0 0
        %1183 = vmatpush1.bf16.msra.mxu0 0
        %1184 = vmatprep.subr.bf16.mxu0 0
        %1185 = vmatpush1.bf16.msra.mxu0 0
        %1186 = vmatprep.subr.bf16.mxu0 0
        %1187 = vmatpush1.bf16.msra.mxu0 0
        %1188 = vmatprep.subr.bf16.mxu0 0
        %1189 = vmatpush1.bf16.msra.mxu0 0
        %1190 = vmatprep.subr.bf16.mxu0 0
        %1191 = vmatpush1.bf16.msra.mxu0 0
        %1192 = vmatprep.subr.bf16.mxu0 0
        %1193 = vmatpush1.bf16.msra.mxu0 0
        %1194 = vmatprep.subr.bf16.mxu0 0
        %1195 = vmatpush1.bf16.msra.mxu0 0
        %1196 = vmatprep.subr.bf16.mxu0 0
        %1197 = vmatpush1.bf16.msra.mxu0 0
        %1198 = vmatprep.subr.bf16.mxu0 0
        %1199 = vmatpush1.bf16.msra.mxu0 0
        %1200 = vmatprep.subr.bf16.mxu0 0
        %1201 = vmatpush1.bf16.msra.mxu0 0
        %1202 = vmatprep.subr.bf16.mxu0 0
        %1203 = vmatpush1.bf16.msra.mxu0 0
        %1204 = vmatprep.subr.bf16.mxu0 0
        %1205 = vmatpush1.bf16.msra.mxu0 0
        %1206 = vmatprep.subr.bf16.mxu0 0
        %1207 = vmatpush1.bf16.msra.mxu0 0
        %1208 = vmatprep.subr.bf16.mxu0 0
        %1209 = vmatpush1.bf16.msra.mxu0 0
        %1210 = vmatprep.subr.bf16.mxu0 0
        %1211 = vmatpush1.bf16.msra.mxu0 0
        %1212 = vmatprep.mubr.bf16.mxu0 0
        %1213 = vmatmul.mubr.bf16.gmra.mrb[0].mxu0 %v1174
        %v1214 = vpop.f32.mrb[0].mxu0
        %v1215 = vadd.f32 0.0, %v1214
        %v1216 = vpop.f32.mrb[0].mxu0
        %v1217 = vpop.f32.mrb[0].mxu0
        %v1218 = vpop.f32.mrb[0].mxu0
        %1219 = vdwg.mxu0
        %v1221 = vsel %vm1148, %v1172, 0
        %v1224 = vsel %vm1176, %v1052, 0
        %1226 = vmatprep.subr.bf16.mxu0 0
        %1227 = vmatpush1.bf16.msra.mxu0 %v1224
        %1228 = vmatprep.subr.bf16.mxu0 0
        %1229 = vmatpush1.bf16.msra.mxu0 0
        %1230 = vmatprep.subr.bf16.mxu0 0
        %1231 = vmatpush1.bf16.msra.mxu0 0
        %1232 = vmatprep.subr.bf16.mxu0 0
        %1233 = vmatpush1.bf16.msra.mxu0 0
        %1234 = vmatprep.subr.bf16.mxu0 0
        %1235 = vmatpush1.bf16.msra.mxu0 0
        %1236 = vmatprep.subr.bf16.mxu0 0
        %1237 = vmatpush1.bf16.msra.mxu0 0
        %1238 = vmatprep.subr.bf16.mxu0 0
        %1239 = vmatpush1.bf16.msra.mxu0 0
        %1240 = vmatprep.subr.bf16.mxu0 0
        %1241 = vmatpush1.bf16.msra.mxu0 0
        %1242 = vmatprep.subr.bf16.mxu0 0
        %1243 = vmatpush1.bf16.msra.mxu0 0
        %1244 = vmatprep.subr.bf16.mxu0 0
        %1245 = vmatpush1.bf16.msra.mxu0 0
        %1246 = vmatprep.subr.bf16.mxu0 0
        %1247 = vmatpush1.bf16.msra.mxu0 0
        %1248 = vmatprep.subr.bf16.mxu0 0
        %1249 = vmatpush1.bf16.msra.mxu0 0
        %1250 = vmatprep.subr.bf16.mxu0 0
        %1251 = vmatpush1.bf16.msra.mxu0 0
        %1252 = vmatprep.subr.bf16.mxu0 0
        %1253 = vmatpush1.bf16.msra.mxu0 0
        %1254 = vmatprep.subr.bf16.mxu0 0
        %1255 = vmatpush1.bf16.msra.mxu0 0
        %1256 = vmatprep.subr.bf16.mxu0 0
        %1257 = vmatpush1.bf16.msra.mxu0 0
        %1258 = vmatprep.mubr.bf16.mxu0 0
        %1259 = vmatmul.mubr.bf16.gmra.mrb[0].mxu0 %v1221
        %v1260 = vpop.f32.mrb[0].mxu0
        %v1261 = vadd.f32 0.0, %v1260
        %v1262 = vpop.f32.mrb[0].mxu0
        %v1263 = vpop.f32.mrb[0].mxu0
        %v1264 = vpop.f32.mrb[0].mxu0
        %1265 = vdwg.mxu0
        %1266 = vst.msk [vmem:[#allocation3] sm:$0xff] %vm1053, %v1215
        %1267 = vst.msk [vmem:[#allocation3 + $0x8] sm:$0xff] %vm1053, %v1261
        %1269 = vrot.lane.b32.xlu0 %v1047, 96
        %v1270 = vpop.permute.xlu0 %1269
        %1272 = vrot.lane.b32.xlu0 %v1049, 96
        %v1273 = vpop.permute.xlu0 %1272
        %v1275 = vsel %vm1053, %v1270, 0
        %v1278 = vsel %vm1053, %v1273, 0
        %1280 = vmatprep.subr.bf16.mxu0 0
        %1281 = vmatpush1.bf16.xpose.msra.mxu0 %v1278
        %1282 = vmatprep.subr.bf16.mxu0 0
        %1283 = vmatpush1.bf16.xpose.msra.mxu0 0
        %1284 = vmatprep.subr.bf16.mxu0 0
        %1285 = vmatpush1.bf16.xpose.msra.mxu0 0
        %1286 = vmatprep.subr.bf16.mxu0 0
        %1287 = vmatpush1.bf16.xpose.msra.mxu0 0
        %1288 = vmatprep.subr.bf16.mxu0 0
        %1289 = vmatpush1.bf16.xpose.msra.mxu0 0
        %1290 = vmatprep.subr.bf16.mxu0 0
        %1291 = vmatpush1.bf16.xpose.msra.mxu0 0
        %1292 = vmatprep.subr.bf16.mxu0 0
        %1293 = vmatpush1.bf16.xpose.msra.mxu0 0
        %1294 = vmatprep.subr.bf16.mxu0 0
        %1295 = vmatpush1.bf16.xpose.msra.mxu0 0
        %1296 = vmatprep.subr.bf16.mxu0 0
        %1297 = vmatpush1.bf16.xpose.msra.mxu0 0
        %1298 = vmatprep.subr.bf16.mxu0 0
        %1299 = vmatpush1.bf16.xpose.msra.mxu0 0
        %1300 = vmatprep.subr.bf16.mxu0 0
        %1301 = vmatpush1.bf16.xpose.msra.mxu0 0
        %1302 = vmatprep.subr.bf16.mxu0 0
        %1303 = vmatpush1.bf16.xpose.msra.mxu0 0
        %1304 = vmatprep.subr.bf16.mxu0 0
        %1305 = vmatpush1.bf16.xpose.msra.mxu0 0
        %1306 = vmatprep.subr.bf16.mxu0 0
        %1307 = vmatpush1.bf16.xpose.msra.mxu0 0
        %1308 = vmatprep.subr.bf16.mxu0 0
        %1309 = vmatpush1.bf16.xpose.msra.mxu0 0
        %1310 = vmatprep.subr.bf16.mxu0 0
        %1311 = vmatpush1.bf16.xpose.msra.mxu0 0
        %1312 = vmatprep.mubr.bf16.mxu0 0
        %1313 = vmatmul.mubr.bf16.gmra.mrb[0].mxu0 %v1275
        %v1314 = vpop.f32.mrb[0].mxu0
        %v1315 = vadd.f32 0.0, %v1314
        %v1316 = vpop.f32.mrb[0].mxu0
        %v1317 = vpop.f32.mrb[0].mxu0
        %v1318 = vpop.f32.mrb[0].mxu0
        %1319 = vdwg.mxu0
        %1321 = vrot.lane.b32.xlu0 %v1048, 96
        %v1322 = vpop.permute.xlu0 %1321
        %1324 = vrot.lane.b32.xlu0 %v1050, 96
        %v1325 = vpop.permute.xlu0 %1324
        %v1327 = vsel %vm1053, %v1322, 0
        %v1330 = vsel %vm1053, %v1325, 0
        %1332 = vmatprep.subr.bf16.mxu0 0
        %1333 = vmatpush1.bf16.xpose.msra.mxu0 %v1330
        %1334 = vmatprep.subr.bf16.mxu0 0
        %1335 = vmatpush1.bf16.xpose.msra.mxu0 0
        %1336 = vmatprep.subr.bf16.mxu0 0
        %1337 = vmatpush1.bf16.xpose.msra.mxu0 0
        %1338 = vmatprep.subr.bf16.mxu0 0
        %1339 = vmatpush1.bf16.xpose.msra.mxu0 0
        %1340 = vmatprep.subr.bf16.mxu0 0
        %1341 = vmatpush1.bf16.xpose.msra.mxu0 0
        %1342 = vmatprep.subr.bf16.mxu0 0
        %1343 = vmatpush1.bf16.xpose.msra.mxu0 0
        %1344 = vmatprep.subr.bf16.mxu0 0
        %1345 = vmatpush1.bf16.xpose.msra.mxu0 0
        %1346 = vmatprep.subr.bf16.mxu0 0
        %1347 = vmatpush1.bf16.xpose.msra.mxu0 0
        %1348 = vmatprep.subr.bf16.mxu0 0
        %1349 = vmatpush1.bf16.xpose.msra.mxu0 0
        %1350 = vmatprep.subr.bf16.mxu0 0
        %1351 = vmatpush1.bf16.xpose.msra.mxu0 0
        %1352 = vmatprep.subr.bf16.mxu0 0
        %1353 = vmatpush1.bf16.xpose.msra.mxu0 0
        %1354 = vmatprep.subr.bf16.mxu0 0
        %1355 = vmatpush1.bf16.xpose.msra.mxu0 0
        %1356 = vmatprep.subr.bf16.mxu0 0
        %1357 = vmatpush1.bf16.xpose.msra.mxu0 0
        %1358 = vmatprep.subr.bf16.mxu0 0
        %1359 = vmatpush1.bf16.xpose.msra.mxu0 0
        %1360 = vmatprep.subr.bf16.mxu0 0
        %1361 = vmatpush1.bf16.xpose.msra.mxu0 0
        %1362 = vmatprep.subr.bf16.mxu0 0
        %1363 = vmatpush1.bf16.xpose.msra.mxu0 0
        %1364 = vmatprep.mubr.bf16.mxu0 0
        %1365 = vmatmul.mubr.bf16.gmra.mrb[0].mxu0 %v1327
        %v1366 = vpop.f32.mrb[0].mxu0
        %v1367 = vadd.f32 0.0, %v1366
        %v1368 = vpop.f32.mrb[0].mxu0
        %v1369 = vpop.f32.mrb[0].mxu0
        %v1370 = vpop.f32.mrb[0].mxu0
        %1371 = vdwg.mxu0
        %v1372 = vmul.f32 %v1315, 0.17677669
        %v1373 = vmul.f32 %v1367, 0.17677669
        %v1374 = vsel %vm1148, %v1372, -inf
        %1375 = vmax.xlane.f32.xlu0 %v1374
        %v1376 = vpop.xlane.xlu0 %1375
        %v1377 = vsel %vm1148, %v1373, -inf
        %1378 = vmax.xlane.f32.xlu0 %v1377
        %v1379 = vpop.xlane.xlu0 %1378
        %v1380 = vsub.f32 %v1372, %v1376
        %v1381 = vsub.f32 %v1373, %v1379
        %v1382 = vmul.f32 %v1380, 1.442695
        %v1383 = vpow.pop %v1382
        %v1384 = vmul.f32 %v1381, 1.442695
        %v1385 = vpow.pop %v1384
        %v1386 = vsel %vm1148, %v1383, 0.0
        %1387 = vadd.xlane.f32.xlu0 %v1386
        %v1388 = vpop.xlane.xlu0 %1387
        %v1389 = vsel %vm1148, %v1385, 0.0
        %1390 = vadd.xlane.f32.xlu0 %v1389
        %v1391 = vpop.xlane.xlu0 %1390
        %v1392 = vrcp.pop %v1388
        %v1393 = vrcp.pop %v1391
        %v1394 = vmul.f32 %v1383, %v1392
        %v1395 = vmul.f32 %v1385, %v1393
        %v1396 = vpack.c.bf16 %v1394, %v1394
        %v1397 = vpack.c.bf16 %v1395, %v1395
        %1399 = vrot.lane.b32.xlu0 %v1051, 96
        %v1400 = vpop.permute.xlu0 %1399
        %v1402 = vsel %vm1148, %v1396, 0
        %v1405 = vsel %vm1176, %v1400, 0
        %1407 = vmatprep.subr.bf16.mxu0 0
        %1408 = vmatpush1.bf16.msra.mxu0 %v1405
        %1409 = vmatprep.subr.bf16.mxu0 0
        %1410 = vmatpush1.bf16.msra.mxu0 0
        %1411 = vmatprep.subr.bf16.mxu0 0
        %1412 = vmatpush1.bf16.msra.mxu0 0
        %1413 = vmatprep.subr.bf16.mxu0 0
        %1414 = vmatpush1.bf16.msra.mxu0 0
        %1415 = vmatprep.subr.bf16.mxu0 0
        %1416 = vmatpush1.bf16.msra.mxu0 0
        %1417 = vmatprep.subr.bf16.mxu0 0
        %1418 = vmatpush1.bf16.msra.mxu0 0
        %1419 = vmatprep.subr.bf16.mxu0 0
        %1420 = vmatpush1.bf16.msra.mxu0 0
        %1421 = vmatprep.subr.bf16.mxu0 0
        %1422 = vmatpush1.bf16.msra.mxu0 0
        %1423 = vmatprep.subr.bf16.mxu0 0
        %1424 = vmatpush1.bf16.msra.mxu0 0
        %1425 = vmatprep.subr.bf16.mxu0 0
        %1426 = vmatpush1.bf16.msra.mxu0 0
        %1427 = vmatprep.subr.bf16.mxu0 0
        %1428 = vmatpush1.bf16.msra.mxu0 0
        %1429 = vmatprep.subr.bf16.mxu0 0
        %1430 = vmatpush1.bf16.msra.mxu0 0
        %1431 = vmatprep.subr.bf16.mxu0 0
        %1432 = vmatpush1.bf16.msra.mxu0 0
        %1433 = vmatprep.subr.bf16.mxu0 0
        %1434 = vmatpush1.bf16.msra.mxu0 0
        %1435 = vmatprep.subr.bf16.mxu0 0
        %1436 = vmatpush1.bf16.msra.mxu0 0
        %1437 = vmatprep.subr.bf16.mxu0 0
        %1438 = vmatpush1.bf16.msra.mxu0 0
        %1439 = vmatprep.mubr.bf16.mxu0 0
        %1440 = vmatmul.mubr.bf16.gmra.mrb[0].mxu0 %v1402
        %v1441 = vpop.f32.mrb[0].mxu0
        %v1442 = vadd.f32 0.0, %v1441
        %v1443 = vpop.f32.mrb[0].mxu0
        %v1444 = vpop.f32.mrb[0].mxu0
        %v1445 = vpop.f32.mrb[0].mxu0
        %1446 = vdwg.mxu0
        %1448 = vrot.lane.b32.xlu0 %v1052, 96
        %v1449 = vpop.permute.xlu0 %1448
        %v1451 = vsel %vm1148, %v1397, 0
        %v1454 = vsel %vm1176, %v1449, 0
        %1456 = vmatprep.subr.bf16.mxu0 0
        %1457 = vmatpush1.bf16.msra.mxu0 %v1454
        %1458 = vmatprep.subr.bf16.mxu0 0
        %1459 = vmatpush1.bf16.msra.mxu0 0
        %1460 = vmatprep.subr.bf16.mxu0 0
        %1461 = vmatpush1.bf16.msra.mxu0 0
        %1462 = vmatprep.subr.bf16.mxu0 0
        %1463 = vmatpush1.bf16.msra.mxu0 0
        %1464 = vmatprep.subr.bf16.mxu0 0
        %1465 = vmatpush1.bf16.msra.mxu0 0
        %1466 = vmatprep.subr.bf16.mxu0 0
        %1467 = vmatpush1.bf16.msra.mxu0 0
        %1468 = vmatprep.subr.bf16.mxu0 0
        %1469 = vmatpush1.bf16.msra.mxu0 0
        %1470 = vmatprep.subr.bf16.mxu0 0
        %1471 = vmatpush1.bf16.msra.mxu0 0
        %1472 = vmatprep.subr.bf16.mxu0 0
        %1473 = vmatpush1.bf16.msra.mxu0 0
        %1474 = vmatprep.subr.bf16.mxu0 0
        %1475 = vmatpush1.bf16.msra.mxu0 0
        %1476 = vmatprep.subr.bf16.mxu0 0
        %1477 = vmatpush1.bf16.msra.mxu0 0
        %1478 = vmatprep.subr.bf16.mxu0 0
        %1479 = vmatpush1.bf16.msra.mxu0 0
        %1480 = vmatprep.subr.bf16.mxu0 0
        %1481 = vmatpush1.bf16.msra.mxu0 0
        %1482 = vmatprep.subr.bf16.mxu0 0
        %1483 = vmatpush1.bf16.msra.mxu0 0
        %1484 = vmatprep.subr.bf16.mxu0 0
        %1485 = vmatpush1.bf16.msra.mxu0 0
        %1486 = vmatprep.subr.bf16.mxu0 0
        %1487 = vmatpush1.bf16.msra.mxu0 0
        %1488 = vmatprep.mubr.bf16.mxu0 0
        %1489 = vmatmul.mubr.bf16.gmra.mrb[0].mxu0 %v1451
        %v1490 = vpop.f32.mrb[0].mxu0
        %v1491 = vadd.f32 0.0, %v1490
        %v1492 = vpop.f32.mrb[0].mxu0
        %v1493 = vpop.f32.mrb[0].mxu0
        %v1494 = vpop.f32.mrb[0].mxu0
        %1495 = vdwg.mxu0
        %1498 = vrot.lane.b32.xlu0 %v1442, 32
        %v1499 = vpop.permute.xlu0 %1498
        %1500 = vrot.lane.b32.xlu0 %v1491, 32
        %v1501 = vpop.permute.xlu0 %1500
        %vm1504 = vcmask 523520
        %1505 = vst.msk [vmem:[#allocation3] sm:$0xff] %vm1504, %v1499
        %1506 = vst.msk [vmem:[#allocation3 + $0x8] sm:$0xff] %vm1504, %v1501
        %1507 = vrot.lane.b32.xlu0 %v1047, 64
        %v1508 = vpop.permute.xlu0 %1507
        %1509 = vrot.lane.b32.xlu0 %v1049, 64
        %v1510 = vpop.permute.xlu0 %1509
        %v1512 = vsel %vm1053, %v1508, 0
        %v1515 = vsel %vm1053, %v1510, 0
        %1517 = vmatprep.subr.bf16.mxu0 0
        %1518 = vmatpush1.bf16.xpose.msra.mxu0 %v1515
        %1519 = vmatprep.subr.bf16.mxu0 0
        %1520 = vmatpush1.bf16.xpose.msra.mxu0 0
        %1521 = vmatprep.subr.bf16.mxu0 0
        %1522 = vmatpush1.bf16.xpose.msra.mxu0 0
        %1523 = vmatprep.subr.bf16.mxu0 0
        %1524 = vmatpush1.bf16.xpose.msra.mxu0 0
        %1525 = vmatprep.subr.bf16.mxu0 0
        %1526 = vmatpush1.bf16.xpose.msra.mxu0 0
        %1527 = vmatprep.subr.bf16.mxu0 0
        %1528 = vmatpush1.bf16.xpose.msra.mxu0 0
        %1529 = vmatprep.subr.bf16.mxu0 0
        %1530 = vmatpush1.bf16.xpose.msra.mxu0 0
        %1531 = vmatprep.subr.bf16.mxu0 0
        %1532 = vmatpush1.bf16.xpose.msra.mxu0 0
        %1533 = vmatprep.subr.bf16.mxu0 0
        %1534 = vmatpush1.bf16.xpose.msra.mxu0 0
        %1535 = vmatprep.subr.bf16.mxu0 0
        %1536 = vmatpush1.bf16.xpose.msra.mxu0 0
        %1537 = vmatprep.subr.bf16.mxu0 0
        %1538 = vmatpush1.bf16.xpose.msra.mxu0 0
        %1539 = vmatprep.subr.bf16.mxu0 0
        %1540 = vmatpush1.bf16.xpose.msra.mxu0 0
        %1541 = vmatprep.subr.bf16.mxu0 0
        %1542 = vmatpush1.bf16.xpose.msra.mxu0 0
        %1543 = vmatprep.subr.bf16.mxu0 0
        %1544 = vmatpush1.bf16.xpose.msra.mxu0 0
        %1545 = vmatprep.subr.bf16.mxu0 0
        %1546 = vmatpush1.bf16.xpose.msra.mxu0 0
        %1547 = vmatprep.subr.bf16.mxu0 0
        %1548 = vmatpush1.bf16.xpose.msra.mxu0 0
        %1549 = vmatprep.mubr.bf16.mxu0 0
        %1550 = vmatmul.mubr.bf16.gmra.mrb[0].mxu0 %v1512
        %v1551 = vpop.f32.mrb[0].mxu0
        %v1552 = vadd.f32 0.0, %v1551
        %v1553 = vpop.f32.mrb[0].mxu0
        %v1554 = vpop.f32.mrb[0].mxu0
        %v1555 = vpop.f32.mrb[0].mxu0
        %1556 = vdwg.mxu0
        %1557 = vrot.lane.b32.xlu0 %v1048, 64
        %v1558 = vpop.permute.xlu0 %1557
        %1559 = vrot.lane.b32.xlu0 %v1050, 64
        %v1560 = vpop.permute.xlu0 %1559
        %v1562 = vsel %vm1053, %v1558, 0
        %v1565 = vsel %vm1053, %v1560, 0
        %1567 = vmatprep.subr.bf16.mxu0 0
        %1568 = vmatpush1.bf16.xpose.msra.mxu0 %v1565
        %1569 = vmatprep.subr.bf16.mxu0 0
        %1570 = vmatpush1.bf16.xpose.msra.mxu0 0
        %1571 = vmatprep.subr.bf16.mxu0 0
        %1572 = vmatpush1.bf16.xpose.msra.mxu0 0
        %1573 = vmatprep.subr.bf16.mxu0 0
        %1574 = vmatpush1.bf16.xpose.msra.mxu0 0
        %1575 = vmatprep.subr.bf16.mxu0 0
        %1576 = vmatpush1.bf16.xpose.msra.mxu0 0
        %1577 = vmatprep.subr.bf16.mxu0 0
        %1578 = vmatpush1.bf16.xpose.msra.mxu0 0
        %1579 = vmatprep.subr.bf16.mxu0 0
        %1580 = vmatpush1.bf16.xpose.msra.mxu0 0
        %1581 = vmatprep.subr.bf16.mxu0 0
        %1582 = vmatpush1.bf16.xpose.msra.mxu0 0
        %1583 = vmatprep.subr.bf16.mxu0 0
        %1584 = vmatpush1.bf16.xpose.msra.mxu0 0
        %1585 = vmatprep.subr.bf16.mxu0 0
        %1586 = vmatpush1.bf16.xpose.msra.mxu0 0
        %1587 = vmatprep.subr.bf16.mxu0 0
        %1588 = vmatpush1.bf16.xpose.msra.mxu0 0
        %1589 = vmatprep.subr.bf16.mxu0 0
        %1590 = vmatpush1.bf16.xpose.msra.mxu0 0
        %1591 = vmatprep.subr.bf16.mxu0 0
        %1592 = vmatpush1.bf16.xpose.msra.mxu0 0
        %1593 = vmatprep.subr.bf16.mxu0 0
        %1594 = vmatpush1.bf16.xpose.msra.mxu0 0
        %1595 = vmatprep.subr.bf16.mxu0 0
        %1596 = vmatpush1.bf16.xpose.msra.mxu0 0
        %1597 = vmatprep.subr.bf16.mxu0 0
        %1598 = vmatpush1.bf16.xpose.msra.mxu0 0
        %1599 = vmatprep.mubr.bf16.mxu0 0
        %1600 = vmatmul.mubr.bf16.gmra.mrb[0].mxu0 %v1562
        %v1601 = vpop.f32.mrb[0].mxu0
        %v1602 = vadd.f32 0.0, %v1601
        %v1603 = vpop.f32.mrb[0].mxu0
        %v1604 = vpop.f32.mrb[0].mxu0
        %v1605 = vpop.f32.mrb[0].mxu0
        %1606 = vdwg.mxu0
        %v1607 = vmul.f32 %v1552, 0.17677669
        %v1608 = vmul.f32 %v1602, 0.17677669
        %v1609 = vsel %vm1148, %v1607, -inf
        %1610 = vmax.xlane.f32.xlu0 %v1609
        %v1611 = vpop.xlane.xlu0 %1610
        %v1612 = vsel %vm1148, %v1608, -inf
        %1613 = vmax.xlane.f32.xlu0 %v1612
        %v1614 = vpop.xlane.xlu0 %1613
        %v1615 = vsub.f32 %v1607, %v1611
        %v1616 = vsub.f32 %v1608, %v1614
        %v1617 = vmul.f32 %v1615, 1.442695
        %v1618 = vpow.pop %v1617
        %v1619 = vmul.f32 %v1616, 1.442695
        %v1620 = vpow.pop %v1619
        %v1621 = vsel %vm1148, %v1618, 0.0
        %1622 = vadd.xlane.f32.xlu0 %v1621
        %v1623 = vpop.xlane.xlu0 %1622
        %v1624 = vsel %vm1148, %v1620, 0.0
        %1625 = vadd.xlane.f32.xlu0 %v1624
        %v1626 = vpop.xlane.xlu0 %1625
        %v1627 = vrcp.pop %v1623
        %v1628 = vrcp.pop %v1626
        %v1629 = vmul.f32 %v1618, %v1627
        %v1630 = vmul.f32 %v1620, %v1628
        %v1631 = vpack.c.bf16 %v1629, %v1629
        %v1632 = vpack.c.bf16 %v1630, %v1630
        %1633 = vrot.lane.b32.xlu0 %v1051, 64
        %v1634 = vpop.permute.xlu0 %1633
        %v1636 = vsel %vm1148, %v1631, 0
        %v1639 = vsel %vm1176, %v1634, 0
        %1641 = vmatprep.subr.bf16.mxu0 0
        %1642 = vmatpush1.bf16.msra.mxu0 %v1639
        %1643 = vmatprep.subr.bf16.mxu0 0
        %1644 = vmatpush1.bf16.msra.mxu0 0
        %1645 = vmatprep.subr.bf16.mxu0 0
        %1646 = vmatpush1.bf16.msra.mxu0 0
        %1647 = vmatprep.subr.bf16.mxu0 0
        %1648 = vmatpush1.bf16.msra.mxu0 0
        %1649 = vmatprep.subr.bf16.mxu0 0
        %1650 = vmatpush1.bf16.msra.mxu0 0
        %1651 = vmatprep.subr.bf16.mxu0 0
        %1652 = vmatpush1.bf16.msra.mxu0 0
        %1653 = vmatprep.subr.bf16.mxu0 0
        %1654 = vmatpush1.bf16.msra.mxu0 0
        %1655 = vmatprep.subr.bf16.mxu0 0
        %1656 = vmatpush1.bf16.msra.mxu0 0
        %1657 = vmatprep.subr.bf16.mxu0 0
        %1658 = vmatpush1.bf16.msra.mxu0 0
        %1659 = vmatprep.subr.bf16.mxu0 0
        %1660 = vmatpush1.bf16.msra.mxu0 0
        %1661 = vmatprep.subr.bf16.mxu0 0
        %1662 = vmatpush1.bf16.msra.mxu0 0
        %1663 = vmatprep.subr.bf16.mxu0 0
        %1664 = vmatpush1.bf16.msra.mxu0 0
        %1665 = vmatprep.subr.bf16.mxu0 0
        %1666 = vmatpush1.bf16.msra.mxu0 0
        %1667 = vmatprep.subr.bf16.mxu0 0
        %1668 = vmatpush1.bf16.msra.mxu0 0
        %1669 = vmatprep.subr.bf16.mxu0 0
        %1670 = vmatpush1.bf16.msra.mxu0 0
        %1671 = vmatprep.subr.bf16.mxu0 0
        %1672 = vmatpush1.bf16.msra.mxu0 0
        %1673 = vmatprep.mubr.bf16.mxu0 0
        %1674 = vmatmul.mubr.bf16.gmra.mrb[0].mxu0 %v1636
        %v1675 = vpop.f32.mrb[0].mxu0
        %v1676 = vadd.f32 0.0, %v1675
        %v1677 = vpop.f32.mrb[0].mxu0
        %v1678 = vpop.f32.mrb[0].mxu0
        %v1679 = vpop.f32.mrb[0].mxu0
        %1680 = vdwg.mxu0
        %1681 = vrot.lane.b32.xlu0 %v1052, 64
        %v1682 = vpop.permute.xlu0 %1681
        %v1684 = vsel %vm1148, %v1632, 0
        %v1687 = vsel %vm1176, %v1682, 0
        %1689 = vmatprep.subr.bf16.mxu0 0
        %1690 = vmatpush1.bf16.msra.mxu0 %v1687
        %1691 = vmatprep.subr.bf16.mxu0 0
        %1692 = vmatpush1.bf16.msra.mxu0 0
        %1693 = vmatprep.subr.bf16.mxu0 0
        %1694 = vmatpush1.bf16.msra.mxu0 0
        %1695 = vmatprep.subr.bf16.mxu0 0
        %1696 = vmatpush1.bf16.msra.mxu0 0
        %1697 = vmatprep.subr.bf16.mxu0 0
        %1698 = vmatpush1.bf16.msra.mxu0 0
        %1699 = vmatprep.subr.bf16.mxu0 0
        %1700 = vmatpush1.bf16.msra.mxu0 0
        %1701 = vmatprep.subr.bf16.mxu0 0
        %1702 = vmatpush1.bf16.msra.mxu0 0
        %1703 = vmatprep.subr.bf16.mxu0 0
        %1704 = vmatpush1.bf16.msra.mxu0 0
        %1705 = vmatprep.subr.bf16.mxu0 0
        %1706 = vmatpush1.bf16.msra.mxu0 0
        %1707 = vmatprep.subr.bf16.mxu0 0
        %1708 = vmatpush1.bf16.msra.mxu0 0
        %1709 = vmatprep.subr.bf16.mxu0 0
        %1710 = vmatpush1.bf16.msra.mxu0 0
        %1711 = vmatprep.subr.bf16.mxu0 0
        %1712 = vmatpush1.bf16.msra.mxu0 0
        %1713 = vmatprep.subr.bf16.mxu0 0
        %1714 = vmatpush1.bf16.msra.mxu0 0
        %1715 = vmatprep.subr.bf16.mxu0 0
        %1716 = vmatpush1.bf16.msra.mxu0 0
        %1717 = vmatprep.subr.bf16.mxu0 0
        %1718 = vmatpush1.bf16.msra.mxu0 0
        %1719 = vmatprep.subr.bf16.mxu0 0
        %1720 = vmatpush1.bf16.msra.mxu0 0
        %1721 = vmatprep.mubr.bf16.mxu0 0
        %1722 = vmatmul.mubr.bf16.gmra.mrb[0].mxu0 %v1684
        %v1723 = vpop.f32.mrb[0].mxu0
        %v1724 = vadd.f32 0.0, %v1723
        %v1725 = vpop.f32.mrb[0].mxu0
        %v1726 = vpop.f32.mrb[0].mxu0
        %v1727 = vpop.f32.mrb[0].mxu0
        %1728 = vdwg.mxu0
        %1731 = vrot.lane.b32.xlu0 %v1676, 64
        %v1732 = vpop.permute.xlu0 %1731
        %1733 = vrot.lane.b32.xlu0 %v1724, 64
        %v1734 = vpop.permute.xlu0 %1733
        %vm1737 = vcmask 785920
        %1738 = vst.msk [vmem:[#allocation3] sm:$0xff] %vm1737, %v1732
        %1739 = vst.msk [vmem:[#allocation3 + $0x8] sm:$0xff] %vm1737, %v1734
        %1740 = vrot.lane.b32.xlu0 %v1047, 32
        %v1741 = vpop.permute.xlu0 %1740
        %1742 = vrot.lane.b32.xlu0 %v1049, 32
        %v1743 = vpop.permute.xlu0 %1742
        %v1745 = vsel %vm1053, %v1741, 0
        %v1748 = vsel %vm1053, %v1743, 0
        %1750 = vmatprep.subr.bf16.mxu0 0
        %1751 = vmatpush1.bf16.xpose.msra.mxu0 %v1748
        %1752 = vmatprep.subr.bf16.mxu0 0
        %1753 = vmatpush1.bf16.xpose.msra.mxu0 0
        %1754 = vmatprep.subr.bf16.mxu0 0
        %1755 = vmatpush1.bf16.xpose.msra.mxu0 0
        %1756 = vmatprep.subr.bf16.mxu0 0
        %1757 = vmatpush1.bf16.xpose.msra.mxu0 0
        %1758 = vmatprep.subr.bf16.mxu0 0
        %1759 = vmatpush1.bf16.xpose.msra.mxu0 0
        %1760 = vmatprep.subr.bf16.mxu0 0
        %1761 = vmatpush1.bf16.xpose.msra.mxu0 0
        %1762 = vmatprep.subr.bf16.mxu0 0
        %1763 = vmatpush1.bf16.xpose.msra.mxu0 0
        %1764 = vmatprep.subr.bf16.mxu0 0
        %1765 = vmatpush1.bf16.xpose.msra.mxu0 0
        %1766 = vmatprep.subr.bf16.mxu0 0
        %1767 = vmatpush1.bf16.xpose.msra.mxu0 0
        %1768 = vmatprep.subr.bf16.mxu0 0
        %1769 = vmatpush1.bf16.xpose.msra.mxu0 0
        %1770 = vmatprep.subr.bf16.mxu0 0
        %1771 = vmatpush1.bf16.xpose.msra.mxu0 0
        %1772 = vmatprep.subr.bf16.mxu0 0
        %1773 = vmatpush1.bf16.xpose.msra.mxu0 0
        %1774 = vmatprep.subr.bf16.mxu0 0
        %1775 = vmatpush1.bf16.xpose.msra.mxu0 0
        %1776 = vmatprep.subr.bf16.mxu0 0
        %1777 = vmatpush1.bf16.xpose.msra.mxu0 0
        %1778 = vmatprep.subr.bf16.mxu0 0
        %1779 = vmatpush1.bf16.xpose.msra.mxu0 0
        %1780 = vmatprep.subr.bf16.mxu0 0
        %1781 = vmatpush1.bf16.xpose.msra.mxu0 0
        %1782 = vmatprep.mubr.bf16.mxu0 0
        %1783 = vmatmul.mubr.bf16.gmra.mrb[0].mxu0 %v1745
        %v1784 = vpop.f32.mrb[0].mxu0
        %v1785 = vadd.f32 0.0, %v1784
        %v1786 = vpop.f32.mrb[0].mxu0
        %v1787 = vpop.f32.mrb[0].mxu0
        %v1788 = vpop.f32.mrb[0].mxu0
        %1789 = vdwg.mxu0
        %1790 = vrot.lane.b32.xlu0 %v1048, 32
        %v1791 = vpop.permute.xlu0 %1790
        %1792 = vrot.lane.b32.xlu0 %v1050, 32
        %v1793 = vpop.permute.xlu0 %1792
        %v1795 = vsel %vm1053, %v1791, 0
        %v1798 = vsel %vm1053, %v1793, 0
        %1800 = vmatprep.subr.bf16.mxu0 0
        %1801 = vmatpush1.bf16.xpose.msra.mxu0 %v1798
        %1802 = vmatprep.subr.bf16.mxu0 0
        %1803 = vmatpush1.bf16.xpose.msra.mxu0 0
        %1804 = vmatprep.subr.bf16.mxu0 0
        %1805 = vmatpush1.bf16.xpose.msra.mxu0 0
        %1806 = vmatprep.subr.bf16.mxu0 0
        %1807 = vmatpush1.bf16.xpose.msra.mxu0 0
        %1808 = vmatprep.subr.bf16.mxu0 0
        %1809 = vmatpush1.bf16.xpose.msra.mxu0 0
        %1810 = vmatprep.subr.bf16.mxu0 0
        %1811 = vmatpush1.bf16.xpose.msra.mxu0 0
        %1812 = vmatprep.subr.bf16.mxu0 0
        %1813 = vmatpush1.bf16.xpose.msra.mxu0 0
        %1814 = vmatprep.subr.bf16.mxu0 0
        %1815 = vmatpush1.bf16.xpose.msra.mxu0 0
        %1816 = vmatprep.subr.bf16.mxu0 0
        %1817 = vmatpush1.bf16.xpose.msra.mxu0 0
        %1818 = vmatprep.subr.bf16.mxu0 0
        %1819 = vmatpush1.bf16.xpose.msra.mxu0 0
        %1820 = vmatprep.subr.bf16.mxu0 0
        %1821 = vmatpush1.bf16.xpose.msra.mxu0 0
        %1822 = vmatprep.subr.bf16.mxu0 0
        %1823 = vmatpush1.bf16.xpose.msra.mxu0 0
        %1824 = vmatprep.subr.bf16.mxu0 0
        %1825 = vmatpush1.bf16.xpose.msra.mxu0 0
        %1826 = vmatprep.subr.bf16.mxu0 0
        %1827 = vmatpush1.bf16.xpose.msra.mxu0 0
        %1828 = vmatprep.subr.bf16.mxu0 0
        %1829 = vmatpush1.bf16.xpose.msra.mxu0 0
        %1830 = vmatprep.subr.bf16.mxu0 0
        %1831 = vmatpush1.bf16.xpose.msra.mxu0 0
        %1832 = vmatprep.mubr.bf16.mxu0 0
        %1833 = vmatmul.mubr.bf16.gmra.mrb[0].mxu0 %v1795
        %v1834 = vpop.f32.mrb[0].mxu0
        %v1835 = vadd.f32 0.0, %v1834
        %v1836 = vpop.f32.mrb[0].mxu0
        %v1837 = vpop.f32.mrb[0].mxu0
        %v1838 = vpop.f32.mrb[0].mxu0
        %1839 = vdwg.mxu0
        %v1840 = vmul.f32 %v1785, 0.17677669
        %v1841 = vmul.f32 %v1835, 0.17677669
        %v1842 = vsel %vm1148, %v1840, -inf
        %1843 = vmax.xlane.f32.xlu0 %v1842
        %v1844 = vpop.xlane.xlu0 %1843
        %v1845 = vsel %vm1148, %v1841, -inf
        %1846 = vmax.xlane.f32.xlu0 %v1845
        %v1847 = vpop.xlane.xlu0 %1846
        %v1848 = vsub.f32 %v1840, %v1844
        %v1849 = vsub.f32 %v1841, %v1847
        %v1850 = vmul.f32 %v1848, 1.442695
        %v1851 = vpow.pop %v1850
        %v1852 = vmul.f32 %v1849, 1.442695
        %v1853 = vpow.pop %v1852
        %v1854 = vsel %vm1148, %v1851, 0.0
        %1855 = vadd.xlane.f32.xlu0 %v1854
        %v1856 = vpop.xlane.xlu0 %1855
        %v1857 = vsel %vm1148, %v1853, 0.0
        %1858 = vadd.xlane.f32.xlu0 %v1857
        %v1859 = vpop.xlane.xlu0 %1858
        %v1860 = vrcp.pop %v1856
        %v1861 = vrcp.pop %v1859
        %v1862 = vmul.f32 %v1851, %v1860
        %v1863 = vmul.f32 %v1853, %v1861
        %v1864 = vpack.c.bf16 %v1862, %v1862
        %v1865 = vpack.c.bf16 %v1863, %v1863
        %1866 = vrot.lane.b32.xlu0 %v1051, 32
        %v1867 = vpop.permute.xlu0 %1866
        %v1869 = vsel %vm1148, %v1864, 0
        %v1872 = vsel %vm1176, %v1867, 0
        %1874 = vmatprep.subr.bf16.mxu0 0
        %1875 = vmatpush1.bf16.msra.mxu0 %v1872
        %1876 = vmatprep.subr.bf16.mxu0 0
        %1877 = vmatpush1.bf16.msra.mxu0 0
        %1878 = vmatprep.subr.bf16.mxu0 0
        %1879 = vmatpush1.bf16.msra.mxu0 0
        %1880 = vmatprep.subr.bf16.mxu0 0
        %1881 = vmatpush1.bf16.msra.mxu0 0
        %1882 = vmatprep.subr.bf16.mxu0 0
        %1883 = vmatpush1.bf16.msra.mxu0 0
        %1884 = vmatprep.subr.bf16.mxu0 0
        %1885 = vmatpush1.bf16.msra.mxu0 0
        %1886 = vmatprep.subr.bf16.mxu0 0
        %1887 = vmatpush1.bf16.msra.mxu0 0
        %1888 = vmatprep.subr.bf16.mxu0 0
        %1889 = vmatpush1.bf16.msra.mxu0 0
        %1890 = vmatprep.subr.bf16.mxu0 0
        %1891 = vmatpush1.bf16.msra.mxu0 0
        %1892 = vmatprep.subr.bf16.mxu0 0
        %1893 = vmatpush1.bf16.msra.mxu0 0
        %1894 = vmatprep.subr.bf16.mxu0 0
        %1895 = vmatpush1.bf16.msra.mxu0 0
        %1896 = vmatprep.subr.bf16.mxu0 0
        %1897 = vmatpush1.bf16.msra.mxu0 0
        %1898 = vmatprep.subr.bf16.mxu0 0
        %1899 = vmatpush1.bf16.msra.mxu0 0
        %1900 = vmatprep.subr.bf16.mxu0 0
        %1901 = vmatpush1.bf16.msra.mxu0 0
        %1902 = vmatprep.subr.bf16.mxu0 0
        %1903 = vmatpush1.bf16.msra.mxu0 0
        %1904 = vmatprep.subr.bf16.mxu0 0
        %1905 = vmatpush1.bf16.msra.mxu0 0
        %1906 = vmatprep.mubr.bf16.mxu0 0
        %1907 = vmatmul.mubr.bf16.gmra.mrb[0].mxu0 %v1869
        %v1908 = vpop.f32.mrb[0].mxu0
        %v1909 = vadd.f32 0.0, %v1908
        %v1910 = vpop.f32.mrb[0].mxu0
        %v1911 = vpop.f32.mrb[0].mxu0
        %v1912 = vpop.f32.mrb[0].mxu0
        %1913 = vdwg.mxu0
        %1914 = vrot.lane.b32.xlu0 %v1052, 32
        %v1915 = vpop.permute.xlu0 %1914
        %v1917 = vsel %vm1148, %v1865, 0
        %v1920 = vsel %vm1176, %v1915, 0
        %1922 = vmatprep.subr.bf16.mxu0 0
        %1923 = vmatpush1.bf16.msra.mxu0 %v1920
        %1924 = vmatprep.subr.bf16.mxu0 0
        %1925 = vmatpush1.bf16.msra.mxu0 0
        %1926 = vmatprep.subr.bf16.mxu0 0
        %1927 = vmatpush1.bf16.msra.mxu0 0
        %1928 = vmatprep.subr.bf16.mxu0 0
        %1929 = vmatpush1.bf16.msra.mxu0 0
        %1930 = vmatprep.subr.bf16.mxu0 0
        %1931 = vmatpush1.bf16.msra.mxu0 0
        %1932 = vmatprep.subr.bf16.mxu0 0
        %1933 = vmatpush1.bf16.msra.mxu0 0
        %1934 = vmatprep.subr.bf16.mxu0 0
        %1935 = vmatpush1.bf16.msra.mxu0 0
        %1936 = vmatprep.subr.bf16.mxu0 0
        %1937 = vmatpush1.bf16.msra.mxu0 0
        %1938 = vmatprep.subr.bf16.mxu0 0
        %1939 = vmatpush1.bf16.msra.mxu0 0
        %1940 = vmatprep.subr.bf16.mxu0 0
        %1941 = vmatpush1.bf16.msra.mxu0 0
        %1942 = vmatprep.subr.bf16.mxu0 0
        %1943 = vmatpush1.bf16.msra.mxu0 0
        %1944 = vmatprep.subr.bf16.mxu0 0
        %1945 = vmatpush1.bf16.msra.mxu0 0
        %1946 = vmatprep.subr.bf16.mxu0 0
        %1947 = vmatpush1.bf16.msra.mxu0 0
        %1948 = vmatprep.subr.bf16.mxu0 0
        %1949 = vmatpush1.bf16.msra.mxu0 0
        %1950 = vmatprep.subr.bf16.mxu0 0
        %1951 = vmatpush1.bf16.msra.mxu0 0
        %1952 = vmatprep.subr.bf16.mxu0 0
        %1953 = vmatpush1.bf16.msra.mxu0 0
        %1954 = vmatprep.mubr.bf16.mxu0 0
        %1955 = vmatmul.mubr.bf16.gmra.mrb[0].mxu0 %v1917
        %v1956 = vpop.f32.mrb[0].mxu0
        %v1957 = vadd.f32 0.0, %v1956
        %v1958 = vpop.f32.mrb[0].mxu0
        %v1959 = vpop.f32.mrb[0].mxu0
        %v1960 = vpop.f32.mrb[0].mxu0
        %1961 = vdwg.mxu0
        %1964 = vrot.lane.b32.xlu0 %v1909, 96
        %v1965 = vpop.permute.xlu0 %1964
        %1966 = vrot.lane.b32.xlu0 %v1957, 96
        %v1967 = vpop.permute.xlu0 %1966
        %vm1970 = vcmask 1048320
        %1971 = vst.msk [vmem:[#allocation3] sm:$0xff] %vm1970, %v1965
        %1972 = vst.msk [vmem:[#allocation3 + $0x8] sm:$0xff] %vm1970, %v1967
        %v1973 = vld [vmem:[#allocation3] sm:$0xff]
        %v1974 = vld [vmem:[#allocation3 + $0x8] sm:$0xff]
        %v1975 = vpack.c.bf16 %v1974, %v1973
        %v1976 = vld [vmem:[%s561] sm:$0xf]
        %v1977 = vld [vmem:[%s561 + $0x4] sm:$0xf]
        %v1978 = vld [vmem:[%s561 + $0x8] sm:$0xf]
        %v1979 = vld [vmem:[%s561 + $0xc] sm:$0xf]
        %v1980 = vld [vmem:[%s561 + $0x10] sm:$0xf]
        %v1981 = vld [vmem:[%s561 + $0x14] sm:$0xf]
        %v1982 = vld [vmem:[%s561 + $0x18] sm:$0xf]
        %v1983 = vld [vmem:[%s561 + $0x1c] sm:$0xf]
        %v1984 = vld [vmem:[%s561 + $0x20] sm:$0xf]
        %v1985 = vld [vmem:[%s561 + $0x24] sm:$0xf]
        %v1986 = vld [vmem:[%s561 + $0x28] sm:$0xf]
        %v1987 = vld [vmem:[%s561 + $0x2c] sm:$0xf]
        %v1988 = vld [vmem:[%s561 + $0x30] sm:$0xf]
        %v1989 = vld [vmem:[%s561 + $0x34] sm:$0xf]
        %v1990 = vld [vmem:[%s561 + $0x38] sm:$0xf]
        %v1991 = vld [vmem:[%s561 + $0x3c] sm:$0xf]
        %v1992 = vlaneseq
        %v1993 = vshrl.u32 %v1992, 7
        %v1994 = vsub.s32 1, %v1993
        %v1995 = vrot.slane %v786, %v1994
        %v2012 = vunpack.c.l.b16 %v1976
        %v2013 = vunpack.c.l.b16 %v1977
        %v2014 = vunpack.c.l.b16 %v1978
        %v2015 = vunpack.c.l.b16 %v1979
        %v2016 = vunpack.c.l.b16 %v1980
        %v2017 = vunpack.c.l.b16 %v1981
        %v2018 = vunpack.c.l.b16 %v1982
        %v2019 = vunpack.c.l.b16 %v1983
        %v2020 = vunpack.c.l.b16 %v1984
        %v2021 = vunpack.c.l.b16 %v1985
        %v2022 = vunpack.c.l.b16 %v1986
        %v2023 = vunpack.c.l.b16 %v1987
        %v2024 = vunpack.c.l.b16 %v1988
        %v2025 = vunpack.c.l.b16 %v1989
        %v2026 = vunpack.c.l.b16 %v1990
        %v2027 = vunpack.c.l.b16 %v1991
        %v2028 = vpack.c.b16 %v2013, %v2012
        %v2029 = vpack.c.b16 %v2015, %v2014
        %v2030 = vpack.c.b16 %v2017, %v2016
        %v2031 = vpack.c.b16 %v2019, %v2018
        %v2032 = vpack.c.b16 %v2021, %v2020
        %v2033 = vpack.c.b16 %v2023, %v2022
        %v2034 = vpack.c.b16 %v2025, %v2024
        %v2035 = vpack.c.b16 %v2027, %v2026
        %2044 = vmatprep.subr.bf16.mxu0 0
        %2045 = vmatpush1.bf16.msra.mxu0 %v2028
        %2046 = vmatprep.subr.bf16.mxu0 0
        %2047 = vmatpush1.bf16.msra.mxu0 %v2029
        %2048 = vmatprep.subr.bf16.mxu0 0
        %2049 = vmatpush1.bf16.msra.mxu0 %v2030
        %2050 = vmatprep.subr.bf16.mxu0 0
        %2051 = vmatpush1.bf16.msra.mxu0 %v2031
        %2052 = vmatprep.subr.bf16.mxu0 0
        %2053 = vmatpush1.bf16.msra.mxu0 %v2032
        %2054 = vmatprep.subr.bf16.mxu0 0
        %2055 = vmatpush1.bf16.msra.mxu0 %v2033
        %2056 = vmatprep.subr.bf16.mxu0 0
        %2057 = vmatpush1.bf16.msra.mxu0 %v2034
        %2058 = vmatprep.subr.bf16.mxu0 0
        %2059 = vmatpush1.bf16.msra.mxu0 %v2035
        %2060 = vmatprep.subr.bf16.mxu0 0
        %2061 = vmatpush1.bf16.msra.mxu0 0
        %2062 = vmatprep.subr.bf16.mxu0 0
        %2063 = vmatpush1.bf16.msra.mxu0 0
        %2064 = vmatprep.subr.bf16.mxu0 0
        %2065 = vmatpush1.bf16.msra.mxu0 0
        %2066 = vmatprep.subr.bf16.mxu0 0
        %2067 = vmatpush1.bf16.msra.mxu0 0
        %2068 = vmatprep.subr.bf16.mxu0 0
        %2069 = vmatpush1.bf16.msra.mxu0 0
        %2070 = vmatprep.subr.bf16.mxu0 0
        %2071 = vmatpush1.bf16.msra.mxu0 0
        %2072 = vmatprep.subr.bf16.mxu0 0
        %2073 = vmatpush1.bf16.msra.mxu0 0
        %2074 = vmatprep.subr.bf16.mxu0 0
        %2075 = vmatpush1.bf16.msra.mxu0 0
        %2076 = vmatprep.mubr.bf16.mxu0 0
        %2077 = vmatmul.mubr.bf16.gmra.mrb[0].mxu0 %v1975
        %v2078 = vpop.f32.mrb[0].mxu0
        %v2079 = vadd.f32 %v1995, %v2078
        %v2080 = vpop.f32.mrb[0].mxu0
        %v2081 = vpop.f32.mrb[0].mxu0
        %v2082 = vadd.f32 %v1995, %v2081
        %v2083 = vpop.f32.mrb[0].mxu0
        %2084 = vdwg.mxu0
        %v2085 = vadd.f32 %v784, %v2079
        %v2086 = vadd.f32 %v785, %v2082
        %2087 = vadd.xlane.f32.xlu0 %v2085
        %v2088 = vpop.xlane.xlu0 %2087
        %2089 = vadd.xlane.f32.xlu0 %v2086
        %v2090 = vpop.xlane.xlu0 %2089
        %v2091 = vrcp.pop 128.0
        %v2092 = vmul.f32 %v2088, %v2091
        %v2093 = vmul.f32 %v2090, %v2091
        %v2094 = vsub.f32 %v2085, %v2092
        %v2095 = vsub.f32 %v2086, %v2093
        %v2096 = vmul.f32 %v2094, %v2094
        %v2097 = vmul.f32 %v2095, %v2095
        %2098 = vadd.xlane.f32.xlu0 %v2096
        %v2099 = vpop.xlane.xlu0 %2098
        %2100 = vadd.xlane.f32.xlu0 %v2097
        %v2101 = vpop.xlane.xlu0 %2100
        %v2102 = vmul.f32 %v2099, %v2091
        %v2103 = vmul.f32 %v2101, %v2091
        %v2104 = vadd.f32 %v2102, 1e-05
        %v2105 = vadd.f32 %v2103, 1e-05
        %v2106 = vrsqrt.pop %v2104
        %v2107 = vrsqrt.pop %v2105
        %v2108 = vmul.f32 %v2094, %v2106
        %v2109 = vmul.f32 %v2095, %v2107
        %v2110 = vlaneseq
        %v2111 = vshrl.u32 %v2110, 7
        %v2112 = vsub.s32 2, %v2111
        %v2113 = vrot.slane %v786, %v2112
        %v2114 = vmul.f32 %v2108, %v2113
        %v2115 = vmul.f32 %v2109, %v2113
        %v2116 = vlaneseq
        %v2117 = vshrl.u32 %v2116, 7
        %v2118 = vsub.s32 3, %v2117
        %v2119 = vrot.slane %v786, %v2118
        %v2120 = vadd.f32 %v2114, %v2119
        %v2121 = vadd.f32 %v2115, %v2119
        %v2122 = vpack.c.bf16 %v2121, %v2120
        %v2123 = vld [vmem:[%s570] sm:$0xff]
        %v2124 = vld [vmem:[%s570 + $0x8] sm:$0xff]
        %v2125 = vld [vmem:[%s570 + $0x10] sm:$0xff]
        %v2126 = vld [vmem:[%s570 + $0x18] sm:$0xff]
        %v2127 = vld [vmem:[%s570 + $0x20] sm:$0xff]
        %v2128 = vld [vmem:[%s570 + $0x28] sm:$0xff]
        %v2129 = vld [vmem:[%s570 + $0x30] sm:$0xff]
        %v2130 = vld [vmem:[%s570 + $0x38] sm:$0xff]
        %v2131 = vld [vmem:[%s570 + $0x40] sm:$0xff]
        %v2132 = vld [vmem:[%s570 + $0x48] sm:$0xff]
        %v2133 = vld [vmem:[%s570 + $0x50] sm:$0xff]
        %v2134 = vld [vmem:[%s570 + $0x58] sm:$0xff]
        %v2135 = vld [vmem:[%s570 + $0x60] sm:$0xff]
        %v2136 = vld [vmem:[%s570 + $0x68] sm:$0xff]
        %v2137 = vld [vmem:[%s570 + $0x70] sm:$0xff]
        %v2138 = vld [vmem:[%s570 + $0x78] sm:$0xff]
        %v2139 = vld [vmem:[%s570 + $0x80] sm:$0xff]
        %v2140 = vld [vmem:[%s570 + $0x88] sm:$0xff]
        %v2141 = vld [vmem:[%s570 + $0x90] sm:$0xff]
        %v2142 = vld [vmem:[%s570 + $0x98] sm:$0xff]
        %v2143 = vld [vmem:[%s570 + $0xa0] sm:$0xff]
        %v2144 = vld [vmem:[%s570 + $0xa8] sm:$0xff]
        %v2145 = vld [vmem:[%s570 + $0xb0] sm:$0xff]
        %v2146 = vld [vmem:[%s570 + $0xb8] sm:$0xff]
        %v2147 = vld [vmem:[%s570 + $0xc0] sm:$0xff]
        %v2148 = vld [vmem:[%s570 + $0xc8] sm:$0xff]
        %v2149 = vld [vmem:[%s570 + $0xd0] sm:$0xff]
        %v2150 = vld [vmem:[%s570 + $0xd8] sm:$0xff]
        %v2151 = vld [vmem:[%s570 + $0xe0] sm:$0xff]
        %v2152 = vld [vmem:[%s570 + $0xe8] sm:$0xff]
        %v2153 = vld [vmem:[%s570 + $0xf0] sm:$0xff]
        %v2154 = vld [vmem:[%s570 + $0xf8] sm:$0xff]
        %v2155 = vlaneseq
        %v2156 = vshrl.u32 %v2155, 7
        %v2157 = vsub.s32 4, %v2156
        %v2158 = vrot.slane %v786, %v2157
        %v2159 = vlaneseq
        %v2160 = vshrl.u32 %v2159, 7
        %v2161 = vsub.s32 4, %v2160
        %v2162 = vrot.slane %v787, %v2161
        %v2163 = vlaneseq
        %v2164 = vshrl.u32 %v2163, 7
        %v2165 = vsub.s32 4, %v2164
        %v2166 = vrot.slane %v788, %v2165
        %v2167 = vlaneseq
        %v2168 = vshrl.u32 %v2167, 7
        %v2169 = vsub.s32 4, %v2168
        %v2170 = vrot.slane %v789, %v2169
        %v2203 = vunpack.c.l.b16 %v2123
        %v2204 = vunpack.c.h.b16 %v2123
        %v2205 = vunpack.c.l.b16 %v2124
        %v2206 = vunpack.c.h.b16 %v2124
        %v2207 = vunpack.c.l.b16 %v2125
        %v2208 = vunpack.c.h.b16 %v2125
        %v2209 = vunpack.c.l.b16 %v2126
        %v2210 = vunpack.c.h.b16 %v2126
        %v2211 = vunpack.c.l.b16 %v2127
        %v2212 = vunpack.c.h.b16 %v2127
        %v2213 = vunpack.c.l.b16 %v2128
        %v2214 = vunpack.c.h.b16 %v2128
        %v2215 = vunpack.c.l.b16 %v2129
        %v2216 = vunpack.c.h.b16 %v2129
        %v2217 = vunpack.c.l.b16 %v2130
        %v2218 = vunpack.c.h.b16 %v2130
        %v2219 = vunpack.c.l.b16 %v2131
        %v2220 = vunpack.c.h.b16 %v2131
        %v2221 = vunpack.c.l.b16 %v2132
        %v2222 = vunpack.c.h.b16 %v2132
        %v2223 = vunpack.c.l.b16 %v2133
        %v2224 = vunpack.c.h.b16 %v2133
        %v2225 = vunpack.c.l.b16 %v2134
        %v2226 = vunpack.c.h.b16 %v2134
        %v2227 = vunpack.c.l.b16 %v2135
        %v2228 = vunpack.c.h.b16 %v2135
        %v2229 = vunpack.c.l.b16 %v2136
        %v2230 = vunpack.c.h.b16 %v2136
        %v2231 = vunpack.c.l.b16 %v2137
        %v2232 = vunpack.c.h.b16 %v2137
        %v2233 = vunpack.c.l.b16 %v2138
        %v2234 = vunpack.c.h.b16 %v2138
        %v2235 = vunpack.c.l.b16 %v2139
        %v2236 = vunpack.c.h.b16 %v2139
        %v2237 = vunpack.c.l.b16 %v2140
        %v2238 = vunpack.c.h.b16 %v2140
        %v2239 = vunpack.c.l.b16 %v2141
        %v2240 = vunpack.c.h.b16 %v2141
        %v2241 = vunpack.c.l.b16 %v2142
        %v2242 = vunpack.c.h.b16 %v2142
        %v2243 = vunpack.c.l.b16 %v2143
        %v2244 = vunpack.c.h.b16 %v2143
        %v2245 = vunpack.c.l.b16 %v2144
        %v2246 = vunpack.c.h.b16 %v2144
        %v2247 = vunpack.c.l.b16 %v2145
        %v2248 = vunpack.c.h.b16 %v2145
        %v2249 = vunpack.c.l.b16 %v2146
        %v2250 = vunpack.c.h.b16 %v2146
        %v2251 = vunpack.c.l.b16 %v2147
        %v2252 = vunpack.c.h.b16 %v2147
        %v2253 = vunpack.c.l.b16 %v2148
        %v2254 = vunpack.c.h.b16 %v2148
        %v2255 = vunpack.c.l.b16 %v2149
        %v2256 = vunpack.c.h.b16 %v2149
        %v2257 = vunpack.c.l.b16 %v2150
        %v2258 = vunpack.c.h.b16 %v2150
        %v2259 = vunpack.c.l.b16 %v2151
        %v2260 = vunpack.c.h.b16 %v2151
        %v2261 = vunpack.c.l.b16 %v2152
        %v2262 = vunpack.c.h.b16 %v2152
        %v2263 = vunpack.c.l.b16 %v2153
        %v2264 = vunpack.c.h.b16 %v2153
        %v2265 = vunpack.c.l.b16 %v2154
        %v2266 = vunpack.c.h.b16 %v2154
        %v2267 = vpack.c.b16 %v2207, %v2203
        %v2268 = vpack.c.b16 %v2208, %v2204
        %v2269 = vpack.c.b16 %v2209, %v2205
        %v2270 = vpack.c.b16 %v2210, %v2206
        %v2271 = vpack.c.b16 %v2215, %v2211
        %v2272 = vpack.c.b16 %v2216, %v2212
        %v2273 = vpack.c.b16 %v2217, %v2213
        %v2274 = vpack.c.b16 %v2218, %v2214
        %v2275 = vpack.c.b16 %v2223, %v2219
        %v2276 = vpack.c.b16 %v2224, %v2220
        %v2277 = vpack.c.b16 %v2225, %v2221
        %v2278 = vpack.c.b16 %v2226, %v2222
        %v2279 = vpack.c.b16 %v2231, %v2227
        %v2280 = vpack.c.b16 %v2232, %v2228
        %v2281 = vpack.c.b16 %v2233, %v2229
        %v2282 = vpack.c.b16 %v2234, %v2230
        %v2283 = vpack.c.b16 %v2239, %v2235
        %v2284 = vpack.c.b16 %v2240, %v2236
        %v2285 = vpack.c.b16 %v2241, %v2237
        %v2286 = vpack.c.b16 %v2242, %v2238
        %v2287 = vpack.c.b16 %v2247, %v2243
        %v2288 = vpack.c.b16 %v2248, %v2244
        %v2289 = vpack.c.b16 %v2249, %v2245
        %v2290 = vpack.c.b16 %v2250, %v2246
        %v2291 = vpack.c.b16 %v2255, %v2251
        %v2292 = vpack.c.b16 %v2256, %v2252
        %v2293 = vpack.c.b16 %v2257, %v2253
        %v2294 = vpack.c.b16 %v2258, %v2254
        %v2295 = vpack.c.b16 %v2263, %v2259
        %v2296 = vpack.c.b16 %v2264, %v2260
        %v2297 = vpack.c.b16 %v2265, %v2261
        %v2298 = vpack.c.b16 %v2266, %v2262
        %2331 = vmatprep.subr.bf16.mxu0 %v2268
        %2332 = vmatpush1.bf16.msra.mxu0 %v2267
        %2333 = vmatprep.subr.bf16.mxu0 %v2272
        %2334 = vmatpush1.bf16.msra.mxu0 %v2271
        %2335 = vmatprep.subr.bf16.mxu0 %v2276
        %2336 = vmatpush1.bf16.msra.mxu0 %v2275
        %2337 = vmatprep.subr.bf16.mxu0 %v2280
        %2338 = vmatpush1.bf16.msra.mxu0 %v2279
        %2339 = vmatprep.subr.bf16.mxu0 %v2284
        %2340 = vmatpush1.bf16.msra.mxu0 %v2283
        %2341 = vmatprep.subr.bf16.mxu0 %v2288
        %2342 = vmatpush1.bf16.msra.mxu0 %v2287
        %2343 = vmatprep.subr.bf16.mxu0 %v2292
        %2344 = vmatpush1.bf16.msra.mxu0 %v2291
        %2345 = vmatprep.subr.bf16.mxu0 %v2296
        %2346 = vmatpush1.bf16.msra.mxu0 %v2295
        %2347 = vmatprep.subr.bf16.mxu0 0
        %2348 = vmatpush1.bf16.msra.mxu0 0
        %2349 = vmatprep.subr.bf16.mxu0 0
        %2350 = vmatpush1.bf16.msra.mxu0 0
        %2351 = vmatprep.subr.bf16.mxu0 0
        %2352 = vmatpush1.bf16.msra.mxu0 0
        %2353 = vmatprep.subr.bf16.mxu0 0
        %2354 = vmatpush1.bf16.msra.mxu0 0
        %2355 = vmatprep.subr.bf16.mxu0 0
        %2356 = vmatpush1.bf16.msra.mxu0 0
        %2357 = vmatprep.subr.bf16.mxu0 0
        %2358 = vmatpush1.bf16.msra.mxu0 0
        %2359 = vmatprep.subr.bf16.mxu0 0
        %2360 = vmatpush1.bf16.msra.mxu0 0
        %2361 = vmatprep.subr.bf16.mxu0 0
        %2362 = vmatpush1.bf16.msra.mxu0 0
        %2363 = vmatprep.mubr.bf16.mxu0 0
        %2364 = vmatmul.mubr.bf16.gmra.mrb[0].mxu0 %v2122
        %v2365 = vpop.f32.mrb[0].mxu0
        %v2366 = vadd.f32 %v2158, %v2365
        %v2367 = vpop.f32.mrb[0].mxu0
        %v2368 = vadd.f32 %v2162, %v2367
        %v2369 = vpop.f32.mrb[0].mxu0
        %v2370 = vadd.f32 %v2158, %v2369
        %v2371 = vpop.f32.mrb[0].mxu0
        %v2372 = vadd.f32 %v2162, %v2371
        %2373 = vdwg.mxu0
        %2374 = vmatprep.subr.bf16.mxu0 %v2270
        %2375 = vmatpush1.bf16.msra.mxu0 %v2269
        %2376 = vmatprep.subr.bf16.mxu0 %v2274
        %2377 = vmatpush1.bf16.msra.mxu0 %v2273
        %2378 = vmatprep.subr.bf16.mxu0 %v2278
        %2379 = vmatpush1.bf16.msra.mxu0 %v2277
        %2380 = vmatprep.subr.bf16.mxu0 %v2282
        %2381 = vmatpush1.bf16.msra.mxu0 %v2281
        %2382 = vmatprep.subr.bf16.mxu0 %v2286
        %2383 = vmatpush1.bf16.msra.mxu0 %v2285
        %2384 = vmatprep.subr.bf16.mxu0 %v2290
        %2385 = vmatpush1.bf16.msra.mxu0 %v2289
        %2386 = vmatprep.subr.bf16.mxu0 %v2294
        %2387 = vmatpush1.bf16.msra.mxu0 %v2293
        %2388 = vmatprep.subr.bf16.mxu0 %v2298
        %2389 = vmatpush1.bf16.msra.mxu0 %v2297
        %2390 = vmatprep.subr.bf16.mxu0 0
        %2391 = vmatpush1.bf16.msra.mxu0 0
        %2392 = vmatprep.subr.bf16.mxu0 0
        %2393 = vmatpush1.bf16.msra.mxu0 0
        %2394 = vmatprep.subr.bf16.mxu0 0
        %2395 = vmatpush1.bf16.msra.mxu0 0
        %2396 = vmatprep.subr.bf16.mxu0 0
        %2397 = vmatpush1.bf16.msra.mxu0 0
        %2398 = vmatprep.subr.bf16.mxu0 0
        %2399 = vmatpush1.bf16.msra.mxu0 0
        %2400 = vmatprep.subr.bf16.mxu0 0
        %2401 = vmatpush1.bf16.msra.mxu0 0
        %2402 = vmatprep.subr.bf16.mxu0 0
        %2403 = vmatpush1.bf16.msra.mxu0 0
        %2404 = vmatprep.subr.bf16.mxu0 0
        %2405 = vmatpush1.bf16.msra.mxu0 0
        %2406 = vmatprep.mubr.bf16.mxu0 0
        %2407 = vmatmul.mubr.bf16.gmra.mrb[0].mxu0 %v2122
        %v2408 = vpop.f32.mrb[0].mxu0
        %v2409 = vadd.f32 %v2166, %v2408
        %v2410 = vpop.f32.mrb[0].mxu0
        %v2411 = vadd.f32 %v2170, %v2410
        %v2412 = vpop.f32.mrb[0].mxu0
        %v2413 = vadd.f32 %v2166, %v2412
        %v2414 = vpop.f32.mrb[0].mxu0
        %v2415 = vadd.f32 %v2170, %v2414
        %2416 = vdwg.mxu0
        %v2417 = vmul.f32 %v2366, 0.5
        %v2418 = vmul.f32 %v2368, 0.5
        %v2419 = vmul.f32 %v2409, 0.5
        %v2420 = vmul.f32 %v2411, 0.5
        %v2421 = vmul.f32 %v2370, 0.5
        %v2422 = vmul.f32 %v2372, 0.5
        %v2423 = vmul.f32 %v2413, 0.5
        %v2424 = vmul.f32 %v2415, 0.5
        %v2425 = vmul.f32 %v2366, 0.70710677
        %v2426 = vmul.f32 %v2368, 0.70710677
        %v2427 = vmul.f32 %v2409, 0.70710677
        %v2428 = vmul.f32 %v2411, 0.70710677
        %v2429 = vmul.f32 %v2370, 0.70710677
        %v2430 = vmul.f32 %v2372, 0.70710677
        %v2431 = vmul.f32 %v2413, 0.70710677
        %v2432 = vmul.f32 %v2415, 0.70710677
        %vm2433 = vcmp.ge.f32.partialorder %v2425, 0.0
        %vm2434 = vcmp.ge.f32.partialorder %v2426, 0.0
        %vm2435 = vcmp.ge.f32.partialorder %v2427, 0.0
        %vm2436 = vcmp.ge.f32.partialorder %v2428, 0.0
        %vm2437 = vcmp.ge.f32.partialorder %v2429, 0.0
        %vm2438 = vcmp.ge.f32.partialorder %v2430, 0.0
        %vm2439 = vcmp.ge.f32.partialorder %v2431, 0.0
        %vm2440 = vcmp.ge.f32.partialorder %v2432, 0.0
        %v2441 = vsel %vm2433, 1.0, -1.0
        %v2442 = vsel %vm2434, 1.0, -1.0
        %v2443 = vsel %vm2435, 1.0, -1.0
        %v2444 = vsel %vm2436, 1.0, -1.0
        %v2445 = vsel %vm2437, 1.0, -1.0
        %v2446 = vsel %vm2438, 1.0, -1.0
        %v2447 = vsel %vm2439, 1.0, -1.0
        %v2448 = vsel %vm2440, 1.0, -1.0
        %v2449 = vand.u32 2147483647, %v2425
        %v2450 = vand.u32 2147483647, %v2426
        %v2451 = vand.u32 2147483647, %v2427
        %v2452 = vand.u32 2147483647, %v2428
        %v2453 = vand.u32 2147483647, %v2429
        %v2454 = vand.u32 2147483647, %v2430
        %v2455 = vand.u32 2147483647, %v2431
        %v2456 = vand.u32 2147483647, %v2432
        %v2457 = vmul.f32 %v2449, 0.3275911
        %v2458 = vmul.f32 %v2450, 0.3275911
        %v2459 = vmul.f32 %v2451, 0.3275911
        %v2460 = vmul.f32 %v2452, 0.3275911
        %v2461 = vmul.f32 %v2453, 0.3275911
        %v2462 = vmul.f32 %v2454, 0.3275911
        %v2463 = vmul.f32 %v2455, 0.3275911
        %v2464 = vmul.f32 %v2456, 0.3275911
        %v2465 = vadd.f32 %v2457, 1.0
        %v2466 = vadd.f32 %v2458, 1.0
        %v2467 = vadd.f32 %v2459, 1.0
        %v2468 = vadd.f32 %v2460, 1.0
        %v2469 = vadd.f32 %v2461, 1.0
        %v2470 = vadd.f32 %v2462, 1.0
        %v2471 = vadd.f32 %v2463, 1.0
        %v2472 = vadd.f32 %v2464, 1.0
        %v2473 = vrcp.pop %v2465
        %v2474 = vrcp.pop %v2466
        %v2475 = vrcp.pop %v2467
        %v2476 = vrcp.pop %v2468
        %v2477 = vrcp.pop %v2469
        %v2478 = vrcp.pop %v2470
        %v2479 = vrcp.pop %v2471
        %v2480 = vrcp.pop %v2472
        %v2481 = vmul.f32 %v2473, 1.0614054
        %v2482 = vmul.f32 %v2474, 1.0614054
        %v2483 = vmul.f32 %v2475, 1.0614054
        %v2484 = vmul.f32 %v2476, 1.0614054
        %v2485 = vmul.f32 %v2477, 1.0614054
        %v2486 = vmul.f32 %v2478, 1.0614054
        %v2487 = vmul.f32 %v2479, 1.0614054
        %v2488 = vmul.f32 %v2480, 1.0614054
        %v2489 = vadd.f32 %v2481, -1.4531521
        %v2490 = vadd.f32 %v2482, -1.4531521
        %v2491 = vadd.f32 %v2483, -1.4531521
        %v2492 = vadd.f32 %v2484, -1.4531521
        %v2493 = vadd.f32 %v2485, -1.4531521
        %v2494 = vadd.f32 %v2486, -1.4531521
        %v2495 = vadd.f32 %v2487, -1.4531521
        %v2496 = vadd.f32 %v2488, -1.4531521
        %v2497 = vmul.f32 %v2489, %v2473
        %v2498 = vmul.f32 %v2490, %v2474
        %v2499 = vmul.f32 %v2491, %v2475
        %v2500 = vmul.f32 %v2492, %v2476
        %v2501 = vmul.f32 %v2493, %v2477
        %v2502 = vmul.f32 %v2494, %v2478
        %v2503 = vmul.f32 %v2495, %v2479
        %v2504 = vmul.f32 %v2496, %v2480
        %v2505 = vadd.f32 %v2497, 1.4214138
        %v2506 = vadd.f32 %v2498, 1.4214138
        %v2507 = vadd.f32 %v2499, 1.4214138
        %v2508 = vadd.f32 %v2500, 1.4214138
        %v2509 = vadd.f32 %v2501, 1.4214138
        %v2510 = vadd.f32 %v2502, 1.4214138
        %v2511 = vadd.f32 %v2503, 1.4214138
        %v2512 = vadd.f32 %v2504, 1.4214138
        %v2513 = vmul.f32 %v2505, %v2473
        %v2514 = vmul.f32 %v2506, %v2474
        %v2515 = vmul.f32 %v2507, %v2475
        %v2516 = vmul.f32 %v2508, %v2476
        %v2517 = vmul.f32 %v2509, %v2477
        %v2518 = vmul.f32 %v2510, %v2478
        %v2519 = vmul.f32 %v2511, %v2479
        %v2520 = vmul.f32 %v2512, %v2480
        %v2521 = vadd.f32 %v2513, -0.28449672
        %v2522 = vadd.f32 %v2514, -0.28449672
        %v2523 = vadd.f32 %v2515, -0.28449672
        %v2524 = vadd.f32 %v2516, -0.28449672
        %v2525 = vadd.f32 %v2517, -0.28449672
        %v2526 = vadd.f32 %v2518, -0.28449672
        %v2527 = vadd.f32 %v2519, -0.28449672
        %v2528 = vadd.f32 %v2520, -0.28449672
        %v2529 = vmul.f32 %v2521, %v2473
        %v2530 = vmul.f32 %v2522, %v2474
        %v2531 = vmul.f32 %v2523, %v2475
        %v2532 = vmul.f32 %v2524, %v2476
        %v2533 = vmul.f32 %v2525, %v2477
        %v2534 = vmul.f32 %v2526, %v2478
        %v2535 = vmul.f32 %v2527, %v2479
        %v2536 = vmul.f32 %v2528, %v2480
        %v2537 = vadd.f32 %v2529, 0.2548296
        %v2538 = vadd.f32 %v2530, 0.2548296
        %v2539 = vadd.f32 %v2531, 0.2548296
        %v2540 = vadd.f32 %v2532, 0.2548296
        %v2541 = vadd.f32 %v2533, 0.2548296
        %v2542 = vadd.f32 %v2534, 0.2548296
        %v2543 = vadd.f32 %v2535, 0.2548296
        %v2544 = vadd.f32 %v2536, 0.2548296
        %v2545 = vmul.f32 %v2537, %v2473
        %v2546 = vmul.f32 %v2538, %v2474
        %v2547 = vmul.f32 %v2539, %v2475
        %v2548 = vmul.f32 %v2540, %v2476
        %v2549 = vmul.f32 %v2541, %v2477
        %v2550 = vmul.f32 %v2542, %v2478
        %v2551 = vmul.f32 %v2543, %v2479
        %v2552 = vmul.f32 %v2544, %v2480
        %v2553 = vsub.f32 0.0, %v2449
        %v2554 = vsub.f32 0.0, %v2450
        %v2555 = vsub.f32 0.0, %v2451
        %v2556 = vsub.f32 0.0, %v2452
        %v2557 = vsub.f32 0.0, %v2453
        %v2558 = vsub.f32 0.0, %v2454
        %v2559 = vsub.f32 0.0, %v2455
        %v2560 = vsub.f32 0.0, %v2456
        %v2561 = vmul.f32 %v2553, %v2449
        %v2562 = vmul.f32 %v2554, %v2450
        %v2563 = vmul.f32 %v2555, %v2451
        %v2564 = vmul.f32 %v2556, %v2452
        %v2565 = vmul.f32 %v2557, %v2453
        %v2566 = vmul.f32 %v2558, %v2454
        %v2567 = vmul.f32 %v2559, %v2455
        %v2568 = vmul.f32 %v2560, %v2456
        %v2569 = vmul.f32 %v2561, 1.442695
        %v2570 = vpow.pop %v2569
        %v2571 = vmul.f32 %v2562, 1.442695
        %v2572 = vpow.pop %v2571
        %v2573 = vmul.f32 %v2563, 1.442695
        %v2574 = vpow.pop %v2573
        %v2575 = vmul.f32 %v2564, 1.442695
        %v2576 = vpow.pop %v2575
        %v2577 = vmul.f32 %v2565, 1.442695
        %v2578 = vpow.pop %v2577
        %v2579 = vmul.f32 %v2566, 1.442695
        %v2580 = vpow.pop %v2579
        %v2581 = vmul.f32 %v2567, 1.442695
        %v2582 = vpow.pop %v2581
        %v2583 = vmul.f32 %v2568, 1.442695
        %v2584 = vpow.pop %v2583
        %v2585 = vmul.f32 %v2545, %v2570
        %v2586 = vmul.f32 %v2546, %v2572
        %v2587 = vmul.f32 %v2547, %v2574
        %v2588 = vmul.f32 %v2548, %v2576
        %v2589 = vmul.f32 %v2549, %v2578
        %v2590 = vmul.f32 %v2550, %v2580
        %v2591 = vmul.f32 %v2551, %v2582
        %v2592 = vmul.f32 %v2552, %v2584
        %v2593 = vsub.f32 1.0, %v2585
        %v2594 = vsub.f32 1.0, %v2586
        %v2595 = vsub.f32 1.0, %v2587
        %v2596 = vsub.f32 1.0, %v2588
        %v2597 = vsub.f32 1.0, %v2589
        %v2598 = vsub.f32 1.0, %v2590
        %v2599 = vsub.f32 1.0, %v2591
        %v2600 = vsub.f32 1.0, %v2592
        %v2601 = vmul.f32 %v2441, %v2593
        %v2602 = vmul.f32 %v2442, %v2594
        %v2603 = vmul.f32 %v2443, %v2595
        %v2604 = vmul.f32 %v2444, %v2596
        %v2605 = vmul.f32 %v2445, %v2597
        %v2606 = vmul.f32 %v2446, %v2598
        %v2607 = vmul.f32 %v2447, %v2599
        %v2608 = vmul.f32 %v2448, %v2600
        %v2609 = vadd.f32 %v2601, 1.0
        %v2610 = vadd.f32 %v2602, 1.0
        %v2611 = vadd.f32 %v2603, 1.0
        %v2612 = vadd.f32 %v2604, 1.0
        %v2613 = vadd.f32 %v2605, 1.0
        %v2614 = vadd.f32 %v2606, 1.0
        %v2615 = vadd.f32 %v2607, 1.0
        %v2616 = vadd.f32 %v2608, 1.0
        %v2617 = vmul.f32 %v2417, %v2609
        %v2618 = vmul.f32 %v2418, %v2610
        %v2619 = vmul.f32 %v2419, %v2611
        %v2620 = vmul.f32 %v2420, %v2612
        %v2621 = vmul.f32 %v2421, %v2613
        %v2622 = vmul.f32 %v2422, %v2614
        %v2623 = vmul.f32 %v2423, %v2615
        %v2624 = vmul.f32 %v2424, %v2616
        %v2625 = vpack.c.bf16 %v2621, %v2617
        %v2626 = vpack.c.bf16 %v2622, %v2618
        %v2627 = vpack.c.bf16 %v2623, %v2619
        %v2628 = vpack.c.bf16 %v2624, %v2620
        %v2629 = vld [vmem:[%s579] sm:$0xf]
        %v2630 = vld [vmem:[%s579 + $0x4] sm:$0xf]
        %v2631 = vld [vmem:[%s579 + $0x8] sm:$0xf]
        %v2632 = vld [vmem:[%s579 + $0xc] sm:$0xf]
        %v2633 = vld [vmem:[%s579 + $0x10] sm:$0xf]
        %v2634 = vld [vmem:[%s579 + $0x14] sm:$0xf]
        %v2635 = vld [vmem:[%s579 + $0x18] sm:$0xf]
        %v2636 = vld [vmem:[%s579 + $0x1c] sm:$0xf]
        %v2637 = vld [vmem:[%s579 + $0x20] sm:$0xf]
        %v2638 = vld [vmem:[%s579 + $0x24] sm:$0xf]
        %v2639 = vld [vmem:[%s579 + $0x28] sm:$0xf]
        %v2640 = vld [vmem:[%s579 + $0x2c] sm:$0xf]
        %v2641 = vld [vmem:[%s579 + $0x30] sm:$0xf]
        %v2642 = vld [vmem:[%s579 + $0x34] sm:$0xf]
        %v2643 = vld [vmem:[%s579 + $0x38] sm:$0xf]
        %v2644 = vld [vmem:[%s579 + $0x3c] sm:$0xf]
        %v2645 = vld [vmem:[%s579 + $0x40] sm:$0xf]
        %v2646 = vld [vmem:[%s579 + $0x44] sm:$0xf]
        %v2647 = vld [vmem:[%s579 + $0x48] sm:$0xf]
        %v2648 = vld [vmem:[%s579 + $0x4c] sm:$0xf]
        %v2649 = vld [vmem:[%s579 + $0x50] sm:$0xf]
        %v2650 = vld [vmem:[%s579 + $0x54] sm:$0xf]
        %v2651 = vld [vmem:[%s579 + $0x58] sm:$0xf]
        %v2652 = vld [vmem:[%s579 + $0x5c] sm:$0xf]
        %v2653 = vld [vmem:[%s579 + $0x60] sm:$0xf]
        %v2654 = vld [vmem:[%s579 + $0x64] sm:$0xf]
        %v2655 = vld [vmem:[%s579 + $0x68] sm:$0xf]
        %v2656 = vld [vmem:[%s579 + $0x6c] sm:$0xf]
        %v2657 = vld [vmem:[%s579 + $0x70] sm:$0xf]
        %v2658 = vld [vmem:[%s579 + $0x74] sm:$0xf]
        %v2659 = vld [vmem:[%s579 + $0x78] sm:$0xf]
        %v2660 = vld [vmem:[%s579 + $0x7c] sm:$0xf]
        %v2661 = vld [vmem:[%s579 + $0x80] sm:$0xf]
        %v2662 = vld [vmem:[%s579 + $0x84] sm:$0xf]
        %v2663 = vld [vmem:[%s579 + $0x88] sm:$0xf]
        %v2664 = vld [vmem:[%s579 + $0x8c] sm:$0xf]
        %v2665 = vld [vmem:[%s579 + $0x90] sm:$0xf]
        %v2666 = vld [vmem:[%s579 + $0x94] sm:$0xf]
        %v2667 = vld [vmem:[%s579 + $0x98] sm:$0xf]
        %v2668 = vld [vmem:[%s579 + $0x9c] sm:$0xf]
        %v2669 = vld [vmem:[%s579 + $0xa0] sm:$0xf]
        %v2670 = vld [vmem:[%s579 + $0xa4] sm:$0xf]
        %v2671 = vld [vmem:[%s579 + $0xa8] sm:$0xf]
        %v2672 = vld [vmem:[%s579 + $0xac] sm:$0xf]
        %v2673 = vld [vmem:[%s579 + $0xb0] sm:$0xf]
        %v2674 = vld [vmem:[%s579 + $0xb4] sm:$0xf]
        %v2675 = vld [vmem:[%s579 + $0xb8] sm:$0xf]
        %v2676 = vld [vmem:[%s579 + $0xbc] sm:$0xf]
        %v2677 = vld [vmem:[%s579 + $0xc0] sm:$0xf]
        %v2678 = vld [vmem:[%s579 + $0xc4] sm:$0xf]
        %v2679 = vld [vmem:[%s579 + $0xc8] sm:$0xf]
        %v2680 = vld [vmem:[%s579 + $0xcc] sm:$0xf]
        %v2681 = vld [vmem:[%s579 + $0xd0] sm:$0xf]
        %v2682 = vld [vmem:[%s579 + $0xd4] sm:$0xf]
        %v2683 = vld [vmem:[%s579 + $0xd8] sm:$0xf]
        %v2684 = vld [vmem:[%s579 + $0xdc] sm:$0xf]
        %v2685 = vld [vmem:[%s579 + $0xe0] sm:$0xf]
        %v2686 = vld [vmem:[%s579 + $0xe4] sm:$0xf]
        %v2687 = vld [vmem:[%s579 + $0xe8] sm:$0xf]
        %v2688 = vld [vmem:[%s579 + $0xec] sm:$0xf]
        %v2689 = vld [vmem:[%s579 + $0xf0] sm:$0xf]
        %v2690 = vld [vmem:[%s579 + $0xf4] sm:$0xf]
        %v2691 = vld [vmem:[%s579 + $0xf8] sm:$0xf]
        %v2692 = vld [vmem:[%s579 + $0xfc] sm:$0xf]
        %v2693 = vlaneseq
        %v2694 = vshrl.u32 %v2693, 7
        %v2695 = vsub.s32 5, %v2694
        %v2696 = vrot.slane %v786, %v2695
        %v2761 = vunpack.c.l.b16 %v2629
        %v2762 = vunpack.c.l.b16 %v2630
        %v2763 = vunpack.c.l.b16 %v2631
        %v2764 = vunpack.c.l.b16 %v2632
        %v2765 = vunpack.c.l.b16 %v2633
        %v2766 = vunpack.c.l.b16 %v2634
        %v2767 = vunpack.c.l.b16 %v2635
        %v2768 = vunpack.c.l.b16 %v2636
        %v2769 = vunpack.c.l.b16 %v2637
        %v2770 = vunpack.c.l.b16 %v2638
        %v2771 = vunpack.c.l.b16 %v2639
        %v2772 = vunpack.c.l.b16 %v2640
        %v2773 = vunpack.c.l.b16 %v2641
        %v2774 = vunpack.c.l.b16 %v2642
        %v2775 = vunpack.c.l.b16 %v2643
        %v2776 = vunpack.c.l.b16 %v2644
        %v2777 = vunpack.c.l.b16 %v2645
        %v2778 = vunpack.c.l.b16 %v2646
        %v2779 = vunpack.c.l.b16 %v2647
        %v2780 = vunpack.c.l.b16 %v2648
        %v2781 = vunpack.c.l.b16 %v2649
        %v2782 = vunpack.c.l.b16 %v2650
        %v2783 = vunpack.c.l.b16 %v2651
        %v2784 = vunpack.c.l.b16 %v2652
        %v2785 = vunpack.c.l.b16 %v2653
        %v2786 = vunpack.c.l.b16 %v2654
        %v2787 = vunpack.c.l.b16 %v2655
        %v2788 = vunpack.c.l.b16 %v2656
        %v2789 = vunpack.c.l.b16 %v2657
        %v2790 = vunpack.c.l.b16 %v2658
        %v2791 = vunpack.c.l.b16 %v2659
        %v2792 = vunpack.c.l.b16 %v2660
        %v2793 = vunpack.c.l.b16 %v2661
        %v2794 = vunpack.c.l.b16 %v2662
        %v2795 = vunpack.c.l.b16 %v2663
        %v2796 = vunpack.c.l.b16 %v2664
        %v2797 = vunpack.c.l.b16 %v2665
        %v2798 = vunpack.c.l.b16 %v2666
        %v2799 = vunpack.c.l.b16 %v2667
        %v2800 = vunpack.c.l.b16 %v2668
        %v2801 = vunpack.c.l.b16 %v2669
        %v2802 = vunpack.c.l.b16 %v2670
        %v2803 = vunpack.c.l.b16 %v2671
        %v2804 = vunpack.c.l.b16 %v2672
        %v2805 = vunpack.c.l.b16 %v2673
        %v2806 = vunpack.c.l.b16 %v2674
        %v2807 = vunpack.c.l.b16 %v2675
        %v2808 = vunpack.c.l.b16 %v2676
        %v2809 = vunpack.c.l.b16 %v2677
        %v2810 = vunpack.c.l.b16 %v2678
        %v2811 = vunpack.c.l.b16 %v2679
        %v2812 = vunpack.c.l.b16 %v2680
        %v2813 = vunpack.c.l.b16 %v2681
        %v2814 = vunpack.c.l.b16 %v2682
        %v2815 = vunpack.c.l.b16 %v2683
        %v2816 = vunpack.c.l.b16 %v2684
        %v2817 = vunpack.c.l.b16 %v2685
        %v2818 = vunpack.c.l.b16 %v2686
        %v2819 = vunpack.c.l.b16 %v2687
        %v2820 = vunpack.c.l.b16 %v2688
        %v2821 = vunpack.c.l.b16 %v2689
        %v2822 = vunpack.c.l.b16 %v2690
        %v2823 = vunpack.c.l.b16 %v2691
        %v2824 = vunpack.c.l.b16 %v2692
        %v2825 = vpack.c.b16 %v2762, %v2761
        %v2826 = vpack.c.b16 %v2764, %v2763
        %v2827 = vpack.c.b16 %v2766, %v2765
        %v2828 = vpack.c.b16 %v2768, %v2767
        %v2829 = vpack.c.b16 %v2770, %v2769
        %v2830 = vpack.c.b16 %v2772, %v2771
        %v2831 = vpack.c.b16 %v2774, %v2773
        %v2832 = vpack.c.b16 %v2776, %v2775
        %v2833 = vpack.c.b16 %v2778, %v2777
        %v2834 = vpack.c.b16 %v2780, %v2779
        %v2835 = vpack.c.b16 %v2782, %v2781
        %v2836 = vpack.c.b16 %v2784, %v2783
        %v2837 = vpack.c.b16 %v2786, %v2785
        %v2838 = vpack.c.b16 %v2788, %v2787
        %v2839 = vpack.c.b16 %v2790, %v2789
        %v2840 = vpack.c.b16 %v2792, %v2791
        %v2841 = vpack.c.b16 %v2794, %v2793
        %v2842 = vpack.c.b16 %v2796, %v2795
        %v2843 = vpack.c.b16 %v2798, %v2797
        %v2844 = vpack.c.b16 %v2800, %v2799
        %v2845 = vpack.c.b16 %v2802, %v2801
        %v2846 = vpack.c.b16 %v2804, %v2803
        %v2847 = vpack.c.b16 %v2806, %v2805
        %v2848 = vpack.c.b16 %v2808, %v2807
        %v2849 = vpack.c.b16 %v2810, %v2809
        %v2850 = vpack.c.b16 %v2812, %v2811
        %v2851 = vpack.c.b16 %v2814, %v2813
        %v2852 = vpack.c.b16 %v2816, %v2815
        %v2853 = vpack.c.b16 %v2818, %v2817
        %v2854 = vpack.c.b16 %v2820, %v2819
        %v2855 = vpack.c.b16 %v2822, %v2821
        %v2856 = vpack.c.b16 %v2824, %v2823
        %2889 = vmatprep.subr.bf16.mxu0 0
        %2890 = vmatpush1.bf16.msra.mxu0 %v2825
        %2891 = vmatprep.subr.bf16.mxu0 0
        %2892 = vmatpush1.bf16.msra.mxu0 %v2826
        %2893 = vmatprep.subr.bf16.mxu0 0
        %2894 = vmatpush1.bf16.msra.mxu0 %v2827
        %2895 = vmatprep.subr.bf16.mxu0 0
        %2896 = vmatpush1.bf16.msra.mxu0 %v2828
        %2897 = vmatprep.subr.bf16.mxu0 0
        %2898 = vmatpush1.bf16.msra.mxu0 %v2829
        %2899 = vmatprep.subr.bf16.mxu0 0
        %2900 = vmatpush1.bf16.msra.mxu0 %v2830
        %2901 = vmatprep.subr.bf16.mxu0 0
        %2902 = vmatpush1.bf16.msra.mxu0 %v2831
        %2903 = vmatprep.subr.bf16.mxu0 0
        %2904 = vmatpush1.bf16.msra.mxu0 %v2832
        %2905 = vmatprep.subr.bf16.mxu0 0
        %2906 = vmatpush1.bf16.msra.mxu0 %v2833
        %2907 = vmatprep.subr.bf16.mxu0 0
        %2908 = vmatpush1.bf16.msra.mxu0 %v2834
        %2909 = vmatprep.subr.bf16.mxu0 0
        %2910 = vmatpush1.bf16.msra.mxu0 %v2835
        %2911 = vmatprep.subr.bf16.mxu0 0
        %2912 = vmatpush1.bf16.msra.mxu0 %v2836
        %2913 = vmatprep.subr.bf16.mxu0 0
        %2914 = vmatpush1.bf16.msra.mxu0 %v2837
        %2915 = vmatprep.subr.bf16.mxu0 0
        %2916 = vmatpush1.bf16.msra.mxu0 %v2838
        %2917 = vmatprep.subr.bf16.mxu0 0
        %2918 = vmatpush1.bf16.msra.mxu0 %v2839
        %2919 = vmatprep.subr.bf16.mxu0 0
        %2920 = vmatpush1.bf16.msra.mxu0 %v2840
        %2921 = vmatprep.mubr.bf16.mxu0 %v2626
        %2922 = vmatmul.mubr.bf16.gmra.mrb[0].mxu0 %v2625
        %v2923 = vpop.f32.mrb[0].mxu0
        %v2924 = vadd.f32 %v2696, %v2923
        %v2925 = vpop.f32.mrb[0].mxu0
        %v2926 = vpop.f32.mrb[0].mxu0
        %v2927 = vadd.f32 %v2696, %v2926
        %v2928 = vpop.f32.mrb[0].mxu0
        %2929 = vdwg.mxu0
        %2930 = vmatprep.subr.bf16.mxu0 0
        %2931 = vmatpush1.bf16.msra.mxu0 %v2841
        %2932 = vmatprep.subr.bf16.mxu0 0
        %2933 = vmatpush1.bf16.msra.mxu0 %v2842
        %2934 = vmatprep.subr.bf16.mxu0 0
        %2935 = vmatpush1.bf16.msra.mxu0 %v2843
        %2936 = vmatprep.subr.bf16.mxu0 0
        %2937 = vmatpush1.bf16.msra.mxu0 %v2844
        %2938 = vmatprep.subr.bf16.mxu0 0
        %2939 = vmatpush1.bf16.msra.mxu0 %v2845
        %2940 = vmatprep.subr.bf16.mxu0 0
        %2941 = vmatpush1.bf16.msra.mxu0 %v2846
        %2942 = vmatprep.subr.bf16.mxu0 0
        %2943 = vmatpush1.bf16.msra.mxu0 %v2847
        %2944 = vmatprep.subr.bf16.mxu0 0
        %2945 = vmatpush1.bf16.msra.mxu0 %v2848
        %2946 = vmatprep.subr.bf16.mxu0 0
        %2947 = vmatpush1.bf16.msra.mxu0 %v2849
        %2948 = vmatprep.subr.bf16.mxu0 0
        %2949 = vmatpush1.bf16.msra.mxu0 %v2850
        %2950 = vmatprep.subr.bf16.mxu0 0
        %2951 = vmatpush1.bf16.msra.mxu0 %v2851
        %2952 = vmatprep.subr.bf16.mxu0 0
        %2953 = vmatpush1.bf16.msra.mxu0 %v2852
        %2954 = vmatprep.subr.bf16.mxu0 0
        %2955 = vmatpush1.bf16.msra.mxu0 %v2853
        %2956 = vmatprep.subr.bf16.mxu0 0
        %2957 = vmatpush1.bf16.msra.mxu0 %v2854
        %2958 = vmatprep.subr.bf16.mxu0 0
        %2959 = vmatpush1.bf16.msra.mxu0 %v2855
        %2960 = vmatprep.subr.bf16.mxu0 0
        %2961 = vmatpush1.bf16.msra.mxu0 %v2856
        %2962 = vmatprep.mubr.bf16.mxu0 %v2628
        %2963 = vmatmul.mubr.bf16.gmra.mrb[0].mxu0 %v2627
        %v2964 = vpop.f32.mrb[0].mxu0
        %v2965 = vadd.f32 %v2924, %v2964
        %v2966 = vpop.f32.mrb[0].mxu0
        %v2967 = vpop.f32.mrb[0].mxu0
        %v2968 = vadd.f32 %v2927, %v2967
        %v2969 = vpop.f32.mrb[0].mxu0
        %2970 = vdwg.mxu0
        %v2971 = vadd.f32 %v2120, %v2965
        %v2972 = vadd.f32 %v2121, %v2968
        %2973 = vadd.xlane.f32.xlu0 %v2971
        %v2974 = vpop.xlane.xlu0 %2973
        %2975 = vadd.xlane.f32.xlu0 %v2972
        %v2976 = vpop.xlane.xlu0 %2975
        %v2977 = vmul.f32 %v2974, %v2091
        %v2978 = vmul.f32 %v2976, %v2091
        %v2979 = vsub.f32 %v2971, %v2977
        %v2980 = vsub.f32 %v2972, %v2978
        %v2981 = vmul.f32 %v2979, %v2979
        %v2982 = vmul.f32 %v2980, %v2980
        %2983 = vadd.xlane.f32.xlu0 %v2981
        %v2984 = vpop.xlane.xlu0 %2983
        %2985 = vadd.xlane.f32.xlu0 %v2982
        %v2986 = vpop.xlane.xlu0 %2985
        %v2987 = vmul.f32 %v2984, %v2091
        %v2988 = vmul.f32 %v2986, %v2091
        %v2989 = vadd.f32 %v2987, 1e-05
        %v2990 = vadd.f32 %v2988, 1e-05
        %v2991 = vrsqrt.pop %v2989
        %v2992 = vrsqrt.pop %v2990
        %v2993 = vmul.f32 %v2979, %v2991
        %v2994 = vmul.f32 %v2980, %v2992
        %v2995 = vlaneseq
        %v2996 = vshrl.u32 %v2995, 7
        %v2997 = vsub.s32 6, %v2996
        %v2998 = vrot.slane %v786, %v2997
        %v2999 = vmul.f32 %v2993, %v2998
        %v3000 = vmul.f32 %v2994, %v2998
        %v3001 = vlaneseq
        %v3002 = vshrl.u32 %v3001, 7
        %v3003 = vsub.s32 7, %v3002
        %v3004 = vrot.slane %v786, %v3003
        %v3005 = vadd.f32 %v2999, %v3004
        %v3006 = vadd.f32 %v3000, %v3004
        %3007 = vst [vmem:[#allocation2] sm:$0xff] %v3005
        %3008 = vst [vmem:[#allocation2 + $0x8] sm:$0xff] %v3006
        %p3009 = scmp.eq.s32.totalorder %s31, 1
        // Predicated region
        $region113: #{tpu_custom_call.1} parent=63 // pred_check
          %p3010 = pneg %p3009
        $region114: #{tpu_custom_call.1} parent=63 // pred_check_branch
          %3012 = sbr.rel (%p3010) target = $region116
        $region115: #{tpu_custom_call.1} parent=63 // pred_region
          %v3013 = vld [vmem:[#allocation17] sm:$0x1]
          %v3014 = vld [vmem:[#allocation18] sm:$0x1]
          %3015 = vadd.xlane.f32.xlu0 %v3005
          %v3016 = vpop.xlane.xlu0 %3015
          %3017 = vadd.xlane.f32.xlu0 %v3006
          %v3018 = vpop.xlane.xlu0 %3017
          %v3019 = vmul.f32 %v3016, %v2091
          %v3020 = vmul.f32 %v3018, %v2091
          %v3021 = vsub.f32 %v3005, %v3019
          %v3022 = vsub.f32 %v3006, %v3020
          %v3023 = vmul.f32 %v3021, %v3021
          %v3024 = vmul.f32 %v3022, %v3022
          %3025 = vadd.xlane.f32.xlu0 %v3023
          %v3026 = vpop.xlane.xlu0 %3025
          %3027 = vadd.xlane.f32.xlu0 %v3024
          %v3028 = vpop.xlane.xlu0 %3027
          %v3029 = vmul.f32 %v3026, %v2091
          %v3030 = vmul.f32 %v3028, %v2091
          %v3031 = vadd.f32 %v3029, 1e-05
          %v3032 = vadd.f32 %v3030, 1e-05
          %v3033 = vrsqrt.pop %v3031
          %v3034 = vrsqrt.pop %v3032
          %v3035 = vmul.f32 %v3021, %v3033
          %v3036 = vmul.f32 %v3022, %v3034
          %v3038 = vlaneseq
          %v3039 = vshrl.u32 %v3038, 7
          %v3040 = vsub.s32 0, %v3039
          %v3041 = vrot.slane %v3013, %v3040
          %v3043 = vmul.f32 %v3035, %v3041
          %v3044 = vmul.f32 %v3036, %v3041
          %v3046 = vlaneseq
          %v3047 = vshrl.u32 %v3046, 7
          %v3048 = vsub.s32 0, %v3047
          %v3049 = vrot.slane %v3014, %v3048
          %v3051 = vadd.f32 %v3043, %v3049
          %v3052 = vadd.f32 %v3044, %v3049
          %3053 = vst [vmem:[#allocation19] sm:$0xff] %v3051
          %3054 = vst [vmem:[#allocation19 + $0x8] sm:$0xff] %v3052
        $region116: #{tpu_custom_call.1} parent=63 // pred_fallthru
          _
        // Predicated region
        $region117: #{tpu_custom_call.1} parent=63 // pred_check
          %p3055 = pneg %p322
        $region118: #{tpu_custom_call.1} parent=63 // pred_check_branch
          %3057 = sbr.rel (%p3055) target = $region120
        $region119: #{tpu_custom_call.1} parent=63 // pred_region
          %s3058 = smul.u32 2, %s30
          %s3060 = ssub.s32 256, 256
          %3061 = vsyncadd [#allocation6], %s3060
          %s3062 = smul.addr %s3058, 128
          %s3063 = scalar_lea.hbm %s11, %s3062
          %s3064 = sshll.u32 [#allocation19], 4
          %s3065 = int_to_ptr.vmem [resolvable:$true] %s3064
          %3070 = dma.vmem_to_hbm [thread:$0]  %s3065, 256, %s3063, [#allocation6], 128, 128, 8
        $region120: #{tpu_custom_call.1} parent=63 // pred_fallthru
          _
        // Predicated region
        $region121: #{tpu_custom_call.1} parent=63 // pred_check
          %p3071 = pneg %p322
        $region122: #{tpu_custom_call.1} parent=63 // pred_check_branch
          %3073 = sbr.rel (%p3071) target = $region124
        $region123: #{tpu_custom_call.1} parent=63 // pred_region
          %3074 = dma.done [#allocation6], 256
        $region124: #{tpu_custom_call.1} parent=63 // pred_fallthru
          _
      $region64: #{tpu_custom_call.1} parent=5 // pred_fallthru
        _
      %p3075 = scmp.le.s32.totalorder 2, %s21
      // Predicated region
      $region125: #{tpu_custom_call.1} parent=5 // pred_check
        %p3076 = pneg %p3075
      $region126: #{tpu_custom_call.1} parent=5 // pred_check_branch
        %3078 = sbr.rel (%p3076) target = $region128
      $region127: #{tpu_custom_call.1} parent=5 // pred_region
        %s3079 = ssub.s32 %s21, 2
      $region128: #{tpu_custom_call.1} parent=5 // pred_fallthru
        _
    $region6: #{tpu_custom_call.1} parent=1 // loop_footer
      %s25 = sadd.s32 1, %s21
    $region7: #{tpu_custom_call.1} parent=1 // loop_footer_branch
      %20 = sbr.rel target = $region3
    $region8: #{tpu_custom_call.1} parent=1 // loop_exit
      _
    %3080 = vsyncpa [#allocation5], 1
    %s3081 = scalar_lea.sflag [#allocation5], 1
    %3082 = vsyncpa %s3081, 1
    %3083 = vsyncpa [#allocation8], 1
    %3084 = vsyncpa [#allocation11], 1
    %3085 = vsyncpa [#allocation6], 1
    %s3086 = scalar_lea.sflag [#allocation6], 1
    %3087 = vsyncpa %s3086, 1

</llo_original>
